<compile_context>
chip_gen: v7x
topology: tpu7x:2x2x1
jax: 0.10.0
libtpu: 0.0.40
codegen_flags: <defaults>
</compile_context>

<pallas_src>
import functools

import jax
import jax.numpy as jnp
from jax.experimental import pallas as pl
from jax.experimental.pallas import tpu as pltpu

# ---------------- model hyper-parameters (small, consistent with module) ----
B, S, H = 2, 8, 32          # batch, sequence length, hidden size
NH, HD = 4, 8               # num heads, head dim  (NH * HD == H)
I = 4 * H                   # FFN intermediate size (=128)
NLAYERS = 2                 # small synthetic encoder depth
VOCAB = 64
TYPE_VOCAB = 2
MAX_POS = 16
LN_EPS = 1e-12              # BERT LayerNorm eps
BN_EPS = 1e-5               # nn.BatchNorm1d default eps
NCLASS = 3
NCLASS_PAD = 128            # lane-dense logits slab; sliced to NCLASS in wrapper

# ---------------- packed-slab row layout -------------------------------------
# slab32: (R32, H) f32 -- all H(=32)-wide vectors + pos/type rows + word table
R_EMB_LN_G = 0
R_EMB_LN_B = 1
R_LAYER0 = 2                 # per layer: [bo, ln1_g, ln1_b, bf, ln2_g, ln2_b]
R_POOL_B = R_LAYER0 + 6 * NLAYERS            # 14
R_CLS_B1 = R_POOL_B + 1                      # 15
R_BN1_G, R_BN1_B, R_BN1_M, R_BN1_V = 16, 17, 18, 19
R_POS_TYPE = 24              # 8-aligned; S rows of (pos_emb + type_emb[0])
R_WORD = R_POS_TYPE + S      # 32; VOCAB rows of word-embedding table
R32 = R_WORD + VOCAB         # 96

# slab128: (R128, 128) f32 -- wide vectors (zero padded to 128 lanes)
R_BQKV0 = 0                  # rows 0..NL-1 : b_qkv (cols 0:3H, q-part pre-scaled)
R_BI0 = NLAYERS              # rows NL..2NL-1 : FFN intermediate bias (I == 128)
R_CLS_B2 = 2 * NLAYERS       # 4   (cols 0:H//2)
R_BN2_G, R_BN2_B, R_BN2_M, R_BN2_V = 5, 6, 7, 8
R_CLS_B3 = 9                 # padded classifier bias (cols 0:128)
R128 = 10

# w_enc column layout: [ W_qkv (0:3H) | W_o (3H:4H) | W_i (4H:4H+I) ]
# w_head column layout: [ pool_w (0:H) | cls_w1 (H:2H) | cls_w2 (2H:2H+H//2) ]


# ---------------- pallas_call helper (full-array blocks, grid=(1,)) ---------
def _zero_map(nd):
    return lambda i, _nd=nd: (0,) * _nd


def _call(kernel, inputs, out_shape):
    in_specs = [pl.BlockSpec(tuple(a.shape), _zero_map(a.ndim)) for a in inputs]
    out_specs = pl.BlockSpec(tuple(out_shape.shape), _zero_map(len(out_shape.shape)))
    return pl.pallas_call(
        kernel,
        out_shape=out_shape,
        grid=(1,),
        in_specs=in_specs,
        out_specs=out_specs,
        compiler_params=pltpu.CompilerParams(
            dimension_semantics=("arbitrary",)),
    )(*inputs)


# ---------------- fused forward kernel ---------------------------------------
def _ln(x, g, b):
    """LayerNorm over the last axis; g/b are (1, H) rows."""
    mu = jnp.mean(x, axis=-1, keepdims=True)
    var = jnp.mean(jnp.square(x - mu), axis=-1, keepdims=True)
    return (x - mu) * jax.lax.rsqrt(var + LN_EPS) * g + b


def bert_forward_kernel(ids_ref, amask_ref, slab32_ref, slab128_ref,
                        w_enc_ref, w_f_ref, w_head_ref, w_cls3_ref, o_ref):
    Bq, Sq = amask_ref.shape
    BS = Bq * Sq

    # ---- embeddings: one-hot @ word table (gather-free), + (pos+type), LN ----
    ids = ids_ref[...]                                              # (BS, 1) int32
    onehot = (ids == jax.lax.broadcasted_iota(jnp.int32, (BS, VOCAB), 1)
              ).astype(jnp.float32)                                 # (BS, VOCAB)
    word_tbl = slab32_ref[R_WORD:R_WORD + VOCAB, :]                 # (VOCAB, H)
    emb = jnp.dot(onehot, word_tbl, preferred_element_type=jnp.float32)  # (BS, H)
    pt = slab32_ref[R_POS_TYPE:R_POS_TYPE + Sq, :]                  # (S, H)
    emb = emb + jnp.concatenate([pt] * Bq, axis=0)                  # + pos + type

    x2 = _ln(emb, slab32_ref[R_EMB_LN_G:R_EMB_LN_G + 1, :],
             slab32_ref[R_EMB_LN_B:R_EMB_LN_B + 1, :])              # (BS, H)

    # ---- additive attention mask, tiled over heads: (NH*B, 1, S) ----
    add_mask = (1.0 - amask_ref[...].astype(jnp.float32)) * -10000.0     # (B, S)
    mask_h = jnp.concatenate([add_mask] * NH, axis=0)[:, None, :]        # (NH*B,1,S)

    # ---- encoder layers (static loop; weights stacked along leading axis) ----
    for l in range(NLAYERS):
        base = R_LAYER0 + 6 * l
        w_all = w_enc_ref[l]                                        # (H, 3H+H+I)
        w_qkv = w_all[:, :3 * H]
        w_o = w_all[:, 3 * H:4 * H]
        w_i = w_all[:, 4 * H:]

        # fused QKV projection (1/sqrt(HD) already folded into Q weights/bias)
        qkv = jnp.dot(x2, w_qkv, preferred_element_type=jnp.float32) \
            + slab128_ref[R_BQKV0 + l:R_BQKV0 + l + 1, :3 * H]      # (BS, 3H)
        qkv3 = qkv.reshape(Bq, Sq, 3 * H)

        # all heads batched along the leading axis: (NH*B, S, HD)
        q_h = jnp.concatenate(
            [qkv3[:, :, n * HD:(n + 1) * HD] for n in range(NH)], axis=0)
        k_h = jnp.concatenate(
            [qkv3[:, :, H + n * HD:H + (n + 1) * HD] for n in range(NH)], axis=0)
        v_h = jnp.concatenate(
            [qkv3[:, :, 2 * H + n * HD:2 * H + (n + 1) * HD] for n in range(NH)],
            axis=0)

        sc = jnp.einsum('bqd,bkd->bqk', q_h, k_h,
                        preferred_element_type=jnp.float32)         # (NH*B, S, S)
        sc = sc + mask_h
        sc = sc - jnp.max(sc, axis=-1, keepdims=True)
        p = jnp.exp(sc)
        p = p * pl.reciprocal(jnp.sum(p, axis=-1, keepdims=True), approx=True)
        ctx = jnp.einsum('bqk,bkd->bqd', p, v_h,
                         preferred_element_type=jnp.float32)        # (NH*B, S, HD)

        # heads back onto lanes (contiguous layout), single output projection
        attn = jnp.concatenate(
            [ctx[n * Bq:(n + 1) * Bq] for n in range(NH)], axis=-1)  # (B, S, H)
        attn2 = jnp.dot(attn.reshape(BS, H), w_o,
                        preferred_element_type=jnp.float32) \
              + slab32_ref[base + 0:base + 1, :]                    # + bo
        h = _ln(x2 + attn2, slab32_ref[base + 1:base + 2, :],
                slab32_ref[base + 2:base + 3, :])

        inter = jnp.dot(h, w_i, preferred_element_type=jnp.float32) \
              + slab128_ref[R_BI0 + l:R_BI0 + l + 1, :]             # I == 128 lanes
        # TODO(synk): HF BERT uses exact (erf) GELU; tanh approximation used here.
        inter = jax.nn.gelu(inter, approximate=True)
        ffn = jnp.dot(inter, w_f_ref[l], preferred_element_type=jnp.float32) \
            + slab32_ref[base + 3:base + 4, :]                      # + bf
        x2 = _ln(h + ffn, slab32_ref[base + 4:base + 5, :],
                 slab32_ref[base + 5:base + 6, :])

    # ---- BERT pooler: tanh(W * CLS + b) on the [CLS] token of each sequence
    cls = x2.reshape(Bq, Sq, H)[:, 0, :]                            # (B, H)
    pooled = jnp.tanh(jnp.dot(cls, w_head_ref[:, 0:H],
                              preferred_element_type=jnp.float32)
                      + slab32_ref[R_POOL_B:R_POOL_B + 1, :])

    # ---- classifier head: Linear -> BN(eval) -> ReLU -> [Dropout=id] -> ... ----
    hc = jnp.dot(pooled, w_head_ref[:, H:2 * H],
                 preferred_element_type=jnp.float32) \
       + slab32_ref[R_CLS_B1:R_CLS_B1 + 1, :]
    hc = (hc - slab32_ref[R_BN1_M:R_BN1_M + 1, :]) \
         * jax.lax.rsqrt(slab32_ref[R_BN1_V:R_BN1_V + 1, :] + BN_EPS) \
         * slab32_ref[R_BN1_G:R_BN1_G + 1, :] \
         + slab32_ref[R_BN1_B:R_BN1_B + 1, :]
    hc = jnp.maximum(hc, 0.0)
    # TODO(synk): Dropout(0.5) is identity in inference mode (no RNG drop applied).

    H2 = H // 2
    hc = jnp.dot(hc, w_head_ref[:, 2 * H:2 * H + H2],
                 preferred_element_type=jnp.float32) \
       + slab128_ref[R_CLS_B2:R_CLS_B2 + 1, :H2]
    hc = (hc - slab128_ref[R_BN2_M:R_BN2_M + 1, :H2]) \
         * jax.lax.rsqrt(slab128_ref[R_BN2_V:R_BN2_V + 1, :H2] + BN_EPS) \
         * slab128_ref[R_BN2_G:R_BN2_G + 1, :H2] \
         + slab128_ref[R_BN2_B:R_BN2_B + 1, :H2]
    hc = jnp.maximum(hc, 0.0)

    # lane-dense padded logits (B, 128); padded columns carry zero weights/bias
    logits = jnp.dot(hc, w_cls3_ref[...], preferred_element_type=jnp.float32) \
           + slab128_ref[R_CLS_B3:R_CLS_B3 + 1, :]
    o_ref[...] = logits.astype(o_ref.dtype)


# ---------------- parameter initialization ----------------------------------
def _xavier_normal(key, shape):
    fan_in, fan_out = shape
    std = (2.0 / (fan_in + fan_out)) ** 0.5
    return jax.random.normal(key, shape, jnp.float32) * std


def init_params(key):
    keys = iter(jax.random.split(key, 64))

    def nrm(shape, std=0.02):
        return jax.random.normal(next(keys), shape, jnp.float32) * std

    p = {
        'word_emb': nrm((VOCAB, H)),
        'pos_emb': nrm((MAX_POS, H)),
        'type_emb': nrm((TYPE_VOCAB, H)),
        'emb_ln_g': jnp.ones((1, H), jnp.float32),
        'emb_ln_b': jnp.zeros((1, H), jnp.float32),
        'layers': [],
    }
    for _ in range(NLAYERS):
        layer = dict(
            wq=nrm((H, H)), bq=jnp.zeros((1, H), jnp.float32),
            wk=nrm((H, H)), bk=jnp.zeros((1, H), jnp.float32),
            wv=nrm((H, H)), bv=jnp.zeros((1, H), jnp.float32),
            wo=nrm((H, H)), bo=jnp.zeros((1, H), jnp.float32),
            ln1_g=jnp.ones((1, H), jnp.float32), ln1_b=jnp.zeros((1, H), jnp.float32),
            wi=nrm((H, I)), bi=jnp.zeros((1, I), jnp.float32),
            wf=nrm((I, H)), bf=jnp.zeros((1, H), jnp.float32),
            ln2_g=jnp.ones((1, H), jnp.float32), ln2_b=jnp.zeros((1, H), jnp.float32),
        )
        p['layers'].append(layer)

    p['pool_w'] = nrm((H, H))
    p['pool_b'] = jnp.zeros((1, H), jnp.float32)

    # classifier head: xavier_normal_ weights, zero bias (matches _init_weights)
    p['cls_w1'] = _xavier_normal(next(keys), (H, H))
    p['cls_b1'] = jnp.zeros((1, H), jnp.float32)
    p['bn1_g'] = jnp.ones((1, H), jnp.float32)
    p['bn1_b'] = jnp.zeros((1, H), jnp.float32)
    p['bn1_m'] = jnp.zeros((1, H), jnp.float32)
    p['bn1_v'] = jnp.ones((1, H), jnp.float32)

    p['cls_w2'] = _xavier_normal(next(keys), (H, H // 2))
    p['cls_b2'] = jnp.zeros((1, H // 2), jnp.float32)
    p['bn2_g'] = jnp.ones((1, H // 2), jnp.float32)
    p['bn2_b'] = jnp.zeros((1, H // 2), jnp.float32)
    p['bn2_m'] = jnp.zeros((1, H // 2), jnp.float32)
    p['bn2_v'] = jnp.ones((1, H // 2), jnp.float32)

    p['cls_w3'] = _xavier_normal(next(keys), (H // 2, NCLASS))
    p['cls_b3'] = jnp.zeros((1, NCLASS), jnp.float32)
    return p


def pack_params(p):
    """Pack everything into 6 weight slabs (+2 runtime inputs = 8 kernel refs)."""
    L = p['layers']
    scale = 1.0 / (HD ** 0.5)

    # --- slab32: H-wide vectors + (pos+type) rows + word-embedding table ----
    rows = [p['emb_ln_g'], p['emb_ln_b']]
    for l in L:
        rows += [l['bo'], l['ln1_g'], l['ln1_b'], l['bf'], l['ln2_g'], l['ln2_b']]
    rows += [p['pool_b'], p['cls_b1'], p['bn1_g'], p['bn1_b'], p['bn1_m'], p['bn1_v']]
    small = jnp.concatenate(rows, axis=0)                           # (20, H)
    pad = jnp.zeros((R_POS_TYPE - small.shape[0], H), jnp.float32)  # align to 8
    # pos+type contribution is input-independent (token_type_ids == 0): fold it.
    pos_type = p['pos_emb'][:S] + p['type_emb'][0][None, :]         # (S, H)
    slab32 = jnp.concatenate([small, pad, pos_type, p['word_emb']], axis=0)  # (96,H)

    # --- slab128: wide vectors, zero-padded to 128 lanes ---------------------
    def pad128(v):
        return jnp.pad(v, ((0, 0), (0, 128 - v.shape[1])))

    rows128 = []
    for l in L:
        # fold the 1/sqrt(HD) attention scale into the Q bias as well
        rows128.append(pad128(jnp.concatenate(
            [l['bq'] * scale, l['bk'], l['bv']], axis=1)))          # (1, 96)->(1,128)
    for l in L:
        rows128.append(l['bi'])                                     # (1, 128)
    cls_b3_pad = jnp.zeros((1, NCLASS_PAD), jnp.float32).at[:, :NCLASS].set(p['cls_b3'])
    rows128 += [pad128(p['cls_b2']), pad128(p['bn2_g']), pad128(p['bn2_b']),
                pad128(p['bn2_m']), pad128(p['bn2_v']), cls_b3_pad]
    slab128 = jnp.concatenate(rows128, axis=0)                      # (10, 128)

    packed = {
        'slab32': slab32,
        'slab128': slab128,
        # per-layer [W_qkv | W_o | W_i]; Q columns pre-scaled by 1/sqrt(HD)
        'w_enc': jnp.stack([jnp.concatenate(
            [l['wq'] * scale, l['wk'], l['wv'], l['wo'], l['wi']], axis=1)
            for l in L]),                                           # (NL, H, 256)
        'w_f': jnp.stack([l['wf'] for l in L]),                     # (NL, I, H)
        'w_head': jnp.concatenate(
            [p['pool_w'], p['cls_w1'], p['cls_w2']], axis=1),       # (H, 2H + H//2)
        # zero-pad the final projection to a lane-dense 128-wide output slab
        'w_cls3': jnp.zeros((H // 2, NCLASS_PAD), jnp.float32).at[:, :NCLASS].set(p['cls_w3']),
    }
    return packed


# ---------------- forward pass ------------------------------------------------
@functools.partial(jax.jit)
def bert_review_classifier_forward(packed, input_ids, attention_mask):
    Bq, Sq = input_ids.shape
    # Wrapper does no math: ids reshape is a free (bitcast-like) layout op;
    # embedding gather and mask construction both happen inside the kernel.
    ids2 = input_ids.reshape(Bq * Sq, 1).astype(jnp.int32)
    amask = attention_mask.astype(jnp.int32)

    logits_pad = _call(
        bert_forward_kernel,
        [ids2, amask,
         packed['slab32'], packed['slab128'],
         packed['w_enc'], packed['w_f'], packed['w_head'], packed['w_cls3']],
        jax.ShapeDtypeStruct((Bq, NCLASS_PAD), jnp.float32))
    return logits_pad[:, :NCLASS]


# ---------------- main --------------------------------------------------------
if __name__ == "__main__":
    root = jax.random.PRNGKey(0)
    k_params, k_ids, k_mask = jax.random.split(root, 3)

    params = init_params(k_params)
    packed = pack_params(params)

    input_ids = jax.random.randint(k_ids, (B, S), 0, VOCAB, dtype=jnp.int32)
    # attention mask: first tokens valid, tail padded (deterministic pattern)
    lengths = jnp.array([S, S - 3], dtype=jnp.int32)
    attention_mask = (jnp.arange(S)[None, :] < lengths[:, None]).astype(jnp.int32)

    logits = bert_review_classifier_forward(packed, input_ids, attention_mask)
    logits = jax.block_until_ready(logits)

    assert logits.shape == (B, NCLASS) and logits.dtype == jnp.float32
    assert bool(jnp.all(jnp.isfinite(logits)))
    print("KERNEL_OK")
</pallas_src>

<mosaic_0001>
module attributes {stable_mosaic.version = 11 : i64} {
  func.func @bert_forward_kernel(%arg0: i32, %arg1: memref<16x1xi32, #tpu.memory_space<vmem>>, %arg2: memref<2x8xi32, #tpu.memory_space<vmem>>, %arg3: memref<96x32xf32, #tpu.memory_space<vmem>>, %arg4: memref<10x128xf32, #tpu.memory_space<vmem>>, %arg5: memref<2x32x256xf32, #tpu.memory_space<vmem>>, %arg6: memref<2x128x32xf32, #tpu.memory_space<vmem>>, %arg7: memref<32x80xf32, #tpu.memory_space<vmem>>, %arg8: memref<16x128xf32, #tpu.memory_space<vmem>>, %arg9: memref<2x128xf32, #tpu.memory_space<vmem>>) attributes {dimension_semantics = [#tpu.dimension_semantics<arbitrary>], iteration_bounds = array<i64: 1>, scalar_prefetch = 0 : i64, scratch_operands = 0 : i64, tpu.core_type = #tpu.core_type<tc>, window_params = [{pipeline_mode = #tpu.pipeline_mode<synchronous>, transform_indices = @transform_0, window_bounds = array<i64: 16, 1>}, {pipeline_mode = #tpu.pipeline_mode<synchronous>, transform_indices = @transform_1, window_bounds = array<i64: 2, 8>}, {pipeline_mode = #tpu.pipeline_mode<synchronous>, transform_indices = @transform_2, window_bounds = array<i64: 96, 32>}, {pipeline_mode = #tpu.pipeline_mode<synchronous>, transform_indices = @transform_3, window_bounds = array<i64: 10, 128>}, {pipeline_mode = #tpu.pipeline_mode<synchronous>, transform_indices = @transform_4, window_bounds = array<i64: 2, 32, 256>}, {pipeline_mode = #tpu.pipeline_mode<synchronous>, transform_indices = @transform_5, window_bounds = array<i64: 2, 128, 32>}, {pipeline_mode = #tpu.pipeline_mode<synchronous>, transform_indices = @transform_6, window_bounds = array<i64: 32, 80>}, {pipeline_mode = #tpu.pipeline_mode<synchronous>, transform_indices = @transform_7, window_bounds = array<i64: 16, 128>}, {pipeline_mode = #tpu.pipeline_mode<synchronous>, transform_indices = @transform_8, window_bounds = array<i64: 2, 128>}]} {
    %c0 = arith.constant 0 : index
    %c0_0 = arith.constant 0 : index
    %0 = vector.load %arg1[%c0, %c0_0] : memref<16x1xi32, #tpu.memory_space<vmem>>, vector<16x1xi32>
    %1 = tpu.iota {dimensions = array<i32: 1>} : vector<16x64xi32>
    %2 = vector.broadcast %0 : vector<16x1xi32> to vector<16x64xi32>
    %3 = arith.cmpi eq, %2, %1 : vector<16x64xi32>
    %4 = arith.extui %3 : vector<16x64xi1> to vector<16x64xi32>
    %5 = arith.sitofp %4 : vector<16x64xi32> to vector<16x64xf32>
    %c32 = arith.constant 32 : index
    %c0_1 = arith.constant 0 : index
    %6 = vector.load %arg3[%c32, %c0_1] : memref<96x32xf32, #tpu.memory_space<vmem>>, vector<64x32xf32>
    %cst = arith.constant dense<0.000000e+00> : vector<16x32xf32>
    %7 = tpu.matmul %5, %6, %cst {dimension_numbers = #tpu.dot_dimension_numbers<[1], [0], [0], [1], [0, 0, 1, 1], [], []>} : vector<16x64xf32>, vector<64x32xf32>, vector<16x32xf32> -> vector<16x32xf32>
    %c24 = arith.constant 24 : index
    %c0_2 = arith.constant 0 : index
    %8 = vector.load %arg3[%c24, %c0_2] : memref<96x32xf32, #tpu.memory_space<vmem>>, vector<8x32xf32>
    %9 = tpu.concatenate %8, %8 in 0 : vector<8x32xf32>, vector<8x32xf32> -> vector<16x32xf32>
    %10 = arith.addf %7, %9 : vector<16x32xf32>
    %c0_3 = arith.constant 0 : index
    %c0_4 = arith.constant 0 : index
    %11 = vector.load %arg3[%c0_3, %c0_4] : memref<96x32xf32, #tpu.memory_space<vmem>>, vector<1x32xf32>
    %c1 = arith.constant 1 : index
    %c0_5 = arith.constant 0 : index
    %12 = vector.load %arg3[%c1, %c0_5] : memref<96x32xf32, #tpu.memory_space<vmem>>, vector<1x32xf32>
    %cst_6 = arith.constant dense<0.000000e+00> : vector<16xf32>
    %13 = vector.multi_reduction <add>, %10, %cst_6 [1] : vector<16x32xf32> to vector<16xf32>
    %14 = vector.shape_cast %13 : vector<16xf32> to vector<16x1xf32>
    %cst_7 = arith.constant 3.200000e+01 : f32
    %15 = vector.broadcast %cst_7 : f32 to vector<16x1xf32>
    %16 = arith.divf %14, %15 : vector<16x1xf32>
    %17 = vector.broadcast %16 : vector<16x1xf32> to vector<16x32xf32>
    %18 = arith.subf %10, %17 : vector<16x32xf32>
    %19 = arith.mulf %18, %18 : vector<16x32xf32>
    %cst_8 = arith.constant dense<0.000000e+00> : vector<16xf32>
    %20 = vector.multi_reduction <add>, %19, %cst_8 [1] : vector<16x32xf32> to vector<16xf32>
    %21 = vector.shape_cast %20 : vector<16xf32> to vector<16x1xf32>
    %cst_9 = arith.constant 3.200000e+01 : f32
    %22 = vector.broadcast %cst_9 : f32 to vector<16x1xf32>
    %23 = arith.divf %21, %22 : vector<16x1xf32>
    %24 = vector.broadcast %16 : vector<16x1xf32> to vector<16x32xf32>
    %25 = arith.subf %10, %24 : vector<16x32xf32>
    %cst_10 = arith.constant 9.99999996E-13 : f32
    %26 = vector.broadcast %cst_10 : f32 to vector<16x1xf32>
    %27 = arith.addf %23, %26 : vector<16x1xf32>
    %28 = math.rsqrt %27 : vector<16x1xf32>
    %29 = vector.broadcast %28 : vector<16x1xf32> to vector<16x32xf32>
    %30 = arith.mulf %25, %29 : vector<16x32xf32>
    %31 = vector.broadcast %11 : vector<1x32xf32> to vector<16x32xf32>
    %32 = arith.mulf %30, %31 : vector<16x32xf32>
    %33 = vector.broadcast %12 : vector<1x32xf32> to vector<16x32xf32>
    %34 = arith.addf %32, %33 : vector<16x32xf32>
    %c0_11 = arith.constant 0 : index
    %c0_12 = arith.constant 0 : index
    %35 = vector.load %arg2[%c0_11, %c0_12] : memref<2x8xi32, #tpu.memory_space<vmem>>, vector<2x8xi32>
    %36 = arith.sitofp %35 : vector<2x8xi32> to vector<2x8xf32>
    %cst_13 = arith.constant 1.000000e+00 : f32
    %37 = vector.broadcast %cst_13 : f32 to vector<2x8xf32>
    %38 = arith.subf %37, %36 : vector<2x8xf32>
    %cst_14 = arith.constant -1.000000e+04 : f32
    %39 = vector.broadcast %cst_14 : f32 to vector<2x8xf32>
    %40 = arith.mulf %38, %39 : vector<2x8xf32>
    %41 = tpu.concatenate %40, %40, %40, %40 in 0 : vector<2x8xf32>, vector<2x8xf32>, vector<2x8xf32>, vector<2x8xf32> -> vector<8x8xf32>
    %42 = vector.shape_cast %41 : vector<8x8xf32> to vector<8x1x8xf32>
    %c0_15 = arith.constant 0 : index
    %c0_16 = arith.constant 0 : index
    %c0_17 = arith.constant 0 : index
    %43 = vector.load %arg5[%c0_15, %c0_16, %c0_17] : memref<2x32x256xf32, #tpu.memory_space<vmem>>, vector<1x32x256xf32>
    %44 = vector.shape_cast %43 : vector<1x32x256xf32> to vector<32x256xf32>
    %45 = vector.extract_strided_slice %44 {offsets = [0, 0], sizes = [32, 96], strides = [1, 1]} : vector<32x256xf32> to vector<32x96xf32>
    %46 = vector.extract_strided_slice %44 {offsets = [0, 96], sizes = [32, 32], strides = [1, 1]} : vector<32x256xf32> to vector<32x32xf32>
    %47 = vector.extract_strided_slice %44 {offsets = [0, 128], sizes = [32, 128], strides = [1, 1]} : vector<32x256xf32> to vector<32x128xf32>
    %cst_18 = arith.constant dense<0.000000e+00> : vector<16x96xf32>
    %48 = tpu.matmul %34, %45, %cst_18 {dimension_numbers = #tpu.dot_dimension_numbers<[1], [0], [0], [1], [0, 0, 1, 1], [], []>} : vector<16x32xf32>, vector<32x96xf32>, vector<16x96xf32> -> vector<16x96xf32>
    %c0_19 = arith.constant 0 : index
    %c0_20 = arith.constant 0 : index
    %49 = vector.load %arg4[%c0_19, %c0_20] : memref<10x128xf32, #tpu.memory_space<vmem>>, vector<1x96xf32>
    %50 = vector.broadcast %49 : vector<1x96xf32> to vector<16x96xf32>
    %51 = arith.addf %48, %50 : vector<16x96xf32>
    %52 = vector.shape_cast %51 : vector<16x96xf32> to vector<2x8x96xf32>
    %53 = vector.extract_strided_slice %52 {offsets = [0, 0, 0], sizes = [2, 8, 8], strides = [1, 1, 1]} : vector<2x8x96xf32> to vector<2x8x8xf32>
    %54 = vector.extract_strided_slice %52 {offsets = [0, 0, 8], sizes = [2, 8, 8], strides = [1, 1, 1]} : vector<2x8x96xf32> to vector<2x8x8xf32>
    %55 = vector.extract_strided_slice %52 {offsets = [0, 0, 16], sizes = [2, 8, 8], strides = [1, 1, 1]} : vector<2x8x96xf32> to vector<2x8x8xf32>
    %56 = vector.extract_strided_slice %52 {offsets = [0, 0, 24], sizes = [2, 8, 8], strides = [1, 1, 1]} : vector<2x8x96xf32> to vector<2x8x8xf32>
    %57 = tpu.concatenate %53, %54, %55, %56 in 0 : vector<2x8x8xf32>, vector<2x8x8xf32>, vector<2x8x8xf32>, vector<2x8x8xf32> -> vector<8x8x8xf32>
    %58 = vector.extract_strided_slice %52 {offsets = [0, 0, 32], sizes = [2, 8, 8], strides = [1, 1, 1]} : vector<2x8x96xf32> to vector<2x8x8xf32>
    %59 = vector.extract_strided_slice %52 {offsets = [0, 0, 40], sizes = [2, 8, 8], strides = [1, 1, 1]} : vector<2x8x96xf32> to vector<2x8x8xf32>
    %60 = vector.extract_strided_slice %52 {offsets = [0, 0, 48], sizes = [2, 8, 8], strides = [1, 1, 1]} : vector<2x8x96xf32> to vector<2x8x8xf32>
    %61 = vector.extract_strided_slice %52 {offsets = [0, 0, 56], sizes = [2, 8, 8], strides = [1, 1, 1]} : vector<2x8x96xf32> to vector<2x8x8xf32>
    %62 = tpu.concatenate %58, %59, %60, %61 in 0 : vector<2x8x8xf32>, vector<2x8x8xf32>, vector<2x8x8xf32>, vector<2x8x8xf32> -> vector<8x8x8xf32>
    %63 = vector.extract_strided_slice %52 {offsets = [0, 0, 64], sizes = [2, 8, 8], strides = [1, 1, 1]} : vector<2x8x96xf32> to vector<2x8x8xf32>
    %64 = vector.extract_strided_slice %52 {offsets = [0, 0, 72], sizes = [2, 8, 8], strides = [1, 1, 1]} : vector<2x8x96xf32> to vector<2x8x8xf32>
    %65 = vector.extract_strided_slice %52 {offsets = [0, 0, 80], sizes = [2, 8, 8], strides = [1, 1, 1]} : vector<2x8x96xf32> to vector<2x8x8xf32>
    %66 = vector.extract_strided_slice %52 {offsets = [0, 0, 88], sizes = [2, 8, 8], strides = [1, 1, 1]} : vector<2x8x96xf32> to vector<2x8x8xf32>
    %67 = tpu.concatenate %63, %64, %65, %66 in 0 : vector<2x8x8xf32>, vector<2x8x8xf32>, vector<2x8x8xf32>, vector<2x8x8xf32> -> vector<8x8x8xf32>
    "tpu.trace_start"() <{level = 10 : i32, message = "bqd,bkd->bqk"}> : () -> ()
    %cst_21 = arith.constant dense<0.000000e+00> : vector<8x8x8xf32>
    %68 = tpu.matmul %57, %62, %cst_21 {dimension_numbers = #tpu.dot_dimension_numbers<[2], [2], [1], [1], [0, 0, 0, 1, 1, 1], [0], [0]>} : vector<8x8x8xf32>, vector<8x8x8xf32>, vector<8x8x8xf32> -> vector<8x8x8xf32>
    "tpu.trace_stop"() : () -> ()
    %69 = vector.broadcast %42 : vector<8x1x8xf32> to vector<8x8x8xf32>
    %70 = arith.addf %68, %69 : vector<8x8x8xf32>
    %cst_22 = arith.constant dense<0xFF800000> : vector<8x8xf32>
    %71 = vector.multi_reduction <maximumf>, %70, %cst_22 [2] : vector<8x8x8xf32> to vector<8x8xf32>
    %72 = vector.shape_cast %71 : vector<8x8xf32> to vector<8x8x1xf32>
    %73 = vector.broadcast %72 : vector<8x8x1xf32> to vector<8x8x8xf32>
    %74 = arith.subf %70, %73 : vector<8x8x8xf32>
    %75 = math.exp %74 : vector<8x8x8xf32>
    %cst_23 = arith.constant dense<0.000000e+00> : vector<8x8xf32>
    %76 = vector.multi_reduction <add>, %75, %cst_23 [2] : vector<8x8x8xf32> to vector<8x8xf32>
    %77 = vector.shape_cast %76 : vector<8x8xf32> to vector<8x8x1xf32>
    %78 = tpu.reciprocal %77 {approx = true} : vector<8x8x1xf32> -> vector<8x8x1xf32>
    %79 = vector.broadcast %78 : vector<8x8x1xf32> to vector<8x8x8xf32>
    %80 = arith.mulf %75, %79 : vector<8x8x8xf32>
    "tpu.trace_start"() <{level = 10 : i32, message = "bqk,bkd->bqd"}> : () -> ()
    %cst_24 = arith.constant dense<0.000000e+00> : vector<8x8x8xf32>
    %81 = tpu.matmul %80, %67, %cst_24 {dimension_numbers = #tpu.dot_dimension_numbers<[2], [1], [1], [2], [0, 0, 0, 1, 1, 2], [0], [0]>} : vector<8x8x8xf32>, vector<8x8x8xf32>, vector<8x8x8xf32> -> vector<8x8x8xf32>
    "tpu.trace_stop"() : () -> ()
    %82 = vector.extract_strided_slice %81 {offsets = [0, 0, 0], sizes = [2, 8, 8], strides = [1, 1, 1]} : vector<8x8x8xf32> to vector<2x8x8xf32>
    %83 = vector.extract_strided_slice %81 {offsets = [2, 0, 0], sizes = [2, 8, 8], strides = [1, 1, 1]} : vector<8x8x8xf32> to vector<2x8x8xf32>
    %84 = vector.extract_strided_slice %81 {offsets = [4, 0, 0], sizes = [2, 8, 8], strides = [1, 1, 1]} : vector<8x8x8xf32> to vector<2x8x8xf32>
    %85 = vector.extract_strided_slice %81 {offsets = [6, 0, 0], sizes = [2, 8, 8], strides = [1, 1, 1]} : vector<8x8x8xf32> to vector<2x8x8xf32>
    %86 = tpu.concatenate %82, %83, %84, %85 in 2 : vector<2x8x8xf32>, vector<2x8x8xf32>, vector<2x8x8xf32>, vector<2x8x8xf32> -> vector<2x8x32xf32>
    %87 = vector.shape_cast %86 : vector<2x8x32xf32> to vector<16x32xf32>
    %cst_25 = arith.constant dense<0.000000e+00> : vector<16x32xf32>
    %88 = tpu.matmul %87, %46, %cst_25 {dimension_numbers = #tpu.dot_dimension_numbers<[1], [0], [0], [1], [0, 0, 1, 1], [], []>} : vector<16x32xf32>, vector<32x32xf32>, vector<16x32xf32> -> vector<16x32xf32>
    %c2 = arith.constant 2 : index
    %c0_26 = arith.constant 0 : index
    %89 = vector.load %arg3[%c2, %c0_26] : memref<96x32xf32, #tpu.memory_space<vmem>>, vector<1x32xf32>
    %90 = vector.broadcast %89 : vector<1x32xf32> to vector<16x32xf32>
    %91 = arith.addf %88, %90 : vector<16x32xf32>
    %92 = arith.addf %34, %91 : vector<16x32xf32>
    %c3 = arith.constant 3 : index
    %c0_27 = arith.constant 0 : index
    %93 = vector.load %arg3[%c3, %c0_27] : memref<96x32xf32, #tpu.memory_space<vmem>>, vector<1x32xf32>
    %c4 = arith.constant 4 : index
    %c0_28 = arith.constant 0 : index
    %94 = vector.load %arg3[%c4, %c0_28] : memref<96x32xf32, #tpu.memory_space<vmem>>, vector<1x32xf32>
    %cst_29 = arith.constant dense<0.000000e+00> : vector<16xf32>
    %95 = vector.multi_reduction <add>, %92, %cst_29 [1] : vector<16x32xf32> to vector<16xf32>
    %96 = vector.shape_cast %95 : vector<16xf32> to vector<16x1xf32>
    %cst_30 = arith.constant 3.200000e+01 : f32
    %97 = vector.broadcast %cst_30 : f32 to vector<16x1xf32>
    %98 = arith.divf %96, %97 : vector<16x1xf32>
    %99 = vector.broadcast %98 : vector<16x1xf32> to vector<16x32xf32>
    %100 = arith.subf %92, %99 : vector<16x32xf32>
    %101 = arith.mulf %100, %100 : vector<16x32xf32>
    %cst_31 = arith.constant dense<0.000000e+00> : vector<16xf32>
    %102 = vector.multi_reduction <add>, %101, %cst_31 [1] : vector<16x32xf32> to vector<16xf32>
    %103 = vector.shape_cast %102 : vector<16xf32> to vector<16x1xf32>
    %cst_32 = arith.constant 3.200000e+01 : f32
    %104 = vector.broadcast %cst_32 : f32 to vector<16x1xf32>
    %105 = arith.divf %103, %104 : vector<16x1xf32>
    %106 = vector.broadcast %98 : vector<16x1xf32> to vector<16x32xf32>
    %107 = arith.subf %92, %106 : vector<16x32xf32>
    %cst_33 = arith.constant 9.99999996E-13 : f32
    %108 = vector.broadcast %cst_33 : f32 to vector<16x1xf32>
    %109 = arith.addf %105, %108 : vector<16x1xf32>
    %110 = math.rsqrt %109 : vector<16x1xf32>
    %111 = vector.broadcast %110 : vector<16x1xf32> to vector<16x32xf32>
    %112 = arith.mulf %107, %111 : vector<16x32xf32>
    %113 = vector.broadcast %93 : vector<1x32xf32> to vector<16x32xf32>
    %114 = arith.mulf %112, %113 : vector<16x32xf32>
    %115 = vector.broadcast %94 : vector<1x32xf32> to vector<16x32xf32>
    %116 = arith.addf %114, %115 : vector<16x32xf32>
    %cst_34 = arith.constant dense<0.000000e+00> : vector<16x128xf32>
    %117 = tpu.matmul %116, %47, %cst_34 {dimension_numbers = #tpu.dot_dimension_numbers<[1], [0], [0], [1], [0, 0, 1, 1], [], []>} : vector<16x32xf32>, vector<32x128xf32>, vector<16x128xf32> -> vector<16x128xf32>
    %c2_35 = arith.constant 2 : index
    %c0_36 = arith.constant 0 : index
    %118 = vector.load %arg4[%c2_35, %c0_36] : memref<10x128xf32, #tpu.memory_space<vmem>>, vector<1x128xf32>
    %119 = vector.broadcast %118 : vector<1x128xf32> to vector<16x128xf32>
    %120 = arith.addf %117, %119 : vector<16x128xf32>
    %121 = arith.mulf %120, %120 : vector<16x128xf32>
    %122 = arith.mulf %120, %121 : vector<16x128xf32>
    %cst_37 = arith.constant 4.471500e-02 : f32
    %123 = vector.broadcast %cst_37 : f32 to vector<16x128xf32>
    %124 = arith.mulf %123, %122 : vector<16x128xf32>
    %125 = arith.addf %120, %124 : vector<16x128xf32>
    %cst_38 = arith.constant 0.797884583 : f32
    %126 = vector.broadcast %cst_38 : f32 to vector<16x128xf32>
    %127 = arith.mulf %126, %125 : vector<16x128xf32>
    %128 = math.tanh %127 : vector<16x128xf32>
    %cst_39 = arith.constant 1.000000e+00 : f32
    %129 = vector.broadcast %cst_39 : f32 to vector<16x128xf32>
    %130 = arith.addf %129, %128 : vector<16x128xf32>
    %cst_40 = arith.constant 5.000000e-01 : f32
    %131 = vector.broadcast %cst_40 : f32 to vector<16x128xf32>
    %132 = arith.mulf %131, %130 : vector<16x128xf32>
    %133 = arith.mulf %120, %132 : vector<16x128xf32>
    %c0_41 = arith.constant 0 : index
    %c0_42 = arith.constant 0 : index
    %c0_43 = arith.constant 0 : index
    %134 = vector.load %arg6[%c0_41, %c0_42, %c0_43] : memref<2x128x32xf32, #tpu.memory_space<vmem>>, vector<1x128x32xf32>
    %135 = vector.shape_cast %134 : vector<1x128x32xf32> to vector<128x32xf32>
    %cst_44 = arith.constant dense<0.000000e+00> : vector<16x32xf32>
    %136 = tpu.matmul %133, %135, %cst_44 {dimension_numbers = #tpu.dot_dimension_numbers<[1], [0], [0], [1], [0, 0, 1, 1], [], []>} : vector<16x128xf32>, vector<128x32xf32>, vector<16x32xf32> -> vector<16x32xf32>
    %c5 = arith.constant 5 : index
    %c0_45 = arith.constant 0 : index
    %137 = vector.load %arg3[%c5, %c0_45] : memref<96x32xf32, #tpu.memory_space<vmem>>, vector<1x32xf32>
    %138 = vector.broadcast %137 : vector<1x32xf32> to vector<16x32xf32>
    %139 = arith.addf %136, %138 : vector<16x32xf32>
    %140 = arith.addf %116, %139 : vector<16x32xf32>
    %c6 = arith.constant 6 : index
    %c0_46 = arith.constant 0 : index
    %141 = vector.load %arg3[%c6, %c0_46] : memref<96x32xf32, #tpu.memory_space<vmem>>, vector<1x32xf32>
    %c7 = arith.constant 7 : index
    %c0_47 = arith.constant 0 : index
    %142 = vector.load %arg3[%c7, %c0_47] : memref<96x32xf32, #tpu.memory_space<vmem>>, vector<1x32xf32>
    %cst_48 = arith.constant dense<0.000000e+00> : vector<16xf32>
    %143 = vector.multi_reduction <add>, %140, %cst_48 [1] : vector<16x32xf32> to vector<16xf32>
    %144 = vector.shape_cast %143 : vector<16xf32> to vector<16x1xf32>
    %cst_49 = arith.constant 3.200000e+01 : f32
    %145 = vector.broadcast %cst_49 : f32 to vector<16x1xf32>
    %146 = arith.divf %144, %145 : vector<16x1xf32>
    %147 = vector.broadcast %146 : vector<16x1xf32> to vector<16x32xf32>
    %148 = arith.subf %140, %147 : vector<16x32xf32>
    %149 = arith.mulf %148, %148 : vector<16x32xf32>
    %cst_50 = arith.constant dense<0.000000e+00> : vector<16xf32>
    %150 = vector.multi_reduction <add>, %149, %cst_50 [1] : vector<16x32xf32> to vector<16xf32>
    %151 = vector.shape_cast %150 : vector<16xf32> to vector<16x1xf32>
    %cst_51 = arith.constant 3.200000e+01 : f32
    %152 = vector.broadcast %cst_51 : f32 to vector<16x1xf32>
    %153 = arith.divf %151, %152 : vector<16x1xf32>
    %154 = vector.broadcast %146 : vector<16x1xf32> to vector<16x32xf32>
    %155 = arith.subf %140, %154 : vector<16x32xf32>
    %cst_52 = arith.constant 9.99999996E-13 : f32
    %156 = vector.broadcast %cst_52 : f32 to vector<16x1xf32>
    %157 = arith.addf %153, %156 : vector<16x1xf32>
    %158 = math.rsqrt %157 : vector<16x1xf32>
    %159 = vector.broadcast %158 : vector<16x1xf32> to vector<16x32xf32>
    %160 = arith.mulf %155, %159 : vector<16x32xf32>
    %161 = vector.broadcast %141 : vector<1x32xf32> to vector<16x32xf32>
    %162 = arith.mulf %160, %161 : vector<16x32xf32>
    %163 = vector.broadcast %142 : vector<1x32xf32> to vector<16x32xf32>
    %164 = arith.addf %162, %163 : vector<16x32xf32>
    %c1_53 = arith.constant 1 : index
    %c0_54 = arith.constant 0 : index
    %c0_55 = arith.constant 0 : index
    %165 = vector.load %arg5[%c1_53, %c0_54, %c0_55] : memref<2x32x256xf32, #tpu.memory_space<vmem>>, vector<1x32x256xf32>
    %166 = vector.shape_cast %165 : vector<1x32x256xf32> to vector<32x256xf32>
    %167 = vector.extract_strided_slice %166 {offsets = [0, 0], sizes = [32, 96], strides = [1, 1]} : vector<32x256xf32> to vector<32x96xf32>
    %168 = vector.extract_strided_slice %166 {offsets = [0, 96], sizes = [32, 32], strides = [1, 1]} : vector<32x256xf32> to vector<32x32xf32>
    %169 = vector.extract_strided_slice %166 {offsets = [0, 128], sizes = [32, 128], strides = [1, 1]} : vector<32x256xf32> to vector<32x128xf32>
    %cst_56 = arith.constant dense<0.000000e+00> : vector<16x96xf32>
    %170 = tpu.matmul %164, %167, %cst_56 {dimension_numbers = #tpu.dot_dimension_numbers<[1], [0], [0], [1], [0, 0, 1, 1], [], []>} : vector<16x32xf32>, vector<32x96xf32>, vector<16x96xf32> -> vector<16x96xf32>
    %c1_57 = arith.constant 1 : index
    %c0_58 = arith.constant 0 : index
    %171 = vector.load %arg4[%c1_57, %c0_58] : memref<10x128xf32, #tpu.memory_space<vmem>>, vector<1x96xf32>
    %172 = vector.broadcast %171 : vector<1x96xf32> to vector<16x96xf32>
    %173 = arith.addf %170, %172 : vector<16x96xf32>
    %174 = vector.shape_cast %173 : vector<16x96xf32> to vector<2x8x96xf32>
    %175 = vector.extract_strided_slice %174 {offsets = [0, 0, 0], sizes = [2, 8, 8], strides = [1, 1, 1]} : vector<2x8x96xf32> to vector<2x8x8xf32>
    %176 = vector.extract_strided_slice %174 {offsets = [0, 0, 8], sizes = [2, 8, 8], strides = [1, 1, 1]} : vector<2x8x96xf32> to vector<2x8x8xf32>
    %177 = vector.extract_strided_slice %174 {offsets = [0, 0, 16], sizes = [2, 8, 8], strides = [1, 1, 1]} : vector<2x8x96xf32> to vector<2x8x8xf32>
    %178 = vector.extract_strided_slice %174 {offsets = [0, 0, 24], sizes = [2, 8, 8], strides = [1, 1, 1]} : vector<2x8x96xf32> to vector<2x8x8xf32>
    %179 = tpu.concatenate %175, %176, %177, %178 in 0 : vector<2x8x8xf32>, vector<2x8x8xf32>, vector<2x8x8xf32>, vector<2x8x8xf32> -> vector<8x8x8xf32>
    %180 = vector.extract_strided_slice %174 {offsets = [0, 0, 32], sizes = [2, 8, 8], strides = [1, 1, 1]} : vector<2x8x96xf32> to vector<2x8x8xf32>
    %181 = vector.extract_strided_slice %174 {offsets = [0, 0, 40], sizes = [2, 8, 8], strides = [1, 1, 1]} : vector<2x8x96xf32> to vector<2x8x8xf32>
    %182 = vector.extract_strided_slice %174 {offsets = [0, 0, 48], sizes = [2, 8, 8], strides = [1, 1, 1]} : vector<2x8x96xf32> to vector<2x8x8xf32>
    %183 = vector.extract_strided_slice %174 {offsets = [0, 0, 56], sizes = [2, 8, 8], strides = [1, 1, 1]} : vector<2x8x96xf32> to vector<2x8x8xf32>
    %184 = tpu.concatenate %180, %181, %182, %183 in 0 : vector<2x8x8xf32>, vector<2x8x8xf32>, vector<2x8x8xf32>, vector<2x8x8xf32> -> vector<8x8x8xf32>
    %185 = vector.extract_strided_slice %174 {offsets = [0, 0, 64], sizes = [2, 8, 8], strides = [1, 1, 1]} : vector<2x8x96xf32> to vector<2x8x8xf32>
    %186 = vector.extract_strided_slice %174 {offsets = [0, 0, 72], sizes = [2, 8, 8], strides = [1, 1, 1]} : vector<2x8x96xf32> to vector<2x8x8xf32>
    %187 = vector.extract_strided_slice %174 {offsets = [0, 0, 80], sizes = [2, 8, 8], strides = [1, 1, 1]} : vector<2x8x96xf32> to vector<2x8x8xf32>
    %188 = vector.extract_strided_slice %174 {offsets = [0, 0, 88], sizes = [2, 8, 8], strides = [1, 1, 1]} : vector<2x8x96xf32> to vector<2x8x8xf32>
    %189 = tpu.concatenate %185, %186, %187, %188 in 0 : vector<2x8x8xf32>, vector<2x8x8xf32>, vector<2x8x8xf32>, vector<2x8x8xf32> -> vector<8x8x8xf32>
    "tpu.trace_start"() <{level = 10 : i32, message = "bqd,bkd->bqk"}> : () -> ()
    %cst_59 = arith.constant dense<0.000000e+00> : vector<8x8x8xf32>
    %190 = tpu.matmul %179, %184, %cst_59 {dimension_numbers = #tpu.dot_dimension_numbers<[2], [2], [1], [1], [0, 0, 0, 1, 1, 1], [0], [0]>} : vector<8x8x8xf32>, vector<8x8x8xf32>, vector<8x8x8xf32> -> vector<8x8x8xf32>
    "tpu.trace_stop"() : () -> ()
    %191 = vector.broadcast %42 : vector<8x1x8xf32> to vector<8x8x8xf32>
    %192 = arith.addf %190, %191 : vector<8x8x8xf32>
    %cst_60 = arith.constant dense<0xFF800000> : vector<8x8xf32>
    %193 = vector.multi_reduction <maximumf>, %192, %cst_60 [2] : vector<8x8x8xf32> to vector<8x8xf32>
    %194 = vector.shape_cast %193 : vector<8x8xf32> to vector<8x8x1xf32>
    %195 = vector.broadcast %194 : vector<8x8x1xf32> to vector<8x8x8xf32>
    %196 = arith.subf %192, %195 : vector<8x8x8xf32>
    %197 = math.exp %196 : vector<8x8x8xf32>
    %cst_61 = arith.constant dense<0.000000e+00> : vector<8x8xf32>
    %198 = vector.multi_reduction <add>, %197, %cst_61 [2] : vector<8x8x8xf32> to vector<8x8xf32>
    %199 = vector.shape_cast %198 : vector<8x8xf32> to vector<8x8x1xf32>
    %200 = tpu.reciprocal %199 {approx = true} : vector<8x8x1xf32> -> vector<8x8x1xf32>
    %201 = vector.broadcast %200 : vector<8x8x1xf32> to vector<8x8x8xf32>
    %202 = arith.mulf %197, %201 : vector<8x8x8xf32>
    "tpu.trace_start"() <{level = 10 : i32, message = "bqk,bkd->bqd"}> : () -> ()
    %cst_62 = arith.constant dense<0.000000e+00> : vector<8x8x8xf32>
    %203 = tpu.matmul %202, %189, %cst_62 {dimension_numbers = #tpu.dot_dimension_numbers<[2], [1], [1], [2], [0, 0, 0, 1, 1, 2], [0], [0]>} : vector<8x8x8xf32>, vector<8x8x8xf32>, vector<8x8x8xf32> -> vector<8x8x8xf32>
    "tpu.trace_stop"() : () -> ()
    %204 = vector.extract_strided_slice %203 {offsets = [0, 0, 0], sizes = [2, 8, 8], strides = [1, 1, 1]} : vector<8x8x8xf32> to vector<2x8x8xf32>
    %205 = vector.extract_strided_slice %203 {offsets = [2, 0, 0], sizes = [2, 8, 8], strides = [1, 1, 1]} : vector<8x8x8xf32> to vector<2x8x8xf32>
    %206 = vector.extract_strided_slice %203 {offsets = [4, 0, 0], sizes = [2, 8, 8], strides = [1, 1, 1]} : vector<8x8x8xf32> to vector<2x8x8xf32>
    %207 = vector.extract_strided_slice %203 {offsets = [6, 0, 0], sizes = [2, 8, 8], strides = [1, 1, 1]} : vector<8x8x8xf32> to vector<2x8x8xf32>
    %208 = tpu.concatenate %204, %205, %206, %207 in 2 : vector<2x8x8xf32>, vector<2x8x8xf32>, vector<2x8x8xf32>, vector<2x8x8xf32> -> vector<2x8x32xf32>
    %209 = vector.shape_cast %208 : vector<2x8x32xf32> to vector<16x32xf32>
    %cst_63 = arith.constant dense<0.000000e+00> : vector<16x32xf32>
    %210 = tpu.matmul %209, %168, %cst_63 {dimension_numbers = #tpu.dot_dimension_numbers<[1], [0], [0], [1], [0, 0, 1, 1], [], []>} : vector<16x32xf32>, vector<32x32xf32>, vector<16x32xf32> -> vector<16x32xf32>
    %c8 = arith.constant 8 : index
    %c0_64 = arith.constant 0 : index
    %211 = vector.load %arg3[%c8, %c0_64] : memref<96x32xf32, #tpu.memory_space<vmem>>, vector<1x32xf32>
    %212 = vector.broadcast %211 : vector<1x32xf32> to vector<16x32xf32>
    %213 = arith.addf %210, %212 : vector<16x32xf32>
    %214 = arith.addf %164, %213 : vector<16x32xf32>
    %c9 = arith.constant 9 : index
    %c0_65 = arith.constant 0 : index
    %215 = vector.load %arg3[%c9, %c0_65] : memref<96x32xf32, #tpu.memory_space<vmem>>, vector<1x32xf32>
    %c10 = arith.constant 10 : index
    %c0_66 = arith.constant 0 : index
    %216 = vector.load %arg3[%c10, %c0_66] : memref<96x32xf32, #tpu.memory_space<vmem>>, vector<1x32xf32>
    %cst_67 = arith.constant dense<0.000000e+00> : vector<16xf32>
    %217 = vector.multi_reduction <add>, %214, %cst_67 [1] : vector<16x32xf32> to vector<16xf32>
    %218 = vector.shape_cast %217 : vector<16xf32> to vector<16x1xf32>
    %cst_68 = arith.constant 3.200000e+01 : f32
    %219 = vector.broadcast %cst_68 : f32 to vector<16x1xf32>
    %220 = arith.divf %218, %219 : vector<16x1xf32>
    %221 = vector.broadcast %220 : vector<16x1xf32> to vector<16x32xf32>
    %222 = arith.subf %214, %221 : vector<16x32xf32>
    %223 = arith.mulf %222, %222 : vector<16x32xf32>
    %cst_69 = arith.constant dense<0.000000e+00> : vector<16xf32>
    %224 = vector.multi_reduction <add>, %223, %cst_69 [1] : vector<16x32xf32> to vector<16xf32>
    %225 = vector.shape_cast %224 : vector<16xf32> to vector<16x1xf32>
    %cst_70 = arith.constant 3.200000e+01 : f32
    %226 = vector.broadcast %cst_70 : f32 to vector<16x1xf32>
    %227 = arith.divf %225, %226 : vector<16x1xf32>
    %228 = vector.broadcast %220 : vector<16x1xf32> to vector<16x32xf32>
    %229 = arith.subf %214, %228 : vector<16x32xf32>
    %cst_71 = arith.constant 9.99999996E-13 : f32
    %230 = vector.broadcast %cst_71 : f32 to vector<16x1xf32>
    %231 = arith.addf %227, %230 : vector<16x1xf32>
    %232 = math.rsqrt %231 : vector<16x1xf32>
    %233 = vector.broadcast %232 : vector<16x1xf32> to vector<16x32xf32>
    %234 = arith.mulf %229, %233 : vector<16x32xf32>
    %235 = vector.broadcast %215 : vector<1x32xf32> to vector<16x32xf32>
    %236 = arith.mulf %234, %235 : vector<16x32xf32>
    %237 = vector.broadcast %216 : vector<1x32xf32> to vector<16x32xf32>
    %238 = arith.addf %236, %237 : vector<16x32xf32>
    %cst_72 = arith.constant dense<0.000000e+00> : vector<16x128xf32>
    %239 = tpu.matmul %238, %169, %cst_72 {dimension_numbers = #tpu.dot_dimension_numbers<[1], [0], [0], [1], [0, 0, 1, 1], [], []>} : vector<16x32xf32>, vector<32x128xf32>, vector<16x128xf32> -> vector<16x128xf32>
    %c3_73 = arith.constant 3 : index
    %c0_74 = arith.constant 0 : index
    %240 = vector.load %arg4[%c3_73, %c0_74] : memref<10x128xf32, #tpu.memory_space<vmem>>, vector<1x128xf32>
    %241 = vector.broadcast %240 : vector<1x128xf32> to vector<16x128xf32>
    %242 = arith.addf %239, %241 : vector<16x128xf32>
    %243 = arith.mulf %242, %242 : vector<16x128xf32>
    %244 = arith.mulf %242, %243 : vector<16x128xf32>
    %cst_75 = arith.constant 4.471500e-02 : f32
    %245 = vector.broadcast %cst_75 : f32 to vector<16x128xf32>
    %246 = arith.mulf %245, %244 : vector<16x128xf32>
    %247 = arith.addf %242, %246 : vector<16x128xf32>
    %cst_76 = arith.constant 0.797884583 : f32
    %248 = vector.broadcast %cst_76 : f32 to vector<16x128xf32>
    %249 = arith.mulf %248, %247 : vector<16x128xf32>
    %250 = math.tanh %249 : vector<16x128xf32>
    %cst_77 = arith.constant 1.000000e+00 : f32
    %251 = vector.broadcast %cst_77 : f32 to vector<16x128xf32>
    %252 = arith.addf %251, %250 : vector<16x128xf32>
    %cst_78 = arith.constant 5.000000e-01 : f32
    %253 = vector.broadcast %cst_78 : f32 to vector<16x128xf32>
    %254 = arith.mulf %253, %252 : vector<16x128xf32>
    %255 = arith.mulf %242, %254 : vector<16x128xf32>
    %c1_79 = arith.constant 1 : index
    %c0_80 = arith.constant 0 : index
    %c0_81 = arith.constant 0 : index
    %256 = vector.load %arg6[%c1_79, %c0_80, %c0_81] : memref<2x128x32xf32, #tpu.memory_space<vmem>>, vector<1x128x32xf32>
    %257 = vector.shape_cast %256 : vector<1x128x32xf32> to vector<128x32xf32>
    %cst_82 = arith.constant dense<0.000000e+00> : vector<16x32xf32>
    %258 = tpu.matmul %255, %257, %cst_82 {dimension_numbers = #tpu.dot_dimension_numbers<[1], [0], [0], [1], [0, 0, 1, 1], [], []>} : vector<16x128xf32>, vector<128x32xf32>, vector<16x32xf32> -> vector<16x32xf32>
    %c11 = arith.constant 11 : index
    %c0_83 = arith.constant 0 : index
    %259 = vector.load %arg3[%c11, %c0_83] : memref<96x32xf32, #tpu.memory_space<vmem>>, vector<1x32xf32>
    %260 = vector.broadcast %259 : vector<1x32xf32> to vector<16x32xf32>
    %261 = arith.addf %258, %260 : vector<16x32xf32>
    %262 = arith.addf %238, %261 : vector<16x32xf32>
    %c12 = arith.constant 12 : index
    %c0_84 = arith.constant 0 : index
    %263 = vector.load %arg3[%c12, %c0_84] : memref<96x32xf32, #tpu.memory_space<vmem>>, vector<1x32xf32>
    %c13 = arith.constant 13 : index
    %c0_85 = arith.constant 0 : index
    %264 = vector.load %arg3[%c13, %c0_85] : memref<96x32xf32, #tpu.memory_space<vmem>>, vector<1x32xf32>
    %cst_86 = arith.constant dense<0.000000e+00> : vector<16xf32>
    %265 = vector.multi_reduction <add>, %262, %cst_86 [1] : vector<16x32xf32> to vector<16xf32>
    %266 = vector.shape_cast %265 : vector<16xf32> to vector<16x1xf32>
    %cst_87 = arith.constant 3.200000e+01 : f32
    %267 = vector.broadcast %cst_87 : f32 to vector<16x1xf32>
    %268 = arith.divf %266, %267 : vector<16x1xf32>
    %269 = vector.broadcast %268 : vector<16x1xf32> to vector<16x32xf32>
    %270 = arith.subf %262, %269 : vector<16x32xf32>
    %271 = arith.mulf %270, %270 : vector<16x32xf32>
    %cst_88 = arith.constant dense<0.000000e+00> : vector<16xf32>
    %272 = vector.multi_reduction <add>, %271, %cst_88 [1] : vector<16x32xf32> to vector<16xf32>
    %273 = vector.shape_cast %272 : vector<16xf32> to vector<16x1xf32>
    %cst_89 = arith.constant 3.200000e+01 : f32
    %274 = vector.broadcast %cst_89 : f32 to vector<16x1xf32>
    %275 = arith.divf %273, %274 : vector<16x1xf32>
    %276 = vector.broadcast %268 : vector<16x1xf32> to vector<16x32xf32>
    %277 = arith.subf %262, %276 : vector<16x32xf32>
    %cst_90 = arith.constant 9.99999996E-13 : f32
    %278 = vector.broadcast %cst_90 : f32 to vector<16x1xf32>
    %279 = arith.addf %275, %278 : vector<16x1xf32>
    %280 = math.rsqrt %279 : vector<16x1xf32>
    %281 = vector.broadcast %280 : vector<16x1xf32> to vector<16x32xf32>
    %282 = arith.mulf %277, %281 : vector<16x32xf32>
    %283 = vector.broadcast %263 : vector<1x32xf32> to vector<16x32xf32>
    %284 = arith.mulf %282, %283 : vector<16x32xf32>
    %285 = vector.broadcast %264 : vector<1x32xf32> to vector<16x32xf32>
    %286 = arith.addf %284, %285 : vector<16x32xf32>
    %287 = vector.shape_cast %286 : vector<16x32xf32> to vector<2x8x32xf32>
    %288 = vector.extract_strided_slice %287 {offsets = [0, 0, 0], sizes = [2, 1, 32], strides = [1, 1, 1]} : vector<2x8x32xf32> to vector<2x1x32xf32>
    %289 = vector.shape_cast %288 : vector<2x1x32xf32> to vector<2x32xf32>
    %c0_91 = arith.constant 0 : index
    %c0_92 = arith.constant 0 : index
    %290 = vector.load %arg7[%c0_91, %c0_92] : memref<32x80xf32, #tpu.memory_space<vmem>>, vector<32x32xf32>
    %cst_93 = arith.constant dense<0.000000e+00> : vector<2x32xf32>
    %291 = tpu.matmul %289, %290, %cst_93 {dimension_numbers = #tpu.dot_dimension_numbers<[1], [0], [0], [1], [0, 0, 1, 1], [], []>} : vector<2x32xf32>, vector<32x32xf32>, vector<2x32xf32> -> vector<2x32xf32>
    %c14 = arith.constant 14 : index
    %c0_94 = arith.constant 0 : index
    %292 = vector.load %arg3[%c14, %c0_94] : memref<96x32xf32, #tpu.memory_space<vmem>>, vector<1x32xf32>
    %293 = vector.broadcast %292 : vector<1x32xf32> to vector<2x32xf32>
    %294 = arith.addf %291, %293 : vector<2x32xf32>
    %295 = math.tanh %294 : vector<2x32xf32>
    %c0_95 = arith.constant 0 : index
    %c32_96 = arith.constant 32 : index
    %296 = vector.load %arg7[%c0_95, %c32_96] : memref<32x80xf32, #tpu.memory_space<vmem>>, vector<32x32xf32>
    %cst_97 = arith.constant dense<0.000000e+00> : vector<2x32xf32>
    %297 = tpu.matmul %295, %296, %cst_97 {dimension_numbers = #tpu.dot_dimension_numbers<[1], [0], [0], [1], [0, 0, 1, 1], [], []>} : vector<2x32xf32>, vector<32x32xf32>, vector<2x32xf32> -> vector<2x32xf32>
    %c15 = arith.constant 15 : index
    %c0_98 = arith.constant 0 : index
    %298 = vector.load %arg3[%c15, %c0_98] : memref<96x32xf32, #tpu.memory_space<vmem>>, vector<1x32xf32>
    %299 = vector.broadcast %298 : vector<1x32xf32> to vector<2x32xf32>
    %300 = arith.addf %297, %299 : vector<2x32xf32>
    %c18 = arith.constant 18 : index
    %c0_99 = arith.constant 0 : index
    %301 = vector.load %arg3[%c18, %c0_99] : memref<96x32xf32, #tpu.memory_space<vmem>>, vector<1x32xf32>
    %302 = vector.broadcast %301 : vector<1x32xf32> to vector<2x32xf32>
    %303 = arith.subf %300, %302 : vector<2x32xf32>
    %c19 = arith.constant 19 : index
    %c0_100 = arith.constant 0 : index
    %304 = vector.load %arg3[%c19, %c0_100] : memref<96x32xf32, #tpu.memory_space<vmem>>, vector<1x32xf32>
    %cst_101 = arith.constant 9.99999974E-6 : f32
    %305 = vector.broadcast %cst_101 : f32 to vector<1x32xf32>
    %306 = arith.addf %304, %305 : vector<1x32xf32>
    %307 = math.rsqrt %306 : vector<1x32xf32>
    %308 = vector.broadcast %307 : vector<1x32xf32> to vector<2x32xf32>
    %309 = arith.mulf %303, %308 : vector<2x32xf32>
    %c16 = arith.constant 16 : index
    %c0_102 = arith.constant 0 : index
    %310 = vector.load %arg3[%c16, %c0_102] : memref<96x32xf32, #tpu.memory_space<vmem>>, vector<1x32xf32>
    %311 = vector.broadcast %310 : vector<1x32xf32> to vector<2x32xf32>
    %312 = arith.mulf %309, %311 : vector<2x32xf32>
    %c17 = arith.constant 17 : index
    %c0_103 = arith.constant 0 : index
    %313 = vector.load %arg3[%c17, %c0_103] : memref<96x32xf32, #tpu.memory_space<vmem>>, vector<1x32xf32>
    %314 = vector.broadcast %313 : vector<1x32xf32> to vector<2x32xf32>
    %315 = arith.addf %312, %314 : vector<2x32xf32>
    %cst_104 = arith.constant 0.000000e+00 : f32
    %316 = vector.broadcast %cst_104 : f32 to vector<2x32xf32>
    %317 = arith.maximumf %315, %316 : vector<2x32xf32>
    %c0_105 = arith.constant 0 : index
    %c64 = arith.constant 64 : index
    %318 = vector.load %arg7[%c0_105, %c64] : memref<32x80xf32, #tpu.memory_space<vmem>>, vector<32x16xf32>
    %cst_106 = arith.constant dense<0.000000e+00> : vector<2x16xf32>
    %319 = tpu.matmul %317, %318, %cst_106 {dimension_numbers = #tpu.dot_dimension_numbers<[1], [0], [0], [1], [0, 0, 1, 1], [], []>} : vector<2x32xf32>, vector<32x16xf32>, vector<2x16xf32> -> vector<2x16xf32>
    %c4_107 = arith.constant 4 : index
    %c0_108 = arith.constant 0 : index
    %320 = vector.load %arg4[%c4_107, %c0_108] : memref<10x128xf32, #tpu.memory_space<vmem>>, vector<1x16xf32>
    %321 = vector.broadcast %320 : vector<1x16xf32> to vector<2x16xf32>
    %322 = arith.addf %319, %321 : vector<2x16xf32>
    %c7_109 = arith.constant 7 : index
    %c0_110 = arith.constant 0 : index
    %323 = vector.load %arg4[%c7_109, %c0_110] : memref<10x128xf32, #tpu.memory_space<vmem>>, vector<1x16xf32>
    %324 = vector.broadcast %323 : vector<1x16xf32> to vector<2x16xf32>
    %325 = arith.subf %322, %324 : vector<2x16xf32>
    %c8_111 = arith.constant 8 : index
    %c0_112 = arith.constant 0 : index
    %326 = vector.load %arg4[%c8_111, %c0_112] : memref<10x128xf32, #tpu.memory_space<vmem>>, vector<1x16xf32>
    %cst_113 = arith.constant 9.99999974E-6 : f32
    %327 = vector.broadcast %cst_113 : f32 to vector<1x16xf32>
    %328 = arith.addf %326, %327 : vector<1x16xf32>
    %329 = math.rsqrt %328 : vector<1x16xf32>
    %330 = vector.broadcast %329 : vector<1x16xf32> to vector<2x16xf32>
    %331 = arith.mulf %325, %330 : vector<2x16xf32>
    %c5_114 = arith.constant 5 : index
    %c0_115 = arith.constant 0 : index
    %332 = vector.load %arg4[%c5_114, %c0_115] : memref<10x128xf32, #tpu.memory_space<vmem>>, vector<1x16xf32>
    %333 = vector.broadcast %332 : vector<1x16xf32> to vector<2x16xf32>
    %334 = arith.mulf %331, %333 : vector<2x16xf32>
    %c6_116 = arith.constant 6 : index
    %c0_117 = arith.constant 0 : index
    %335 = vector.load %arg4[%c6_116, %c0_117] : memref<10x128xf32, #tpu.memory_space<vmem>>, vector<1x16xf32>
    %336 = vector.broadcast %335 : vector<1x16xf32> to vector<2x16xf32>
    %337 = arith.addf %334, %336 : vector<2x16xf32>
    %cst_118 = arith.constant 0.000000e+00 : f32
    %338 = vector.broadcast %cst_118 : f32 to vector<2x16xf32>
    %339 = arith.maximumf %337, %338 : vector<2x16xf32>
    %c0_119 = arith.constant 0 : index
    %c0_120 = arith.constant 0 : index
    %340 = vector.load %arg8[%c0_119, %c0_120] : memref<16x128xf32, #tpu.memory_space<vmem>>, vector<16x128xf32>
    %cst_121 = arith.constant dense<0.000000e+00> : vector<2x128xf32>
    %341 = tpu.matmul %339, %340, %cst_121 {dimension_numbers = #tpu.dot_dimension_numbers<[1], [0], [0], [1], [0, 0, 1, 1], [], []>} : vector<2x16xf32>, vector<16x128xf32>, vector<2x128xf32> -> vector<2x128xf32>
    %c9_122 = arith.constant 9 : index
    %c0_123 = arith.constant 0 : index
    %342 = vector.load %arg4[%c9_122, %c0_123] : memref<10x128xf32, #tpu.memory_space<vmem>>, vector<1x128xf32>
    %343 = vector.broadcast %342 : vector<1x128xf32> to vector<2x128xf32>
    %344 = arith.addf %341, %343 : vector<2x128xf32>
    %c0_124 = arith.constant 0 : index
    %c0_125 = arith.constant 0 : index
    %345 = vector.load %arg9[%c0_124, %c0_125] : memref<2x128xf32, #tpu.memory_space<vmem>>, vector<2x128xf32>
    tpu.vector_store %arg9[%c0_124, %c0_125], %344 {strides = array<i32>} : memref<2x128xf32, #tpu.memory_space<vmem>>, vector<2x128xf32>,
    return
  }
  func.func @transform_0(%arg0: i32) -> (i32, i32) {
    %c0_i32 = arith.constant 0 : i32
    %c0_i32_0 = arith.constant 0 : i32
    %c0_i32_1 = arith.constant 0 : i32
    return %c0_i32, %c0_i32_0 : i32, i32
  }
  func.func @transform_1(%arg0: i32) -> (i32, i32) {
    %c0_i32 = arith.constant 0 : i32
    %c0_i32_0 = arith.constant 0 : i32
    %c0_i32_1 = arith.constant 0 : i32
    return %c0_i32, %c0_i32_0 : i32, i32
  }
  func.func @transform_2(%arg0: i32) -> (i32, i32) {
    %c0_i32 = arith.constant 0 : i32
    %c0_i32_0 = arith.constant 0 : i32
    %c0_i32_1 = arith.constant 0 : i32
    return %c0_i32, %c0_i32_0 : i32, i32
  }
  func.func @transform_3(%arg0: i32) -> (i32, i32) {
    %c0_i32 = arith.constant 0 : i32
    %c0_i32_0 = arith.constant 0 : i32
    %c0_i32_1 = arith.constant 0 : i32
    return %c0_i32, %c0_i32_0 : i32, i32
  }
  func.func @transform_4(%arg0: i32) -> (i32, i32, i32) {
    %c0_i32 = arith.constant 0 : i32
    %c0_i32_0 = arith.constant 0 : i32
    %c0_i32_1 = arith.constant 0 : i32
    %c0_i32_2 = arith.constant 0 : i32
    return %c0_i32, %c0_i32_0, %c0_i32_1 : i32, i32, i32
  }
  func.func @transform_5(%arg0: i32) -> (i32, i32, i32) {
    %c0_i32 = arith.constant 0 : i32
    %c0_i32_0 = arith.constant 0 : i32
    %c0_i32_1 = arith.constant 0 : i32
    %c0_i32_2 = arith.constant 0 : i32
    return %c0_i32, %c0_i32_0, %c0_i32_1 : i32, i32, i32
  }
  func.func @transform_6(%arg0: i32) -> (i32, i32) {
    %c0_i32 = arith.constant 0 : i32
    %c0_i32_0 = arith.constant 0 : i32
    %c0_i32_1 = arith.constant 0 : i32
    return %c0_i32, %c0_i32_0 : i32, i32
  }
  func.func @transform_7(%arg0: i32) -> (i32, i32) {
    %c0_i32 = arith.constant 0 : i32
    %c0_i32_0 = arith.constant 0 : i32
    %c0_i32_1 = arith.constant 0 : i32
    return %c0_i32, %c0_i32_0 : i32, i32
  }
  func.func @transform_8(%arg0: i32) -> (i32, i32) {
    %c0_i32 = arith.constant 0 : i32
    %c0_i32_0 = arith.constant 0 : i32
    %c0_i32_1 = arith.constant 0 : i32
    return %c0_i32, %c0_i32_0 : i32, i32
  }
}

</mosaic_0001>

<llo_original>
// kernel: bert_review_classifier_forward.1
$region0: #{bert_review_classifier_forward.1}
  #allocation0 [shape = 'u32[]', space=smem, size = 0x4, offset = 0x4, fixed_abs, tag = 'smem constant byte address 0x4 - core index']
  #allocation1 [shape = 'u32[144,128]{1,0:T(1,128)}', space=vmem, size = 0x12000, scoped, tag = 'internal scratch']
  %s0 = inlined_call_operand.vmem [shape: s32[16,1], index: 0, kind: input, shape index: {}]
  %s1 = inlined_call_operand.vmem [shape: s32[2,8], index: 1, kind: input, shape index: {}]
  %s2 = inlined_call_operand.vmem [shape: f32[96,32], index: 2, kind: input, shape index: {}]
  %s3 = inlined_call_operand.vmem [shape: f32[10,128], index: 3, kind: input, shape index: {}]
  %s4 = inlined_call_operand.vmem [shape: f32[2,32,256], index: 4, kind: input, shape index: {}]
  %s5 = inlined_call_operand.vmem [shape: f32[2,128,32], index: 5, kind: input, shape index: {}]
  %s6 = inlined_call_operand.vmem [shape: f32[32,80], index: 6, kind: input, shape index: {}]
  %s7 = inlined_call_operand.vmem [shape: f32[16,128], index: 7, kind: input, shape index: {}]
  %s8 = inlined_call_operand.hbm [shape: f32[2,128], index: 8, kind: output, shape index: {}]
  %s9 = sld [smem:[#allocation0]]
  $region42: #{bert_review_classifier_forward.1} parent=0
    _
  %s11 = ssub.s32 1, %s9
  %s12 = scalar_select 0, %s11, %s9
  $region1: #{bert_review_classifier_forward.1} parent=0
    #allocation2 [shape = 'u8[1024]{0}', space=vmem, size = 0x400, scoped, tag = 'output window, operand 0, single buffered']
    #allocation3 [shape = 's32[1]{0}', space=sflag, size = 0x4, scoped, tag = 'scoped memory for bert_review_classifier_forward.1']
    %13 = vsyncpa [#allocation3], 0
    // Predicated region
    $region2: #{bert_review_classifier_forward.1} parent=1 // pred_check
      _
    $region3: #{bert_review_classifier_forward.1} parent=1 // pred_check_branch
      %15 = sbr.rel (0) target = $region5
    $region4: #{bert_review_classifier_forward.1} parent=1 // pred_region
      _
    $region5: #{bert_review_classifier_forward.1} parent=1 // pred_fallthru
      _
    // Predicated region
    $region6: #{bert_review_classifier_forward.1} parent=1 // pred_check
      _
    $region7: #{bert_review_classifier_forward.1} parent=1 // pred_check_branch
      %17 = sbr.rel (0) target = $region9
    $region8: #{bert_review_classifier_forward.1} parent=1 // pred_region
      _
    $region9: #{bert_review_classifier_forward.1} parent=1 // pred_fallthru
      _
    // Predicated region
    $region10: #{bert_review_classifier_forward.1} parent=1 // pred_check
      _
    $region11: #{bert_review_classifier_forward.1} parent=1 // pred_check_branch
      %19 = sbr.rel (0) target = $region13
    $region12: #{bert_review_classifier_forward.1} parent=1 // pred_region
      _
    $region13: #{bert_review_classifier_forward.1} parent=1 // pred_fallthru
      _
    // Predicated region
    $region14: #{bert_review_classifier_forward.1} parent=1 // pred_check
      _
    $region15: #{bert_review_classifier_forward.1} parent=1 // pred_check_branch
      %21 = sbr.rel (0) target = $region17
    $region16: #{bert_review_classifier_forward.1} parent=1 // pred_region
      _
    $region17: #{bert_review_classifier_forward.1} parent=1 // pred_fallthru
      _
    // Predicated region
    $region18: #{bert_review_classifier_forward.1} parent=1 // pred_check
      _
    $region19: #{bert_review_classifier_forward.1} parent=1 // pred_check_branch
      %23 = sbr.rel (0) target = $region21
    $region20: #{bert_review_classifier_forward.1} parent=1 // pred_region
      _
    $region21: #{bert_review_classifier_forward.1} parent=1 // pred_fallthru
      _
    // Predicated region
    $region22: #{bert_review_classifier_forward.1} parent=1 // pred_check
      _
    $region23: #{bert_review_classifier_forward.1} parent=1 // pred_check_branch
      %25 = sbr.rel (0) target = $region25
    $region24: #{bert_review_classifier_forward.1} parent=1 // pred_region
      _
    $region25: #{bert_review_classifier_forward.1} parent=1 // pred_fallthru
      _
    // Predicated region
    $region26: #{bert_review_classifier_forward.1} parent=1 // pred_check
      _
    $region27: #{bert_review_classifier_forward.1} parent=1 // pred_check_branch
      %27 = sbr.rel (0) target = $region29
    $region28: #{bert_review_classifier_forward.1} parent=1 // pred_region
      _
    $region29: #{bert_review_classifier_forward.1} parent=1 // pred_fallthru
      _
    // Predicated region
    $region30: #{bert_review_classifier_forward.1} parent=1 // pred_check
      _
    $region31: #{bert_review_classifier_forward.1} parent=1 // pred_check_branch
      %29 = sbr.rel (0) target = $region33
    $region32: #{bert_review_classifier_forward.1} parent=1 // pred_region
      _
    $region33: #{bert_review_classifier_forward.1} parent=1 // pred_fallthru
      _
    %v30 = vld [vmem:[%s0] sm:$0xff]
    %v31 = vld [vmem:[%s0 + $0x8] sm:$0xff]
    %v32 = vlaneseq
    %v33 = vand.u32 %v32, 127
    %34 = vset.pattern.permute.xlu0 0
    %35 = vperm.xlu0 %34, %v30
    %v36 = vpop.permute.xlu0 %35
    %37 = vset.pattern.permute.xlu0 0
    %38 = vperm.xlu0 %37, %v31
    %v39 = vpop.permute.xlu0 %38
    %vm40 = vcmp.eq.s32.totalorder %v36, %v33
    %vm41 = vcmp.eq.s32.totalorder %v39, %v33
    %v42 = vsel %vm40, 1, 0
    %v43 = vsel %vm41, 1, 0
    %v44 = vcvt.s32.f32 %v42
    %v45 = vcvt.s32.f32 %v43
    %v46 = vld [vmem:[%s2 + $0x20] sm:$0xff]
    %v47 = vld [vmem:[%s2 + $0x28] sm:$0xff]
    %v48 = vld [vmem:[%s2 + $0x30] sm:$0xff]
    %v49 = vld [vmem:[%s2 + $0x38] sm:$0xff]
    %v50 = vld [vmem:[%s2 + $0x40] sm:$0xff]
    %v51 = vld [vmem:[%s2 + $0x48] sm:$0xff]
    %v52 = vld [vmem:[%s2 + $0x50] sm:$0xff]
    %v53 = vld [vmem:[%s2 + $0x58] sm:$0xff]
    %v54 = vld [vmem:[%s2 + $0x18] sm:$0xff]
    %vm55 = vcmask 523264
    %v57 = vsel %vm55, %v44, 0
    %v60 = vsel %vm55, %v45, 0
    %62 = vmatprep.subr.mxu0 0.0
    %63 = vmatpush1.msra.mxu0 %v46
    %64 = vmatprep.subr.mxu0 0.0
    %65 = vmatpush1.msra.mxu0 %v47
    %66 = vmatprep.subr.mxu0 0.0
    %67 = vmatpush1.msra.mxu0 %v48
    %68 = vmatprep.subr.mxu0 0.0
    %69 = vmatpush1.msra.mxu0 %v49
    %70 = vmatprep.subr.mxu0 0.0
    %71 = vmatpush1.msra.mxu0 %v50
    %72 = vmatprep.subr.mxu0 0.0
    %73 = vmatpush1.msra.mxu0 %v51
    %74 = vmatprep.subr.mxu0 0.0
    %75 = vmatpush1.msra.mxu0 %v52
    %76 = vmatprep.subr.mxu0 0.0
    %77 = vmatpush1.msra.mxu0 %v53
    %78 = vmatprep.subr.mxu0 0.0
    %79 = vmatpush1.msra.mxu0 0.0
    %80 = vmatprep.subr.mxu0 0.0
    %81 = vmatpush1.msra.mxu0 0.0
    %82 = vmatprep.subr.mxu0 0.0
    %83 = vmatpush1.msra.mxu0 0.0
    %84 = vmatprep.subr.mxu0 0.0
    %85 = vmatpush1.msra.mxu0 0.0
    %86 = vmatprep.subr.mxu0 0.0
    %87 = vmatpush1.msra.mxu0 0.0
    %88 = vmatprep.subr.mxu0 0.0
    %89 = vmatpush1.msra.mxu0 0.0
    %90 = vmatprep.subr.mxu0 0.0
    %91 = vmatpush1.msra.mxu0 0.0
    %92 = vmatprep.subr.mxu0 0.0
    %93 = vmatpush1.msra.mxu0 0.0
    %94 = vmatprep.subr.mxu0 0.0
    %95 = vmatpush1.msra.mxu0 0.0
    %96 = vmatprep.subr.mxu0 0.0
    %97 = vmatpush1.msra.mxu0 0.0
    %98 = vmatprep.subr.mxu0 0.0
    %99 = vmatpush1.msra.mxu0 0.0
    %100 = vmatprep.subr.mxu0 0.0
    %101 = vmatpush1.msra.mxu0 0.0
    %102 = vmatprep.subr.mxu0 0.0
    %103 = vmatpush1.msra.mxu0 0.0
    %104 = vmatprep.subr.mxu0 0.0
    %105 = vmatpush1.msra.mxu0 0.0
    %106 = vmatprep.subr.mxu0 0.0
    %107 = vmatpush1.msra.mxu0 0.0
    %108 = vmatprep.subr.mxu0 0.0
    %109 = vmatpush1.msra.mxu0 0.0
    %110 = vmatprep.subr.mxu0 0.0
    %111 = vmatpush1.msra.mxu0 0.0
    %112 = vmatprep.subr.mxu0 0.0
    %113 = vmatpush1.msra.mxu0 0.0
    %114 = vmatprep.subr.mxu0 0.0
    %115 = vmatpush1.msra.mxu0 0.0
    %116 = vmatprep.subr.mxu0 0.0
    %117 = vmatpush1.msra.mxu0 0.0
    %118 = vmatprep.subr.mxu0 0.0
    %119 = vmatpush1.msra.mxu0 0.0
    %120 = vmatprep.subr.mxu0 0.0
    %121 = vmatpush1.msra.mxu0 0.0
    %122 = vmatprep.subr.mxu0 0.0
    %123 = vmatpush1.msra.mxu0 0.0
    %124 = vmatprep.subr.mxu0 0.0
    %125 = vmatpush1.msra.mxu0 0.0
    %126 = vmatprep.mubr.f32.mxu0 0.0
    %127 = vmatmul.mubr.f32.gmra.mrb[0].mxu0 %v57
    %v128 = vpop.f32.mrb[0].mxu0
    %v129 = vadd.f32 %v54, %v128
    %v130 = vpop.f32.mrb[0].mxu0
    %131 = vmatprep.mubr.f32.mxu0 0.0
    %132 = vmatmul.mubr.f32.gmra.mrb[0].mxu0 %v60
    %v133 = vpop.f32.mrb[0].mxu0
    %v134 = vadd.f32 %v54, %v133
    %v135 = vpop.f32.mrb[0].mxu0
    %136 = vdwg.mxu0
    %v137 = vld [vmem:[%s2] sm:$0x1]
    %v138 = vld [vmem:[%s2 + $0x1] sm:$0x1]
    %vm139 = vcmask 261120
    %v140 = vsel %vm139, %v129, 0.0
    %141 = vadd.xlane.f32.xlu0 %v140
    %v142 = vpop.xlane.xlu0 %141
    %v143 = vsel %vm139, %v134, 0.0
    %144 = vadd.xlane.f32.xlu0 %v143
    %v145 = vpop.xlane.xlu0 %144
    %v146 = vrcp.pop 32.0
    %v147 = vmul.f32 %v142, %v146
    %v148 = vmul.f32 %v145, %v146
    %v149 = vsub.f32 %v129, %v147
    %v150 = vsub.f32 %v134, %v148
    %v151 = vmul.f32 %v149, %v149
    %v152 = vmul.f32 %v150, %v150
    %v153 = vsel %vm139, %v151, 0.0
    %154 = vadd.xlane.f32.xlu0 %v153
    %v155 = vpop.xlane.xlu0 %154
    %v156 = vsel %vm139, %v152, 0.0
    %157 = vadd.xlane.f32.xlu0 %v156
    %v158 = vpop.xlane.xlu0 %157
    %v159 = vmul.f32 %v155, %v146
    %v160 = vmul.f32 %v158, %v146
    %v161 = vadd.f32 %v159, 1e-12
    %v162 = vadd.f32 %v160, 1e-12
    %v163 = vrsqrt.pop %v161
    %v164 = vrsqrt.pop %v162
    %v165 = vmul.f32 %v149, %v163
    %v166 = vmul.f32 %v150, %v164
    %v167 = vlaneseq
    %v168 = vshrl.u32 %v167, 7
    %v169 = vsub.s32 0, %v168
    %v170 = vrot.slane %v137, %v169
    %v171 = vmul.f32 %v165, %v170
    %v172 = vmul.f32 %v166, %v170
    %v173 = vlaneseq
    %v174 = vshrl.u32 %v173, 7
    %v175 = vsub.s32 0, %v174
    %v176 = vrot.slane %v138, %v175
    %v177 = vadd.f32 %v171, %v176
    %v178 = vadd.f32 %v172, %v176
    %v179 = vld [vmem:[%s1] sm:$0x3]
    %v180 = vcvt.s32.f32 %v179
    %v181 = vsub.f32 1.0, %v180
    %v182 = vmul.f32 %v181, -10000.0
    %v184 = vrot.slane %v182, 6
    %v186 = vrot.slane %v182, 4
    %v188 = vrot.slane %v182, 2
    %vm190 = vcmask 1041408
    %v191 = vsel %vm190, %v182, %v184
    %vm192 = vcmask 1043456
    %v193 = vsel %vm192, %v191, %v186
    %vm194 = vcmask 1045504
    %v195 = vsel %vm194, %v193, %v188
    %v197 = vcombine.high %v195, %v195
    %v199 = vunpack.c.l.s4 1966171168
    %v200 = vunpack.c.0.s8 %v199
    %v201 = vlaneseq
    %v202 = vshrl.u32 %v201, 7
    %v203 = vsub.s32 %v200, %v202
    %v204 = vrot.slane %v195, %v203
    %v206 = vunpack.c.l.s4 1966171168
    %v207 = vunpack.c.0.s8 %v206
    %v208 = vlaneseq
    %v209 = vshrl.u32 %v208, 7
    %v210 = vsub.s32 %v207, %v209
    %v211 = vrot.slane %v197, %v210
    %v212 = vcombine.high %v204, %v204
    %v213 = vcombine.high %v211, %v211
    %v215 = vunpack.c.l.s4 1966171168
    %v216 = vunpack.c.0.s8 %v215
    %v217 = vlaneseq
    %v218 = vshrl.u32 %v217, 7
    %v219 = vsub.s32 %v216, %v218
    %v220 = vrot.slane %v204, %v219
    %v222 = vunpack.c.l.s4 1966171168
    %v223 = vunpack.c.0.s8 %v222
    %v224 = vlaneseq
    %v225 = vshrl.u32 %v224, 7
    %v226 = vsub.s32 %v223, %v225
    %v227 = vrot.slane %v211, %v226
    %v229 = vunpack.c.l.s4 1966171168
    %v230 = vunpack.c.0.s8 %v229
    %v231 = vlaneseq
    %v232 = vshrl.u32 %v231, 7
    %v233 = vsub.s32 %v230, %v232
    %v234 = vrot.slane %v212, %v233
    %v236 = vunpack.c.l.s4 1966171168
    %v237 = vunpack.c.0.s8 %v236
    %v238 = vlaneseq
    %v239 = vshrl.u32 %v238, 7
    %v240 = vsub.s32 %v237, %v239
    %v241 = vrot.slane %v213, %v240
    %v242 = vcombine.high %v220, %v220
    %v243 = vcombine.high %v227, %v227
    %v244 = vcombine.high %v234, %v234
    %v245 = vcombine.high %v241, %v241
    %v246 = vld [vmem:[%s4] sm:$0xff]
    %v247 = vld [vmem:[%s4 + $0x8] sm:$0xff]
    %v248 = vld [vmem:[%s4 + $0x10] sm:$0xff]
    %v249 = vld [vmem:[%s4 + $0x18] sm:$0xff]
    %v250 = vld [vmem:[%s4 + $0x20] sm:$0xff]
    %v251 = vld [vmem:[%s4 + $0x28] sm:$0xff]
    %v252 = vld [vmem:[%s4 + $0x30] sm:$0xff]
    %v253 = vld [vmem:[%s4 + $0x38] sm:$0xff]
    %v254 = vld [vmem:[%s3] sm:$0x1]
    %v255 = vlaneseq
    %v256 = vshrl.u32 %v255, 7
    %v257 = vsub.s32 0, %v256
    %v258 = vrot.slane %v254, %v257
    %v260 = vsel %vm139, %v177, 0
    %v263 = vsel %vm139, %v178, 0
    %265 = vmatprep.subr.mxu0 0.0
    %266 = vmatpush1.msra.mxu0 %v246
    %267 = vmatprep.subr.mxu0 0.0
    %268 = vmatpush1.msra.mxu0 %v248
    %269 = vmatprep.subr.mxu0 0.0
    %270 = vmatpush1.msra.mxu0 %v250
    %271 = vmatprep.subr.mxu0 0.0
    %272 = vmatpush1.msra.mxu0 %v252
    %273 = vmatprep.subr.mxu0 0.0
    %274 = vmatpush1.msra.mxu0 0.0
    %275 = vmatprep.subr.mxu0 0.0
    %276 = vmatpush1.msra.mxu0 0.0
    %277 = vmatprep.subr.mxu0 0.0
    %278 = vmatpush1.msra.mxu0 0.0
    %279 = vmatprep.subr.mxu0 0.0
    %280 = vmatpush1.msra.mxu0 0.0
    %281 = vmatprep.subr.mxu0 0.0
    %282 = vmatpush1.msra.mxu0 0.0
    %283 = vmatprep.subr.mxu0 0.0
    %284 = vmatpush1.msra.mxu0 0.0
    %285 = vmatprep.subr.mxu0 0.0
    %286 = vmatpush1.msra.mxu0 0.0
    %287 = vmatprep.subr.mxu0 0.0
    %288 = vmatpush1.msra.mxu0 0.0
    %289 = vmatprep.subr.mxu0 0.0
    %290 = vmatpush1.msra.mxu0 0.0
    %291 = vmatprep.subr.mxu0 0.0
    %292 = vmatpush1.msra.mxu0 0.0
    %293 = vmatprep.subr.mxu0 0.0
    %294 = vmatpush1.msra.mxu0 0.0
    %295 = vmatprep.subr.mxu0 0.0
    %296 = vmatpush1.msra.mxu0 0.0
    %297 = vmatprep.subr.mxu0 0.0
    %298 = vmatpush1.msra.mxu0 0.0
    %299 = vmatprep.subr.mxu0 0.0
    %300 = vmatpush1.msra.mxu0 0.0
    %301 = vmatprep.subr.mxu0 0.0
    %302 = vmatpush1.msra.mxu0 0.0
    %303 = vmatprep.subr.mxu0 0.0
    %304 = vmatpush1.msra.mxu0 0.0
    %305 = vmatprep.subr.mxu0 0.0
    %306 = vmatpush1.msra.mxu0 0.0
    %307 = vmatprep.subr.mxu0 0.0
    %308 = vmatpush1.msra.mxu0 0.0
    %309 = vmatprep.subr.mxu0 0.0
    %310 = vmatpush1.msra.mxu0 0.0
    %311 = vmatprep.subr.mxu0 0.0
    %312 = vmatpush1.msra.mxu0 0.0
    %313 = vmatprep.subr.mxu0 0.0
    %314 = vmatpush1.msra.mxu0 0.0
    %315 = vmatprep.subr.mxu0 0.0
    %316 = vmatpush1.msra.mxu0 0.0
    %317 = vmatprep.subr.mxu0 0.0
    %318 = vmatpush1.msra.mxu0 0.0
    %319 = vmatprep.subr.mxu0 0.0
    %320 = vmatpush1.msra.mxu0 0.0
    %321 = vmatprep.subr.mxu0 0.0
    %322 = vmatpush1.msra.mxu0 0.0
    %323 = vmatprep.subr.mxu0 0.0
    %324 = vmatpush1.msra.mxu0 0.0
    %325 = vmatprep.subr.mxu0 0.0
    %326 = vmatpush1.msra.mxu0 0.0
    %327 = vmatprep.subr.mxu0 0.0
    %328 = vmatpush1.msra.mxu0 0.0
    %329 = vmatprep.mubr.f32.mxu0 0.0
    %330 = vmatmul.mubr.f32.gmra.mrb[0].mxu0 %v260
    %v331 = vpop.f32.mrb[0].mxu0
    %v332 = vadd.f32 %v258, %v331
    %v333 = vpop.f32.mrb[0].mxu0
    %334 = vmatprep.mubr.f32.mxu0 0.0
    %335 = vmatmul.mubr.f32.gmra.mrb[0].mxu0 %v263
    %v336 = vpop.f32.mrb[0].mxu0
    %v337 = vadd.f32 %v258, %v336
    %v338 = vpop.f32.mrb[0].mxu0
    %339 = vdwg.mxu0
    %342 = vrot.lane.b32.xlu0 %v332, 120
    %v343 = vpop.permute.xlu0 %342
    %344 = vrot.lane.b32.xlu0 %v337, 120
    %v345 = vpop.permute.xlu0 %344
    %346 = vrot.lane.b32.xlu0 %v332, 112
    %v347 = vpop.permute.xlu0 %346
    %348 = vrot.lane.b32.xlu0 %v337, 112
    %v349 = vpop.permute.xlu0 %348
    %350 = vrot.lane.b32.xlu0 %v332, 104
    %v351 = vpop.permute.xlu0 %350
    %352 = vrot.lane.b32.xlu0 %v337, 104
    %v353 = vpop.permute.xlu0 %352
    %v354 = vlaneseq
    %v355 = vshrl.u32 %v354, 7
    %v356 = vsub.s32 0, %v355
    %v357 = vrot.slane %v220, %v356
    %v358 = vlaneseq
    %v359 = vshrl.u32 %v358, 7
    %v360 = vsub.s32 0, %v359
    %v361 = vrot.slane %v234, %v360
    %v362 = vlaneseq
    %v363 = vshrl.u32 %v362, 7
    %v364 = vsub.s32 0, %v363
    %v365 = vrot.slane %v242, %v364
    %v366 = vlaneseq
    %v367 = vshrl.u32 %v366, 7
    %v368 = vsub.s32 0, %v367
    %v369 = vrot.slane %v244, %v368
    %v370 = vlaneseq
    %v371 = vshrl.u32 %v370, 7
    %v372 = vsub.s32 0, %v371
    %v373 = vrot.slane %v227, %v372
    %v374 = vlaneseq
    %v375 = vshrl.u32 %v374, 7
    %v376 = vsub.s32 0, %v375
    %v377 = vrot.slane %v241, %v376
    %v378 = vlaneseq
    %v379 = vshrl.u32 %v378, 7
    %v380 = vsub.s32 0, %v379
    %v381 = vrot.slane %v243, %v380
    %v382 = vlaneseq
    %v383 = vshrl.u32 %v382, 7
    %v384 = vsub.s32 0, %v383
    %v385 = vrot.slane %v245, %v384
    %394 = vrot.lane.b32.xlu0 %v332, 96
    %v395 = vpop.permute.xlu0 %394
    %vm396 = vcmask 64512
    %v397 = vsel %vm396, %v332, 0
    %v399 = vsel %vm396, %v395, 0
    %401 = vmatprep.subr.mxu0 0.0
    %402 = vmatpush1.xpose.msra.mxu0 %v399
    %403 = vmatprep.subr.mxu0 0.0
    %404 = vmatpush1.xpose.msra.mxu0 0.0
    %405 = vmatprep.subr.mxu0 0.0
    %406 = vmatpush1.xpose.msra.mxu0 0.0
    %407 = vmatprep.subr.mxu0 0.0
    %408 = vmatpush1.xpose.msra.mxu0 0.0
    %409 = vmatprep.subr.mxu0 0.0
    %410 = vmatpush1.xpose.msra.mxu0 0.0
    %411 = vmatprep.subr.mxu0 0.0
    %412 = vmatpush1.xpose.msra.mxu0 0.0
    %413 = vmatprep.subr.mxu0 0.0
    %414 = vmatpush1.xpose.msra.mxu0 0.0
    %415 = vmatprep.subr.mxu0 0.0
    %416 = vmatpush1.xpose.msra.mxu0 0.0
    %417 = vmatprep.subr.mxu0 0.0
    %418 = vmatpush1.xpose.msra.mxu0 0.0
    %419 = vmatprep.subr.mxu0 0.0
    %420 = vmatpush1.xpose.msra.mxu0 0.0
    %421 = vmatprep.subr.mxu0 0.0
    %422 = vmatpush1.xpose.msra.mxu0 0.0
    %423 = vmatprep.subr.mxu0 0.0
    %424 = vmatpush1.xpose.msra.mxu0 0.0
    %425 = vmatprep.subr.mxu0 0.0
    %426 = vmatpush1.xpose.msra.mxu0 0.0
    %427 = vmatprep.subr.mxu0 0.0
    %428 = vmatpush1.xpose.msra.mxu0 0.0
    %429 = vmatprep.subr.mxu0 0.0
    %430 = vmatpush1.xpose.msra.mxu0 0.0
    %431 = vmatprep.subr.mxu0 0.0
    %432 = vmatpush1.xpose.msra.mxu0 0.0
    %433 = vmatprep.subr.mxu0 0.0
    %434 = vmatpush1.xpose.msra.mxu0 0.0
    %435 = vmatprep.subr.mxu0 0.0
    %436 = vmatpush1.xpose.msra.mxu0 0.0
    %437 = vmatprep.subr.mxu0 0.0
    %438 = vmatpush1.xpose.msra.mxu0 0.0
    %439 = vmatprep.subr.mxu0 0.0
    %440 = vmatpush1.xpose.msra.mxu0 0.0
    %441 = vmatprep.subr.mxu0 0.0
    %442 = vmatpush1.xpose.msra.mxu0 0.0
    %443 = vmatprep.subr.mxu0 0.0
    %444 = vmatpush1.xpose.msra.mxu0 0.0
    %445 = vmatprep.subr.mxu0 0.0
    %446 = vmatpush1.xpose.msra.mxu0 0.0
    %447 = vmatprep.subr.mxu0 0.0
    %448 = vmatpush1.xpose.msra.mxu0 0.0
    %449 = vmatprep.subr.mxu0 0.0
    %450 = vmatpush1.xpose.msra.mxu0 0.0
    %451 = vmatprep.subr.mxu0 0.0
    %452 = vmatpush1.xpose.msra.mxu0 0.0
    %453 = vmatprep.subr.mxu0 0.0
    %454 = vmatpush1.xpose.msra.mxu0 0.0
    %455 = vmatprep.subr.mxu0 0.0
    %456 = vmatpush1.xpose.msra.mxu0 0.0
    %457 = vmatprep.subr.mxu0 0.0
    %458 = vmatpush1.xpose.msra.mxu0 0.0
    %459 = vmatprep.subr.mxu0 0.0
    %460 = vmatpush1.xpose.msra.mxu0 0.0
    %461 = vmatprep.subr.mxu0 0.0
    %462 = vmatpush1.xpose.msra.mxu0 0.0
    %463 = vmatprep.subr.mxu0 0.0
    %464 = vmatpush1.xpose.msra.mxu0 0.0
    %465 = vmatprep.mubr.f32.mxu0 0.0
    %466 = vmatmul.mubr.f32.gmra.mrb[0].mxu0 %v397
    %v467 = vpop.f32.mrb[0].mxu0
    %v468 = vadd.f32 %v357, %v467
    %v469 = vpop.f32.mrb[0].mxu0
    %470 = vdwg.mxu0
    %471 = vrot.lane.b32.xlu0 %v337, 96
    %v472 = vpop.permute.xlu0 %471
    %v473 = vsel %vm396, %v337, 0
    %v475 = vsel %vm396, %v472, 0
    %477 = vmatprep.subr.mxu0 0.0
    %478 = vmatpush1.xpose.msra.mxu0 %v475
    %479 = vmatprep.subr.mxu0 0.0
    %480 = vmatpush1.xpose.msra.mxu0 0.0
    %481 = vmatprep.subr.mxu0 0.0
    %482 = vmatpush1.xpose.msra.mxu0 0.0
    %483 = vmatprep.subr.mxu0 0.0
    %484 = vmatpush1.xpose.msra.mxu0 0.0
    %485 = vmatprep.subr.mxu0 0.0
    %486 = vmatpush1.xpose.msra.mxu0 0.0
    %487 = vmatprep.subr.mxu0 0.0
    %488 = vmatpush1.xpose.msra.mxu0 0.0
    %489 = vmatprep.subr.mxu0 0.0
    %490 = vmatpush1.xpose.msra.mxu0 0.0
    %491 = vmatprep.subr.mxu0 0.0
    %492 = vmatpush1.xpose.msra.mxu0 0.0
    %493 = vmatprep.subr.mxu0 0.0
    %494 = vmatpush1.xpose.msra.mxu0 0.0
    %495 = vmatprep.subr.mxu0 0.0
    %496 = vmatpush1.xpose.msra.mxu0 0.0
    %497 = vmatprep.subr.mxu0 0.0
    %498 = vmatpush1.xpose.msra.mxu0 0.0
    %499 = vmatprep.subr.mxu0 0.0
    %500 = vmatpush1.xpose.msra.mxu0 0.0
    %501 = vmatprep.subr.mxu0 0.0
    %502 = vmatpush1.xpose.msra.mxu0 0.0
    %503 = vmatprep.subr.mxu0 0.0
    %504 = vmatpush1.xpose.msra.mxu0 0.0
    %505 = vmatprep.subr.mxu0 0.0
    %506 = vmatpush1.xpose.msra.mxu0 0.0
    %507 = vmatprep.subr.mxu0 0.0
    %508 = vmatpush1.xpose.msra.mxu0 0.0
    %509 = vmatprep.subr.mxu0 0.0
    %510 = vmatpush1.xpose.msra.mxu0 0.0
    %511 = vmatprep.subr.mxu0 0.0
    %512 = vmatpush1.xpose.msra.mxu0 0.0
    %513 = vmatprep.subr.mxu0 0.0
    %514 = vmatpush1.xpose.msra.mxu0 0.0
    %515 = vmatprep.subr.mxu0 0.0
    %516 = vmatpush1.xpose.msra.mxu0 0.0
    %517 = vmatprep.subr.mxu0 0.0
    %518 = vmatpush1.xpose.msra.mxu0 0.0
    %519 = vmatprep.subr.mxu0 0.0
    %520 = vmatpush1.xpose.msra.mxu0 0.0
    %521 = vmatprep.subr.mxu0 0.0
    %522 = vmatpush1.xpose.msra.mxu0 0.0
    %523 = vmatprep.subr.mxu0 0.0
    %524 = vmatpush1.xpose.msra.mxu0 0.0
    %525 = vmatprep.subr.mxu0 0.0
    %526 = vmatpush1.xpose.msra.mxu0 0.0
    %527 = vmatprep.subr.mxu0 0.0
    %528 = vmatpush1.xpose.msra.mxu0 0.0
    %529 = vmatprep.subr.mxu0 0.0
    %530 = vmatpush1.xpose.msra.mxu0 0.0
    %531 = vmatprep.subr.mxu0 0.0
    %532 = vmatpush1.xpose.msra.mxu0 0.0
    %533 = vmatprep.subr.mxu0 0.0
    %534 = vmatpush1.xpose.msra.mxu0 0.0
    %535 = vmatprep.subr.mxu0 0.0
    %536 = vmatpush1.xpose.msra.mxu0 0.0
    %537 = vmatprep.subr.mxu0 0.0
    %538 = vmatpush1.xpose.msra.mxu0 0.0
    %539 = vmatprep.subr.mxu0 0.0
    %540 = vmatpush1.xpose.msra.mxu0 0.0
    %541 = vmatprep.mubr.f32.mxu0 0.0
    %542 = vmatmul.mubr.f32.gmra.mrb[0].mxu0 %v473
    %v543 = vpop.f32.mrb[0].mxu0
    %v544 = vadd.f32 %v361, %v543
    %v545 = vpop.f32.mrb[0].mxu0
    %546 = vdwg.mxu0
    %547 = vrot.lane.b32.xlu0 %v343, 96
    %v548 = vpop.permute.xlu0 %547
    %v549 = vsel %vm396, %v343, 0
    %v551 = vsel %vm396, %v548, 0
    %553 = vmatprep.subr.mxu0 0.0
    %554 = vmatpush1.xpose.msra.mxu0 %v551
    %555 = vmatprep.subr.mxu0 0.0
    %556 = vmatpush1.xpose.msra.mxu0 0.0
    %557 = vmatprep.subr.mxu0 0.0
    %558 = vmatpush1.xpose.msra.mxu0 0.0
    %559 = vmatprep.subr.mxu0 0.0
    %560 = vmatpush1.xpose.msra.mxu0 0.0
    %561 = vmatprep.subr.mxu0 0.0
    %562 = vmatpush1.xpose.msra.mxu0 0.0
    %563 = vmatprep.subr.mxu0 0.0
    %564 = vmatpush1.xpose.msra.mxu0 0.0
    %565 = vmatprep.subr.mxu0 0.0
    %566 = vmatpush1.xpose.msra.mxu0 0.0
    %567 = vmatprep.subr.mxu0 0.0
    %568 = vmatpush1.xpose.msra.mxu0 0.0
    %569 = vmatprep.subr.mxu0 0.0
    %570 = vmatpush1.xpose.msra.mxu0 0.0
    %571 = vmatprep.subr.mxu0 0.0
    %572 = vmatpush1.xpose.msra.mxu0 0.0
    %573 = vmatprep.subr.mxu0 0.0
    %574 = vmatpush1.xpose.msra.mxu0 0.0
    %575 = vmatprep.subr.mxu0 0.0
    %576 = vmatpush1.xpose.msra.mxu0 0.0
    %577 = vmatprep.subr.mxu0 0.0
    %578 = vmatpush1.xpose.msra.mxu0 0.0
    %579 = vmatprep.subr.mxu0 0.0
    %580 = vmatpush1.xpose.msra.mxu0 0.0
    %581 = vmatprep.subr.mxu0 0.0
    %582 = vmatpush1.xpose.msra.mxu0 0.0
    %583 = vmatprep.subr.mxu0 0.0
    %584 = vmatpush1.xpose.msra.mxu0 0.0
    %585 = vmatprep.subr.mxu0 0.0
    %586 = vmatpush1.xpose.msra.mxu0 0.0
    %587 = vmatprep.subr.mxu0 0.0
    %588 = vmatpush1.xpose.msra.mxu0 0.0
    %589 = vmatprep.subr.mxu0 0.0
    %590 = vmatpush1.xpose.msra.mxu0 0.0
    %591 = vmatprep.subr.mxu0 0.0
    %592 = vmatpush1.xpose.msra.mxu0 0.0
    %593 = vmatprep.subr.mxu0 0.0
    %594 = vmatpush1.xpose.msra.mxu0 0.0
    %595 = vmatprep.subr.mxu0 0.0
    %596 = vmatpush1.xpose.msra.mxu0 0.0
    %597 = vmatprep.subr.mxu0 0.0
    %598 = vmatpush1.xpose.msra.mxu0 0.0
    %599 = vmatprep.subr.mxu0 0.0
    %600 = vmatpush1.xpose.msra.mxu0 0.0
    %601 = vmatprep.subr.mxu0 0.0
    %602 = vmatpush1.xpose.msra.mxu0 0.0
    %603 = vmatprep.subr.mxu0 0.0
    %604 = vmatpush1.xpose.msra.mxu0 0.0
    %605 = vmatprep.subr.mxu0 0.0
    %606 = vmatpush1.xpose.msra.mxu0 0.0
    %607 = vmatprep.subr.mxu0 0.0
    %608 = vmatpush1.xpose.msra.mxu0 0.0
    %609 = vmatprep.subr.mxu0 0.0
    %610 = vmatpush1.xpose.msra.mxu0 0.0
    %611 = vmatprep.subr.mxu0 0.0
    %612 = vmatpush1.xpose.msra.mxu0 0.0
    %613 = vmatprep.subr.mxu0 0.0
    %614 = vmatpush1.xpose.msra.mxu0 0.0
    %615 = vmatprep.subr.mxu0 0.0
    %616 = vmatpush1.xpose.msra.mxu0 0.0
    %617 = vmatprep.mubr.f32.mxu0 0.0
    %618 = vmatmul.mubr.f32.gmra.mrb[0].mxu0 %v549
    %v619 = vpop.f32.mrb[0].mxu0
    %v620 = vadd.f32 %v365, %v619
    %v621 = vpop.f32.mrb[0].mxu0
    %622 = vdwg.mxu0
    %623 = vrot.lane.b32.xlu0 %v345, 96
    %v624 = vpop.permute.xlu0 %623
    %v625 = vsel %vm396, %v345, 0
    %v627 = vsel %vm396, %v624, 0
    %629 = vmatprep.subr.mxu0 0.0
    %630 = vmatpush1.xpose.msra.mxu0 %v627
    %631 = vmatprep.subr.mxu0 0.0
    %632 = vmatpush1.xpose.msra.mxu0 0.0
    %633 = vmatprep.subr.mxu0 0.0
    %634 = vmatpush1.xpose.msra.mxu0 0.0
    %635 = vmatprep.subr.mxu0 0.0
    %636 = vmatpush1.xpose.msra.mxu0 0.0
    %637 = vmatprep.subr.mxu0 0.0
    %638 = vmatpush1.xpose.msra.mxu0 0.0
    %639 = vmatprep.subr.mxu0 0.0
    %640 = vmatpush1.xpose.msra.mxu0 0.0
    %641 = vmatprep.subr.mxu0 0.0
    %642 = vmatpush1.xpose.msra.mxu0 0.0
    %643 = vmatprep.subr.mxu0 0.0
    %644 = vmatpush1.xpose.msra.mxu0 0.0
    %645 = vmatprep.subr.mxu0 0.0
    %646 = vmatpush1.xpose.msra.mxu0 0.0
    %647 = vmatprep.subr.mxu0 0.0
    %648 = vmatpush1.xpose.msra.mxu0 0.0
    %649 = vmatprep.subr.mxu0 0.0
    %650 = vmatpush1.xpose.msra.mxu0 0.0
    %651 = vmatprep.subr.mxu0 0.0
    %652 = vmatpush1.xpose.msra.mxu0 0.0
    %653 = vmatprep.subr.mxu0 0.0
    %654 = vmatpush1.xpose.msra.mxu0 0.0
    %655 = vmatprep.subr.mxu0 0.0
    %656 = vmatpush1.xpose.msra.mxu0 0.0
    %657 = vmatprep.subr.mxu0 0.0
    %658 = vmatpush1.xpose.msra.mxu0 0.0
    %659 = vmatprep.subr.mxu0 0.0
    %660 = vmatpush1.xpose.msra.mxu0 0.0
    %661 = vmatprep.subr.mxu0 0.0
    %662 = vmatpush1.xpose.msra.mxu0 0.0
    %663 = vmatprep.subr.mxu0 0.0
    %664 = vmatpush1.xpose.msra.mxu0 0.0
    %665 = vmatprep.subr.mxu0 0.0
    %666 = vmatpush1.xpose.msra.mxu0 0.0
    %667 = vmatprep.subr.mxu0 0.0
    %668 = vmatpush1.xpose.msra.mxu0 0.0
    %669 = vmatprep.subr.mxu0 0.0
    %670 = vmatpush1.xpose.msra.mxu0 0.0
    %671 = vmatprep.subr.mxu0 0.0
    %672 = vmatpush1.xpose.msra.mxu0 0.0
    %673 = vmatprep.subr.mxu0 0.0
    %674 = vmatpush1.xpose.msra.mxu0 0.0
    %675 = vmatprep.subr.mxu0 0.0
    %676 = vmatpush1.xpose.msra.mxu0 0.0
    %677 = vmatprep.subr.mxu0 0.0
    %678 = vmatpush1.xpose.msra.mxu0 0.0
    %679 = vmatprep.subr.mxu0 0.0
    %680 = vmatpush1.xpose.msra.mxu0 0.0
    %681 = vmatprep.subr.mxu0 0.0
    %682 = vmatpush1.xpose.msra.mxu0 0.0
    %683 = vmatprep.subr.mxu0 0.0
    %684 = vmatpush1.xpose.msra.mxu0 0.0
    %685 = vmatprep.subr.mxu0 0.0
    %686 = vmatpush1.xpose.msra.mxu0 0.0
    %687 = vmatprep.subr.mxu0 0.0
    %688 = vmatpush1.xpose.msra.mxu0 0.0
    %689 = vmatprep.subr.mxu0 0.0
    %690 = vmatpush1.xpose.msra.mxu0 0.0
    %691 = vmatprep.subr.mxu0 0.0
    %692 = vmatpush1.xpose.msra.mxu0 0.0
    %693 = vmatprep.mubr.f32.mxu0 0.0
    %694 = vmatmul.mubr.f32.gmra.mrb[0].mxu0 %v625
    %v695 = vpop.f32.mrb[0].mxu0
    %v696 = vadd.f32 %v369, %v695
    %v697 = vpop.f32.mrb[0].mxu0
    %698 = vdwg.mxu0
    %699 = vrot.lane.b32.xlu0 %v347, 96
    %v700 = vpop.permute.xlu0 %699
    %v701 = vsel %vm396, %v347, 0
    %v703 = vsel %vm396, %v700, 0
    %705 = vmatprep.subr.mxu0 0.0
    %706 = vmatpush1.xpose.msra.mxu0 %v703
    %707 = vmatprep.subr.mxu0 0.0
    %708 = vmatpush1.xpose.msra.mxu0 0.0
    %709 = vmatprep.subr.mxu0 0.0
    %710 = vmatpush1.xpose.msra.mxu0 0.0
    %711 = vmatprep.subr.mxu0 0.0
    %712 = vmatpush1.xpose.msra.mxu0 0.0
    %713 = vmatprep.subr.mxu0 0.0
    %714 = vmatpush1.xpose.msra.mxu0 0.0
    %715 = vmatprep.subr.mxu0 0.0
    %716 = vmatpush1.xpose.msra.mxu0 0.0
    %717 = vmatprep.subr.mxu0 0.0
    %718 = vmatpush1.xpose.msra.mxu0 0.0
    %719 = vmatprep.subr.mxu0 0.0
    %720 = vmatpush1.xpose.msra.mxu0 0.0
    %721 = vmatprep.subr.mxu0 0.0
    %722 = vmatpush1.xpose.msra.mxu0 0.0
    %723 = vmatprep.subr.mxu0 0.0
    %724 = vmatpush1.xpose.msra.mxu0 0.0
    %725 = vmatprep.subr.mxu0 0.0
    %726 = vmatpush1.xpose.msra.mxu0 0.0
    %727 = vmatprep.subr.mxu0 0.0
    %728 = vmatpush1.xpose.msra.mxu0 0.0
    %729 = vmatprep.subr.mxu0 0.0
    %730 = vmatpush1.xpose.msra.mxu0 0.0
    %731 = vmatprep.subr.mxu0 0.0
    %732 = vmatpush1.xpose.msra.mxu0 0.0
    %733 = vmatprep.subr.mxu0 0.0
    %734 = vmatpush1.xpose.msra.mxu0 0.0
    %735 = vmatprep.subr.mxu0 0.0
    %736 = vmatpush1.xpose.msra.mxu0 0.0
    %737 = vmatprep.subr.mxu0 0.0
    %738 = vmatpush1.xpose.msra.mxu0 0.0
    %739 = vmatprep.subr.mxu0 0.0
    %740 = vmatpush1.xpose.msra.mxu0 0.0
    %741 = vmatprep.subr.mxu0 0.0
    %742 = vmatpush1.xpose.msra.mxu0 0.0
    %743 = vmatprep.subr.mxu0 0.0
    %744 = vmatpush1.xpose.msra.mxu0 0.0
    %745 = vmatprep.subr.mxu0 0.0
    %746 = vmatpush1.xpose.msra.mxu0 0.0
    %747 = vmatprep.subr.mxu0 0.0
    %748 = vmatpush1.xpose.msra.mxu0 0.0
    %749 = vmatprep.subr.mxu0 0.0
    %750 = vmatpush1.xpose.msra.mxu0 0.0
    %751 = vmatprep.subr.mxu0 0.0
    %752 = vmatpush1.xpose.msra.mxu0 0.0
    %753 = vmatprep.subr.mxu0 0.0
    %754 = vmatpush1.xpose.msra.mxu0 0.0
    %755 = vmatprep.subr.mxu0 0.0
    %756 = vmatpush1.xpose.msra.mxu0 0.0
    %757 = vmatprep.subr.mxu0 0.0
    %758 = vmatpush1.xpose.msra.mxu0 0.0
    %759 = vmatprep.subr.mxu0 0.0
    %760 = vmatpush1.xpose.msra.mxu0 0.0
    %761 = vmatprep.subr.mxu0 0.0
    %762 = vmatpush1.xpose.msra.mxu0 0.0
    %763 = vmatprep.subr.mxu0 0.0
    %764 = vmatpush1.xpose.msra.mxu0 0.0
    %765 = vmatprep.subr.mxu0 0.0
    %766 = vmatpush1.xpose.msra.mxu0 0.0
    %767 = vmatprep.subr.mxu0 0.0
    %768 = vmatpush1.xpose.msra.mxu0 0.0
    %769 = vmatprep.mubr.f32.mxu0 0.0
    %770 = vmatmul.mubr.f32.gmra.mrb[0].mxu0 %v701
    %v771 = vpop.f32.mrb[0].mxu0
    %v772 = vadd.f32 %v373, %v771
    %v773 = vpop.f32.mrb[0].mxu0
    %774 = vdwg.mxu0
    %775 = vrot.lane.b32.xlu0 %v349, 96
    %v776 = vpop.permute.xlu0 %775
    %v777 = vsel %vm396, %v349, 0
    %v779 = vsel %vm396, %v776, 0
    %781 = vmatprep.subr.mxu0 0.0
    %782 = vmatpush1.xpose.msra.mxu0 %v779
    %783 = vmatprep.subr.mxu0 0.0
    %784 = vmatpush1.xpose.msra.mxu0 0.0
    %785 = vmatprep.subr.mxu0 0.0
    %786 = vmatpush1.xpose.msra.mxu0 0.0
    %787 = vmatprep.subr.mxu0 0.0
    %788 = vmatpush1.xpose.msra.mxu0 0.0
    %789 = vmatprep.subr.mxu0 0.0
    %790 = vmatpush1.xpose.msra.mxu0 0.0
    %791 = vmatprep.subr.mxu0 0.0
    %792 = vmatpush1.xpose.msra.mxu0 0.0
    %793 = vmatprep.subr.mxu0 0.0
    %794 = vmatpush1.xpose.msra.mxu0 0.0
    %795 = vmatprep.subr.mxu0 0.0
    %796 = vmatpush1.xpose.msra.mxu0 0.0
    %797 = vmatprep.subr.mxu0 0.0
    %798 = vmatpush1.xpose.msra.mxu0 0.0
    %799 = vmatprep.subr.mxu0 0.0
    %800 = vmatpush1.xpose.msra.mxu0 0.0
    %801 = vmatprep.subr.mxu0 0.0
    %802 = vmatpush1.xpose.msra.mxu0 0.0
    %803 = vmatprep.subr.mxu0 0.0
    %804 = vmatpush1.xpose.msra.mxu0 0.0
    %805 = vmatprep.subr.mxu0 0.0
    %806 = vmatpush1.xpose.msra.mxu0 0.0
    %807 = vmatprep.subr.mxu0 0.0
    %808 = vmatpush1.xpose.msra.mxu0 0.0
    %809 = vmatprep.subr.mxu0 0.0
    %810 = vmatpush1.xpose.msra.mxu0 0.0
    %811 = vmatprep.subr.mxu0 0.0
    %812 = vmatpush1.xpose.msra.mxu0 0.0
    %813 = vmatprep.subr.mxu0 0.0
    %814 = vmatpush1.xpose.msra.mxu0 0.0
    %815 = vmatprep.subr.mxu0 0.0
    %816 = vmatpush1.xpose.msra.mxu0 0.0
    %817 = vmatprep.subr.mxu0 0.0
    %818 = vmatpush1.xpose.msra.mxu0 0.0
    %819 = vmatprep.subr.mxu0 0.0
    %820 = vmatpush1.xpose.msra.mxu0 0.0
    %821 = vmatprep.subr.mxu0 0.0
    %822 = vmatpush1.xpose.msra.mxu0 0.0
    %823 = vmatprep.subr.mxu0 0.0
    %824 = vmatpush1.xpose.msra.mxu0 0.0
    %825 = vmatprep.subr.mxu0 0.0
    %826 = vmatpush1.xpose.msra.mxu0 0.0
    %827 = vmatprep.subr.mxu0 0.0
    %828 = vmatpush1.xpose.msra.mxu0 0.0
    %829 = vmatprep.subr.mxu0 0.0
    %830 = vmatpush1.xpose.msra.mxu0 0.0
    %831 = vmatprep.subr.mxu0 0.0
    %832 = vmatpush1.xpose.msra.mxu0 0.0
    %833 = vmatprep.subr.mxu0 0.0
    %834 = vmatpush1.xpose.msra.mxu0 0.0
    %835 = vmatprep.subr.mxu0 0.0
    %836 = vmatpush1.xpose.msra.mxu0 0.0
    %837 = vmatprep.subr.mxu0 0.0
    %838 = vmatpush1.xpose.msra.mxu0 0.0
    %839 = vmatprep.subr.mxu0 0.0
    %840 = vmatpush1.xpose.msra.mxu0 0.0
    %841 = vmatprep.subr.mxu0 0.0
    %842 = vmatpush1.xpose.msra.mxu0 0.0
    %843 = vmatprep.subr.mxu0 0.0
    %844 = vmatpush1.xpose.msra.mxu0 0.0
    %845 = vmatprep.mubr.f32.mxu0 0.0
    %846 = vmatmul.mubr.f32.gmra.mrb[0].mxu0 %v777
    %v847 = vpop.f32.mrb[0].mxu0
    %v848 = vadd.f32 %v377, %v847
    %v849 = vpop.f32.mrb[0].mxu0
    %850 = vdwg.mxu0
    %851 = vrot.lane.b32.xlu0 %v351, 96
    %v852 = vpop.permute.xlu0 %851
    %v853 = vsel %vm396, %v351, 0
    %v855 = vsel %vm396, %v852, 0
    %857 = vmatprep.subr.mxu0 0.0
    %858 = vmatpush1.xpose.msra.mxu0 %v855
    %859 = vmatprep.subr.mxu0 0.0
    %860 = vmatpush1.xpose.msra.mxu0 0.0
    %861 = vmatprep.subr.mxu0 0.0
    %862 = vmatpush1.xpose.msra.mxu0 0.0
    %863 = vmatprep.subr.mxu0 0.0
    %864 = vmatpush1.xpose.msra.mxu0 0.0
    %865 = vmatprep.subr.mxu0 0.0
    %866 = vmatpush1.xpose.msra.mxu0 0.0
    %867 = vmatprep.subr.mxu0 0.0
    %868 = vmatpush1.xpose.msra.mxu0 0.0
    %869 = vmatprep.subr.mxu0 0.0
    %870 = vmatpush1.xpose.msra.mxu0 0.0
    %871 = vmatprep.subr.mxu0 0.0
    %872 = vmatpush1.xpose.msra.mxu0 0.0
    %873 = vmatprep.subr.mxu0 0.0
    %874 = vmatpush1.xpose.msra.mxu0 0.0
    %875 = vmatprep.subr.mxu0 0.0
    %876 = vmatpush1.xpose.msra.mxu0 0.0
    %877 = vmatprep.subr.mxu0 0.0
    %878 = vmatpush1.xpose.msra.mxu0 0.0
    %879 = vmatprep.subr.mxu0 0.0
    %880 = vmatpush1.xpose.msra.mxu0 0.0
    %881 = vmatprep.subr.mxu0 0.0
    %882 = vmatpush1.xpose.msra.mxu0 0.0
    %883 = vmatprep.subr.mxu0 0.0
    %884 = vmatpush1.xpose.msra.mxu0 0.0
    %885 = vmatprep.subr.mxu0 0.0
    %886 = vmatpush1.xpose.msra.mxu0 0.0
    %887 = vmatprep.subr.mxu0 0.0
    %888 = vmatpush1.xpose.msra.mxu0 0.0
    %889 = vmatprep.subr.mxu0 0.0
    %890 = vmatpush1.xpose.msra.mxu0 0.0
    %891 = vmatprep.subr.mxu0 0.0
    %892 = vmatpush1.xpose.msra.mxu0 0.0
    %893 = vmatprep.subr.mxu0 0.0
    %894 = vmatpush1.xpose.msra.mxu0 0.0
    %895 = vmatprep.subr.mxu0 0.0
    %896 = vmatpush1.xpose.msra.mxu0 0.0
    %897 = vmatprep.subr.mxu0 0.0
    %898 = vmatpush1.xpose.msra.mxu0 0.0
    %899 = vmatprep.subr.mxu0 0.0
    %900 = vmatpush1.xpose.msra.mxu0 0.0
    %901 = vmatprep.subr.mxu0 0.0
    %902 = vmatpush1.xpose.msra.mxu0 0.0
    %903 = vmatprep.subr.mxu0 0.0
    %904 = vmatpush1.xpose.msra.mxu0 0.0
    %905 = vmatprep.subr.mxu0 0.0
    %906 = vmatpush1.xpose.msra.mxu0 0.0
    %907 = vmatprep.subr.mxu0 0.0
    %908 = vmatpush1.xpose.msra.mxu0 0.0
    %909 = vmatprep.subr.mxu0 0.0
    %910 = vmatpush1.xpose.msra.mxu0 0.0
    %911 = vmatprep.subr.mxu0 0.0
    %912 = vmatpush1.xpose.msra.mxu0 0.0
    %913 = vmatprep.subr.mxu0 0.0
    %914 = vmatpush1.xpose.msra.mxu0 0.0
    %915 = vmatprep.subr.mxu0 0.0
    %916 = vmatpush1.xpose.msra.mxu0 0.0
    %917 = vmatprep.subr.mxu0 0.0
    %918 = vmatpush1.xpose.msra.mxu0 0.0
    %919 = vmatprep.subr.mxu0 0.0
    %920 = vmatpush1.xpose.msra.mxu0 0.0
    %921 = vmatprep.mubr.f32.mxu0 0.0
    %922 = vmatmul.mubr.f32.gmra.mrb[0].mxu0 %v853
    %v923 = vpop.f32.mrb[0].mxu0
    %v924 = vadd.f32 %v381, %v923
    %v925 = vpop.f32.mrb[0].mxu0
    %926 = vdwg.mxu0
    %927 = vrot.lane.b32.xlu0 %v353, 96
    %v928 = vpop.permute.xlu0 %927
    %v929 = vsel %vm396, %v353, 0
    %v931 = vsel %vm396, %v928, 0
    %933 = vmatprep.subr.mxu0 0.0
    %934 = vmatpush1.xpose.msra.mxu0 %v931
    %935 = vmatprep.subr.mxu0 0.0
    %936 = vmatpush1.xpose.msra.mxu0 0.0
    %937 = vmatprep.subr.mxu0 0.0
    %938 = vmatpush1.xpose.msra.mxu0 0.0
    %939 = vmatprep.subr.mxu0 0.0
    %940 = vmatpush1.xpose.msra.mxu0 0.0
    %941 = vmatprep.subr.mxu0 0.0
    %942 = vmatpush1.xpose.msra.mxu0 0.0
    %943 = vmatprep.subr.mxu0 0.0
    %944 = vmatpush1.xpose.msra.mxu0 0.0
    %945 = vmatprep.subr.mxu0 0.0
    %946 = vmatpush1.xpose.msra.mxu0 0.0
    %947 = vmatprep.subr.mxu0 0.0
    %948 = vmatpush1.xpose.msra.mxu0 0.0
    %949 = vmatprep.subr.mxu0 0.0
    %950 = vmatpush1.xpose.msra.mxu0 0.0
    %951 = vmatprep.subr.mxu0 0.0
    %952 = vmatpush1.xpose.msra.mxu0 0.0
    %953 = vmatprep.subr.mxu0 0.0
    %954 = vmatpush1.xpose.msra.mxu0 0.0
    %955 = vmatprep.subr.mxu0 0.0
    %956 = vmatpush1.xpose.msra.mxu0 0.0
    %957 = vmatprep.subr.mxu0 0.0
    %958 = vmatpush1.xpose.msra.mxu0 0.0
    %959 = vmatprep.subr.mxu0 0.0
    %960 = vmatpush1.xpose.msra.mxu0 0.0
    %961 = vmatprep.subr.mxu0 0.0
    %962 = vmatpush1.xpose.msra.mxu0 0.0
    %963 = vmatprep.subr.mxu0 0.0
    %964 = vmatpush1.xpose.msra.mxu0 0.0
    %965 = vmatprep.subr.mxu0 0.0
    %966 = vmatpush1.xpose.msra.mxu0 0.0
    %967 = vmatprep.subr.mxu0 0.0
    %968 = vmatpush1.xpose.msra.mxu0 0.0
    %969 = vmatprep.subr.mxu0 0.0
    %970 = vmatpush1.xpose.msra.mxu0 0.0
    %971 = vmatprep.subr.mxu0 0.0
    %972 = vmatpush1.xpose.msra.mxu0 0.0
    %973 = vmatprep.subr.mxu0 0.0
    %974 = vmatpush1.xpose.msra.mxu0 0.0
    %975 = vmatprep.subr.mxu0 0.0
    %976 = vmatpush1.xpose.msra.mxu0 0.0
    %977 = vmatprep.subr.mxu0 0.0
    %978 = vmatpush1.xpose.msra.mxu0 0.0
    %979 = vmatprep.subr.mxu0 0.0
    %980 = vmatpush1.xpose.msra.mxu0 0.0
    %981 = vmatprep.subr.mxu0 0.0
    %982 = vmatpush1.xpose.msra.mxu0 0.0
    %983 = vmatprep.subr.mxu0 0.0
    %984 = vmatpush1.xpose.msra.mxu0 0.0
    %985 = vmatprep.subr.mxu0 0.0
    %986 = vmatpush1.xpose.msra.mxu0 0.0
    %987 = vmatprep.subr.mxu0 0.0
    %988 = vmatpush1.xpose.msra.mxu0 0.0
    %989 = vmatprep.subr.mxu0 0.0
    %990 = vmatpush1.xpose.msra.mxu0 0.0
    %991 = vmatprep.subr.mxu0 0.0
    %992 = vmatpush1.xpose.msra.mxu0 0.0
    %993 = vmatprep.subr.mxu0 0.0
    %994 = vmatpush1.xpose.msra.mxu0 0.0
    %995 = vmatprep.subr.mxu0 0.0
    %996 = vmatpush1.xpose.msra.mxu0 0.0
    %997 = vmatprep.mubr.f32.mxu0 0.0
    %998 = vmatmul.mubr.f32.gmra.mrb[0].mxu0 %v929
    %v999 = vpop.f32.mrb[0].mxu0
    %v1000 = vadd.f32 %v385, %v999
    %v1001 = vpop.f32.mrb[0].mxu0
    %1002 = vdwg.mxu0
    %v1003 = vsel %vm396, %v468, -inf
    %1004 = vmax.xlane.f32.xlu0 %v1003
    %v1005 = vpop.xlane.xlu0 %1004
    %v1006 = vsel %vm396, %v544, -inf
    %1007 = vmax.xlane.f32.xlu0 %v1006
    %v1008 = vpop.xlane.xlu0 %1007
    %v1009 = vsel %vm396, %v620, -inf
    %1010 = vmax.xlane.f32.xlu0 %v1009
    %v1011 = vpop.xlane.xlu0 %1010
    %v1012 = vsel %vm396, %v696, -inf
    %1013 = vmax.xlane.f32.xlu0 %v1012
    %v1014 = vpop.xlane.xlu0 %1013
    %v1015 = vsel %vm396, %v772, -inf
    %1016 = vmax.xlane.f32.xlu0 %v1015
    %v1017 = vpop.xlane.xlu0 %1016
    %v1018 = vsel %vm396, %v848, -inf
    %1019 = vmax.xlane.f32.xlu0 %v1018
    %v1020 = vpop.xlane.xlu0 %1019
    %v1021 = vsel %vm396, %v924, -inf
    %1022 = vmax.xlane.f32.xlu0 %v1021
    %v1023 = vpop.xlane.xlu0 %1022
    %v1024 = vsel %vm396, %v1000, -inf
    %1025 = vmax.xlane.f32.xlu0 %v1024
    %v1026 = vpop.xlane.xlu0 %1025
    %v1027 = vsub.f32 %v468, %v1005
    %v1028 = vsub.f32 %v544, %v1008
    %v1029 = vsub.f32 %v620, %v1011
    %v1030 = vsub.f32 %v696, %v1014
    %v1031 = vsub.f32 %v772, %v1017
    %v1032 = vsub.f32 %v848, %v1020
    %v1033 = vsub.f32 %v924, %v1023
    %v1034 = vsub.f32 %v1000, %v1026
    %v1035 = vmul.f32 %v1027, 1.442695
    %v1036 = vpow.pop %v1035
    %v1037 = vmul.f32 %v1028, 1.442695
    %v1038 = vpow.pop %v1037
    %v1039 = vmul.f32 %v1029, 1.442695
    %v1040 = vpow.pop %v1039
    %v1041 = vmul.f32 %v1030, 1.442695
    %v1042 = vpow.pop %v1041
    %v1043 = vmul.f32 %v1031, 1.442695
    %v1044 = vpow.pop %v1043
    %v1045 = vmul.f32 %v1032, 1.442695
    %v1046 = vpow.pop %v1045
    %v1047 = vmul.f32 %v1033, 1.442695
    %v1048 = vpow.pop %v1047
    %v1049 = vmul.f32 %v1034, 1.442695
    %v1050 = vpow.pop %v1049
    %v1051 = vsel %vm396, %v1036, 0.0
    %1052 = vadd.xlane.f32.xlu0 %v1051
    %v1053 = vpop.xlane.xlu0 %1052
    %v1054 = vsel %vm396, %v1038, 0.0
    %1055 = vadd.xlane.f32.xlu0 %v1054
    %v1056 = vpop.xlane.xlu0 %1055
    %v1057 = vsel %vm396, %v1040, 0.0
    %1058 = vadd.xlane.f32.xlu0 %v1057
    %v1059 = vpop.xlane.xlu0 %1058
    %v1060 = vsel %vm396, %v1042, 0.0
    %1061 = vadd.xlane.f32.xlu0 %v1060
    %v1062 = vpop.xlane.xlu0 %1061
    %v1063 = vsel %vm396, %v1044, 0.0
    %1064 = vadd.xlane.f32.xlu0 %v1063
    %v1065 = vpop.xlane.xlu0 %1064
    %v1066 = vsel %vm396, %v1046, 0.0
    %1067 = vadd.xlane.f32.xlu0 %v1066
    %v1068 = vpop.xlane.xlu0 %1067
    %v1069 = vsel %vm396, %v1048, 0.0
    %1070 = vadd.xlane.f32.xlu0 %v1069
    %v1071 = vpop.xlane.xlu0 %1070
    %v1072 = vsel %vm396, %v1050, 0.0
    %1073 = vadd.xlane.f32.xlu0 %v1072
    %v1074 = vpop.xlane.xlu0 %1073
    %v1075 = vrcp.pop %v1053
    %v1076 = vrcp.pop %v1056
    %v1077 = vrcp.pop %v1059
    %v1078 = vrcp.pop %v1062
    %v1079 = vrcp.pop %v1065
    %v1080 = vrcp.pop %v1068
    %v1081 = vrcp.pop %v1071
    %v1082 = vrcp.pop %v1074
    %v1083 = vmul.f32 %v1036, %v1075
    %v1084 = vmul.f32 %v1038, %v1076
    %v1085 = vmul.f32 %v1040, %v1077
    %v1086 = vmul.f32 %v1042, %v1078
    %v1087 = vmul.f32 %v1044, %v1079
    %v1088 = vmul.f32 %v1046, %v1080
    %v1089 = vmul.f32 %v1048, %v1081
    %v1090 = vmul.f32 %v1050, %v1082
    %1091 = vrot.lane.b32.xlu0 %v332, 64
    %v1092 = vpop.permute.xlu0 %1091
    %v1095 = vsel %vm396, %v1083, 0
    %1097 = vmatprep.subr.mxu0 0.0
    %1098 = vmatpush1.msra.mxu0 %v1092
    %1099 = vmatprep.subr.mxu0 0.0
    %1100 = vmatpush1.msra.mxu0 0.0
    %1101 = vmatprep.subr.mxu0 0.0
    %1102 = vmatpush1.msra.mxu0 0.0
    %1103 = vmatprep.subr.mxu0 0.0
    %1104 = vmatpush1.msra.mxu0 0.0
    %1105 = vmatprep.subr.mxu0 0.0
    %1106 = vmatpush1.msra.mxu0 0.0
    %1107 = vmatprep.subr.mxu0 0.0
    %1108 = vmatpush1.msra.mxu0 0.0
    %1109 = vmatprep.subr.mxu0 0.0
    %1110 = vmatpush1.msra.mxu0 0.0
    %1111 = vmatprep.subr.mxu0 0.0
    %1112 = vmatpush1.msra.mxu0 0.0
    %1113 = vmatprep.subr.mxu0 0.0
    %1114 = vmatpush1.msra.mxu0 0.0
    %1115 = vmatprep.subr.mxu0 0.0
    %1116 = vmatpush1.msra.mxu0 0.0
    %1117 = vmatprep.subr.mxu0 0.0
    %1118 = vmatpush1.msra.mxu0 0.0
    %1119 = vmatprep.subr.mxu0 0.0
    %1120 = vmatpush1.msra.mxu0 0.0
    %1121 = vmatprep.subr.mxu0 0.0
    %1122 = vmatpush1.msra.mxu0 0.0
    %1123 = vmatprep.subr.mxu0 0.0
    %1124 = vmatpush1.msra.mxu0 0.0
    %1125 = vmatprep.subr.mxu0 0.0
    %1126 = vmatpush1.msra.mxu0 0.0
    %1127 = vmatprep.subr.mxu0 0.0
    %1128 = vmatpush1.msra.mxu0 0.0
    %1129 = vmatprep.subr.mxu0 0.0
    %1130 = vmatpush1.msra.mxu0 0.0
    %1131 = vmatprep.subr.mxu0 0.0
    %1132 = vmatpush1.msra.mxu0 0.0
    %1133 = vmatprep.subr.mxu0 0.0
    %1134 = vmatpush1.msra.mxu0 0.0
    %1135 = vmatprep.subr.mxu0 0.0
    %1136 = vmatpush1.msra.mxu0 0.0
    %1137 = vmatprep.subr.mxu0 0.0
    %1138 = vmatpush1.msra.mxu0 0.0
    %1139 = vmatprep.subr.mxu0 0.0
    %1140 = vmatpush1.msra.mxu0 0.0
    %1141 = vmatprep.subr.mxu0 0.0
    %1142 = vmatpush1.msra.mxu0 0.0
    %1143 = vmatprep.subr.mxu0 0.0
    %1144 = vmatpush1.msra.mxu0 0.0
    %1145 = vmatprep.subr.mxu0 0.0
    %1146 = vmatpush1.msra.mxu0 0.0
    %1147 = vmatprep.subr.mxu0 0.0
    %1148 = vmatpush1.msra.mxu0 0.0
    %1149 = vmatprep.subr.mxu0 0.0
    %1150 = vmatpush1.msra.mxu0 0.0
    %1151 = vmatprep.subr.mxu0 0.0
    %1152 = vmatpush1.msra.mxu0 0.0
    %1153 = vmatprep.subr.mxu0 0.0
    %1154 = vmatpush1.msra.mxu0 0.0
    %1155 = vmatprep.subr.mxu0 0.0
    %1156 = vmatpush1.msra.mxu0 0.0
    %1157 = vmatprep.subr.mxu0 0.0
    %1158 = vmatpush1.msra.mxu0 0.0
    %1159 = vmatprep.subr.mxu0 0.0
    %1160 = vmatpush1.msra.mxu0 0.0
    %1161 = vmatprep.mubr.f32.mxu0 0.0
    %1162 = vmatmul.mubr.f32.gmra.mrb[0].mxu0 %v1095
    %v1163 = vpop.f32.mrb[0].mxu0
    %v1164 = vadd.f32 0.0, %v1163
    %v1165 = vpop.f32.mrb[0].mxu0
    %1166 = vdwg.mxu0
    %1167 = vrot.lane.b32.xlu0 %v337, 64
    %v1168 = vpop.permute.xlu0 %1167
    %v1171 = vsel %vm396, %v1084, 0
    %1173 = vmatprep.subr.mxu0 0.0
    %1174 = vmatpush1.msra.mxu0 %v1168
    %1175 = vmatprep.subr.mxu0 0.0
    %1176 = vmatpush1.msra.mxu0 0.0
    %1177 = vmatprep.subr.mxu0 0.0
    %1178 = vmatpush1.msra.mxu0 0.0
    %1179 = vmatprep.subr.mxu0 0.0
    %1180 = vmatpush1.msra.mxu0 0.0
    %1181 = vmatprep.subr.mxu0 0.0
    %1182 = vmatpush1.msra.mxu0 0.0
    %1183 = vmatprep.subr.mxu0 0.0
    %1184 = vmatpush1.msra.mxu0 0.0
    %1185 = vmatprep.subr.mxu0 0.0
    %1186 = vmatpush1.msra.mxu0 0.0
    %1187 = vmatprep.subr.mxu0 0.0
    %1188 = vmatpush1.msra.mxu0 0.0
    %1189 = vmatprep.subr.mxu0 0.0
    %1190 = vmatpush1.msra.mxu0 0.0
    %1191 = vmatprep.subr.mxu0 0.0
    %1192 = vmatpush1.msra.mxu0 0.0
    %1193 = vmatprep.subr.mxu0 0.0
    %1194 = vmatpush1.msra.mxu0 0.0
    %1195 = vmatprep.subr.mxu0 0.0
    %1196 = vmatpush1.msra.mxu0 0.0
    %1197 = vmatprep.subr.mxu0 0.0
    %1198 = vmatpush1.msra.mxu0 0.0
    %1199 = vmatprep.subr.mxu0 0.0
    %1200 = vmatpush1.msra.mxu0 0.0
    %1201 = vmatprep.subr.mxu0 0.0
    %1202 = vmatpush1.msra.mxu0 0.0
    %1203 = vmatprep.subr.mxu0 0.0
    %1204 = vmatpush1.msra.mxu0 0.0
    %1205 = vmatprep.subr.mxu0 0.0
    %1206 = vmatpush1.msra.mxu0 0.0
    %1207 = vmatprep.subr.mxu0 0.0
    %1208 = vmatpush1.msra.mxu0 0.0
    %1209 = vmatprep.subr.mxu0 0.0
    %1210 = vmatpush1.msra.mxu0 0.0
    %1211 = vmatprep.subr.mxu0 0.0
    %1212 = vmatpush1.msra.mxu0 0.0
    %1213 = vmatprep.subr.mxu0 0.0
    %1214 = vmatpush1.msra.mxu0 0.0
    %1215 = vmatprep.subr.mxu0 0.0
    %1216 = vmatpush1.msra.mxu0 0.0
    %1217 = vmatprep.subr.mxu0 0.0
    %1218 = vmatpush1.msra.mxu0 0.0
    %1219 = vmatprep.subr.mxu0 0.0
    %1220 = vmatpush1.msra.mxu0 0.0
    %1221 = vmatprep.subr.mxu0 0.0
    %1222 = vmatpush1.msra.mxu0 0.0
    %1223 = vmatprep.subr.mxu0 0.0
    %1224 = vmatpush1.msra.mxu0 0.0
    %1225 = vmatprep.subr.mxu0 0.0
    %1226 = vmatpush1.msra.mxu0 0.0
    %1227 = vmatprep.subr.mxu0 0.0
    %1228 = vmatpush1.msra.mxu0 0.0
    %1229 = vmatprep.subr.mxu0 0.0
    %1230 = vmatpush1.msra.mxu0 0.0
    %1231 = vmatprep.subr.mxu0 0.0
    %1232 = vmatpush1.msra.mxu0 0.0
    %1233 = vmatprep.subr.mxu0 0.0
    %1234 = vmatpush1.msra.mxu0 0.0
    %1235 = vmatprep.subr.mxu0 0.0
    %1236 = vmatpush1.msra.mxu0 0.0
    %1237 = vmatprep.mubr.f32.mxu0 0.0
    %1238 = vmatmul.mubr.f32.gmra.mrb[0].mxu0 %v1171
    %v1239 = vpop.f32.mrb[0].mxu0
    %v1240 = vadd.f32 0.0, %v1239
    %v1241 = vpop.f32.mrb[0].mxu0
    %1242 = vdwg.mxu0
    %1243 = vrot.lane.b32.xlu0 %v343, 64
    %v1244 = vpop.permute.xlu0 %1243
    %v1247 = vsel %vm396, %v1085, 0
    %1249 = vmatprep.subr.mxu0 0.0
    %1250 = vmatpush1.msra.mxu0 %v1244
    %1251 = vmatprep.subr.mxu0 0.0
    %1252 = vmatpush1.msra.mxu0 0.0
    %1253 = vmatprep.subr.mxu0 0.0
    %1254 = vmatpush1.msra.mxu0 0.0
    %1255 = vmatprep.subr.mxu0 0.0
    %1256 = vmatpush1.msra.mxu0 0.0
    %1257 = vmatprep.subr.mxu0 0.0
    %1258 = vmatpush1.msra.mxu0 0.0
    %1259 = vmatprep.subr.mxu0 0.0
    %1260 = vmatpush1.msra.mxu0 0.0
    %1261 = vmatprep.subr.mxu0 0.0
    %1262 = vmatpush1.msra.mxu0 0.0
    %1263 = vmatprep.subr.mxu0 0.0
    %1264 = vmatpush1.msra.mxu0 0.0
    %1265 = vmatprep.subr.mxu0 0.0
    %1266 = vmatpush1.msra.mxu0 0.0
    %1267 = vmatprep.subr.mxu0 0.0
    %1268 = vmatpush1.msra.mxu0 0.0
    %1269 = vmatprep.subr.mxu0 0.0
    %1270 = vmatpush1.msra.mxu0 0.0
    %1271 = vmatprep.subr.mxu0 0.0
    %1272 = vmatpush1.msra.mxu0 0.0
    %1273 = vmatprep.subr.mxu0 0.0
    %1274 = vmatpush1.msra.mxu0 0.0
    %1275 = vmatprep.subr.mxu0 0.0
    %1276 = vmatpush1.msra.mxu0 0.0
    %1277 = vmatprep.subr.mxu0 0.0
    %1278 = vmatpush1.msra.mxu0 0.0
    %1279 = vmatprep.subr.mxu0 0.0
    %1280 = vmatpush1.msra.mxu0 0.0
    %1281 = vmatprep.subr.mxu0 0.0
    %1282 = vmatpush1.msra.mxu0 0.0
    %1283 = vmatprep.subr.mxu0 0.0
    %1284 = vmatpush1.msra.mxu0 0.0
    %1285 = vmatprep.subr.mxu0 0.0
    %1286 = vmatpush1.msra.mxu0 0.0
    %1287 = vmatprep.subr.mxu0 0.0
    %1288 = vmatpush1.msra.mxu0 0.0
    %1289 = vmatprep.subr.mxu0 0.0
    %1290 = vmatpush1.msra.mxu0 0.0
    %1291 = vmatprep.subr.mxu0 0.0
    %1292 = vmatpush1.msra.mxu0 0.0
    %1293 = vmatprep.subr.mxu0 0.0
    %1294 = vmatpush1.msra.mxu0 0.0
    %1295 = vmatprep.subr.mxu0 0.0
    %1296 = vmatpush1.msra.mxu0 0.0
    %1297 = vmatprep.subr.mxu0 0.0
    %1298 = vmatpush1.msra.mxu0 0.0
    %1299 = vmatprep.subr.mxu0 0.0
    %1300 = vmatpush1.msra.mxu0 0.0
    %1301 = vmatprep.subr.mxu0 0.0
    %1302 = vmatpush1.msra.mxu0 0.0
    %1303 = vmatprep.subr.mxu0 0.0
    %1304 = vmatpush1.msra.mxu0 0.0
    %1305 = vmatprep.subr.mxu0 0.0
    %1306 = vmatpush1.msra.mxu0 0.0
    %1307 = vmatprep.subr.mxu0 0.0
    %1308 = vmatpush1.msra.mxu0 0.0
    %1309 = vmatprep.subr.mxu0 0.0
    %1310 = vmatpush1.msra.mxu0 0.0
    %1311 = vmatprep.subr.mxu0 0.0
    %1312 = vmatpush1.msra.mxu0 0.0
    %1313 = vmatprep.mubr.f32.mxu0 0.0
    %1314 = vmatmul.mubr.f32.gmra.mrb[0].mxu0 %v1247
    %v1315 = vpop.f32.mrb[0].mxu0
    %v1316 = vadd.f32 0.0, %v1315
    %v1317 = vpop.f32.mrb[0].mxu0
    %1318 = vdwg.mxu0
    %1319 = vrot.lane.b32.xlu0 %v345, 64
    %v1320 = vpop.permute.xlu0 %1319
    %v1323 = vsel %vm396, %v1086, 0
    %1325 = vmatprep.subr.mxu0 0.0
    %1326 = vmatpush1.msra.mxu0 %v1320
    %1327 = vmatprep.subr.mxu0 0.0
    %1328 = vmatpush1.msra.mxu0 0.0
    %1329 = vmatprep.subr.mxu0 0.0
    %1330 = vmatpush1.msra.mxu0 0.0
    %1331 = vmatprep.subr.mxu0 0.0
    %1332 = vmatpush1.msra.mxu0 0.0
    %1333 = vmatprep.subr.mxu0 0.0
    %1334 = vmatpush1.msra.mxu0 0.0
    %1335 = vmatprep.subr.mxu0 0.0
    %1336 = vmatpush1.msra.mxu0 0.0
    %1337 = vmatprep.subr.mxu0 0.0
    %1338 = vmatpush1.msra.mxu0 0.0
    %1339 = vmatprep.subr.mxu0 0.0
    %1340 = vmatpush1.msra.mxu0 0.0
    %1341 = vmatprep.subr.mxu0 0.0
    %1342 = vmatpush1.msra.mxu0 0.0
    %1343 = vmatprep.subr.mxu0 0.0
    %1344 = vmatpush1.msra.mxu0 0.0
    %1345 = vmatprep.subr.mxu0 0.0
    %1346 = vmatpush1.msra.mxu0 0.0
    %1347 = vmatprep.subr.mxu0 0.0
    %1348 = vmatpush1.msra.mxu0 0.0
    %1349 = vmatprep.subr.mxu0 0.0
    %1350 = vmatpush1.msra.mxu0 0.0
    %1351 = vmatprep.subr.mxu0 0.0
    %1352 = vmatpush1.msra.mxu0 0.0
    %1353 = vmatprep.subr.mxu0 0.0
    %1354 = vmatpush1.msra.mxu0 0.0
    %1355 = vmatprep.subr.mxu0 0.0
    %1356 = vmatpush1.msra.mxu0 0.0
    %1357 = vmatprep.subr.mxu0 0.0
    %1358 = vmatpush1.msra.mxu0 0.0
    %1359 = vmatprep.subr.mxu0 0.0
    %1360 = vmatpush1.msra.mxu0 0.0
    %1361 = vmatprep.subr.mxu0 0.0
    %1362 = vmatpush1.msra.mxu0 0.0
    %1363 = vmatprep.subr.mxu0 0.0
    %1364 = vmatpush1.msra.mxu0 0.0
    %1365 = vmatprep.subr.mxu0 0.0
    %1366 = vmatpush1.msra.mxu0 0.0
    %1367 = vmatprep.subr.mxu0 0.0
    %1368 = vmatpush1.msra.mxu0 0.0
    %1369 = vmatprep.subr.mxu0 0.0
    %1370 = vmatpush1.msra.mxu0 0.0
    %1371 = vmatprep.subr.mxu0 0.0
    %1372 = vmatpush1.msra.mxu0 0.0
    %1373 = vmatprep.subr.mxu0 0.0
    %1374 = vmatpush1.msra.mxu0 0.0
    %1375 = vmatprep.subr.mxu0 0.0
    %1376 = vmatpush1.msra.mxu0 0.0
    %1377 = vmatprep.subr.mxu0 0.0
    %1378 = vmatpush1.msra.mxu0 0.0
    %1379 = vmatprep.subr.mxu0 0.0
    %1380 = vmatpush1.msra.mxu0 0.0
    %1381 = vmatprep.subr.mxu0 0.0
    %1382 = vmatpush1.msra.mxu0 0.0
    %1383 = vmatprep.subr.mxu0 0.0
    %1384 = vmatpush1.msra.mxu0 0.0
    %1385 = vmatprep.subr.mxu0 0.0
    %1386 = vmatpush1.msra.mxu0 0.0
    %1387 = vmatprep.subr.mxu0 0.0
    %1388 = vmatpush1.msra.mxu0 0.0
    %1389 = vmatprep.mubr.f32.mxu0 0.0
    %1390 = vmatmul.mubr.f32.gmra.mrb[0].mxu0 %v1323
    %v1391 = vpop.f32.mrb[0].mxu0
    %v1392 = vadd.f32 0.0, %v1391
    %v1393 = vpop.f32.mrb[0].mxu0
    %1394 = vdwg.mxu0
    %1395 = vrot.lane.b32.xlu0 %v347, 64
    %v1396 = vpop.permute.xlu0 %1395
    %v1399 = vsel %vm396, %v1087, 0
    %1401 = vmatprep.subr.mxu0 0.0
    %1402 = vmatpush1.msra.mxu0 %v1396
    %1403 = vmatprep.subr.mxu0 0.0
    %1404 = vmatpush1.msra.mxu0 0.0
    %1405 = vmatprep.subr.mxu0 0.0
    %1406 = vmatpush1.msra.mxu0 0.0
    %1407 = vmatprep.subr.mxu0 0.0
    %1408 = vmatpush1.msra.mxu0 0.0
    %1409 = vmatprep.subr.mxu0 0.0
    %1410 = vmatpush1.msra.mxu0 0.0
    %1411 = vmatprep.subr.mxu0 0.0
    %1412 = vmatpush1.msra.mxu0 0.0
    %1413 = vmatprep.subr.mxu0 0.0
    %1414 = vmatpush1.msra.mxu0 0.0
    %1415 = vmatprep.subr.mxu0 0.0
    %1416 = vmatpush1.msra.mxu0 0.0
    %1417 = vmatprep.subr.mxu0 0.0
    %1418 = vmatpush1.msra.mxu0 0.0
    %1419 = vmatprep.subr.mxu0 0.0
    %1420 = vmatpush1.msra.mxu0 0.0
    %1421 = vmatprep.subr.mxu0 0.0
    %1422 = vmatpush1.msra.mxu0 0.0
    %1423 = vmatprep.subr.mxu0 0.0
    %1424 = vmatpush1.msra.mxu0 0.0
    %1425 = vmatprep.subr.mxu0 0.0
    %1426 = vmatpush1.msra.mxu0 0.0
    %1427 = vmatprep.subr.mxu0 0.0
    %1428 = vmatpush1.msra.mxu0 0.0
    %1429 = vmatprep.subr.mxu0 0.0
    %1430 = vmatpush1.msra.mxu0 0.0
    %1431 = vmatprep.subr.mxu0 0.0
    %1432 = vmatpush1.msra.mxu0 0.0
    %1433 = vmatprep.subr.mxu0 0.0
    %1434 = vmatpush1.msra.mxu0 0.0
    %1435 = vmatprep.subr.mxu0 0.0
    %1436 = vmatpush1.msra.mxu0 0.0
    %1437 = vmatprep.subr.mxu0 0.0
    %1438 = vmatpush1.msra.mxu0 0.0
    %1439 = vmatprep.subr.mxu0 0.0
    %1440 = vmatpush1.msra.mxu0 0.0
    %1441 = vmatprep.subr.mxu0 0.0
    %1442 = vmatpush1.msra.mxu0 0.0
    %1443 = vmatprep.subr.mxu0 0.0
    %1444 = vmatpush1.msra.mxu0 0.0
    %1445 = vmatprep.subr.mxu0 0.0
    %1446 = vmatpush1.msra.mxu0 0.0
    %1447 = vmatprep.subr.mxu0 0.0
    %1448 = vmatpush1.msra.mxu0 0.0
    %1449 = vmatprep.subr.mxu0 0.0
    %1450 = vmatpush1.msra.mxu0 0.0
    %1451 = vmatprep.subr.mxu0 0.0
    %1452 = vmatpush1.msra.mxu0 0.0
    %1453 = vmatprep.subr.mxu0 0.0
    %1454 = vmatpush1.msra.mxu0 0.0
    %1455 = vmatprep.subr.mxu0 0.0
    %1456 = vmatpush1.msra.mxu0 0.0
    %1457 = vmatprep.subr.mxu0 0.0
    %1458 = vmatpush1.msra.mxu0 0.0
    %1459 = vmatprep.subr.mxu0 0.0
    %1460 = vmatpush1.msra.mxu0 0.0
    %1461 = vmatprep.subr.mxu0 0.0
    %1462 = vmatpush1.msra.mxu0 0.0
    %1463 = vmatprep.subr.mxu0 0.0
    %1464 = vmatpush1.msra.mxu0 0.0
    %1465 = vmatprep.mubr.f32.mxu0 0.0
    %1466 = vmatmul.mubr.f32.gmra.mrb[0].mxu0 %v1399
    %v1467 = vpop.f32.mrb[0].mxu0
    %v1468 = vadd.f32 0.0, %v1467
    %v1469 = vpop.f32.mrb[0].mxu0
    %1470 = vdwg.mxu0
    %1471 = vrot.lane.b32.xlu0 %v349, 64
    %v1472 = vpop.permute.xlu0 %1471
    %v1475 = vsel %vm396, %v1088, 0
    %1477 = vmatprep.subr.mxu0 0.0
    %1478 = vmatpush1.msra.mxu0 %v1472
    %1479 = vmatprep.subr.mxu0 0.0
    %1480 = vmatpush1.msra.mxu0 0.0
    %1481 = vmatprep.subr.mxu0 0.0
    %1482 = vmatpush1.msra.mxu0 0.0
    %1483 = vmatprep.subr.mxu0 0.0
    %1484 = vmatpush1.msra.mxu0 0.0
    %1485 = vmatprep.subr.mxu0 0.0
    %1486 = vmatpush1.msra.mxu0 0.0
    %1487 = vmatprep.subr.mxu0 0.0
    %1488 = vmatpush1.msra.mxu0 0.0
    %1489 = vmatprep.subr.mxu0 0.0
    %1490 = vmatpush1.msra.mxu0 0.0
    %1491 = vmatprep.subr.mxu0 0.0
    %1492 = vmatpush1.msra.mxu0 0.0
    %1493 = vmatprep.subr.mxu0 0.0
    %1494 = vmatpush1.msra.mxu0 0.0
    %1495 = vmatprep.subr.mxu0 0.0
    %1496 = vmatpush1.msra.mxu0 0.0
    %1497 = vmatprep.subr.mxu0 0.0
    %1498 = vmatpush1.msra.mxu0 0.0
    %1499 = vmatprep.subr.mxu0 0.0
    %1500 = vmatpush1.msra.mxu0 0.0
    %1501 = vmatprep.subr.mxu0 0.0
    %1502 = vmatpush1.msra.mxu0 0.0
    %1503 = vmatprep.subr.mxu0 0.0
    %1504 = vmatpush1.msra.mxu0 0.0
    %1505 = vmatprep.subr.mxu0 0.0
    %1506 = vmatpush1.msra.mxu0 0.0
    %1507 = vmatprep.subr.mxu0 0.0
    %1508 = vmatpush1.msra.mxu0 0.0
    %1509 = vmatprep.subr.mxu0 0.0
    %1510 = vmatpush1.msra.mxu0 0.0
    %1511 = vmatprep.subr.mxu0 0.0
    %1512 = vmatpush1.msra.mxu0 0.0
    %1513 = vmatprep.subr.mxu0 0.0
    %1514 = vmatpush1.msra.mxu0 0.0
    %1515 = vmatprep.subr.mxu0 0.0
    %1516 = vmatpush1.msra.mxu0 0.0
    %1517 = vmatprep.subr.mxu0 0.0
    %1518 = vmatpush1.msra.mxu0 0.0
    %1519 = vmatprep.subr.mxu0 0.0
    %1520 = vmatpush1.msra.mxu0 0.0
    %1521 = vmatprep.subr.mxu0 0.0
    %1522 = vmatpush1.msra.mxu0 0.0
    %1523 = vmatprep.subr.mxu0 0.0
    %1524 = vmatpush1.msra.mxu0 0.0
    %1525 = vmatprep.subr.mxu0 0.0
    %1526 = vmatpush1.msra.mxu0 0.0
    %1527 = vmatprep.subr.mxu0 0.0
    %1528 = vmatpush1.msra.mxu0 0.0
    %1529 = vmatprep.subr.mxu0 0.0
    %1530 = vmatpush1.msra.mxu0 0.0
    %1531 = vmatprep.subr.mxu0 0.0
    %1532 = vmatpush1.msra.mxu0 0.0
    %1533 = vmatprep.subr.mxu0 0.0
    %1534 = vmatpush1.msra.mxu0 0.0
    %1535 = vmatprep.subr.mxu0 0.0
    %1536 = vmatpush1.msra.mxu0 0.0
    %1537 = vmatprep.subr.mxu0 0.0
    %1538 = vmatpush1.msra.mxu0 0.0
    %1539 = vmatprep.subr.mxu0 0.0
    %1540 = vmatpush1.msra.mxu0 0.0
    %1541 = vmatprep.mubr.f32.mxu0 0.0
    %1542 = vmatmul.mubr.f32.gmra.mrb[0].mxu0 %v1475
    %v1543 = vpop.f32.mrb[0].mxu0
    %v1544 = vadd.f32 0.0, %v1543
    %v1545 = vpop.f32.mrb[0].mxu0
    %1546 = vdwg.mxu0
    %1547 = vrot.lane.b32.xlu0 %v351, 64
    %v1548 = vpop.permute.xlu0 %1547
    %v1551 = vsel %vm396, %v1089, 0
    %1553 = vmatprep.subr.mxu0 0.0
    %1554 = vmatpush1.msra.mxu0 %v1548
    %1555 = vmatprep.subr.mxu0 0.0
    %1556 = vmatpush1.msra.mxu0 0.0
    %1557 = vmatprep.subr.mxu0 0.0
    %1558 = vmatpush1.msra.mxu0 0.0
    %1559 = vmatprep.subr.mxu0 0.0
    %1560 = vmatpush1.msra.mxu0 0.0
    %1561 = vmatprep.subr.mxu0 0.0
    %1562 = vmatpush1.msra.mxu0 0.0
    %1563 = vmatprep.subr.mxu0 0.0
    %1564 = vmatpush1.msra.mxu0 0.0
    %1565 = vmatprep.subr.mxu0 0.0
    %1566 = vmatpush1.msra.mxu0 0.0
    %1567 = vmatprep.subr.mxu0 0.0
    %1568 = vmatpush1.msra.mxu0 0.0
    %1569 = vmatprep.subr.mxu0 0.0
    %1570 = vmatpush1.msra.mxu0 0.0
    %1571 = vmatprep.subr.mxu0 0.0
    %1572 = vmatpush1.msra.mxu0 0.0
    %1573 = vmatprep.subr.mxu0 0.0
    %1574 = vmatpush1.msra.mxu0 0.0
    %1575 = vmatprep.subr.mxu0 0.0
    %1576 = vmatpush1.msra.mxu0 0.0
    %1577 = vmatprep.subr.mxu0 0.0
    %1578 = vmatpush1.msra.mxu0 0.0
    %1579 = vmatprep.subr.mxu0 0.0
    %1580 = vmatpush1.msra.mxu0 0.0
    %1581 = vmatprep.subr.mxu0 0.0
    %1582 = vmatpush1.msra.mxu0 0.0
    %1583 = vmatprep.subr.mxu0 0.0
    %1584 = vmatpush1.msra.mxu0 0.0
    %1585 = vmatprep.subr.mxu0 0.0
    %1586 = vmatpush1.msra.mxu0 0.0
    %1587 = vmatprep.subr.mxu0 0.0
    %1588 = vmatpush1.msra.mxu0 0.0
    %1589 = vmatprep.subr.mxu0 0.0
    %1590 = vmatpush1.msra.mxu0 0.0
    %1591 = vmatprep.subr.mxu0 0.0
    %1592 = vmatpush1.msra.mxu0 0.0
    %1593 = vmatprep.subr.mxu0 0.0
    %1594 = vmatpush1.msra.mxu0 0.0
    %1595 = vmatprep.subr.mxu0 0.0
    %1596 = vmatpush1.msra.mxu0 0.0
    %1597 = vmatprep.subr.mxu0 0.0
    %1598 = vmatpush1.msra.mxu0 0.0
    %1599 = vmatprep.subr.mxu0 0.0
    %1600 = vmatpush1.msra.mxu0 0.0
    %1601 = vmatprep.subr.mxu0 0.0
    %1602 = vmatpush1.msra.mxu0 0.0
    %1603 = vmatprep.subr.mxu0 0.0
    %1604 = vmatpush1.msra.mxu0 0.0
    %1605 = vmatprep.subr.mxu0 0.0
    %1606 = vmatpush1.msra.mxu0 0.0
    %1607 = vmatprep.subr.mxu0 0.0
    %1608 = vmatpush1.msra.mxu0 0.0
    %1609 = vmatprep.subr.mxu0 0.0
    %1610 = vmatpush1.msra.mxu0 0.0
    %1611 = vmatprep.subr.mxu0 0.0
    %1612 = vmatpush1.msra.mxu0 0.0
    %1613 = vmatprep.subr.mxu0 0.0
    %1614 = vmatpush1.msra.mxu0 0.0
    %1615 = vmatprep.subr.mxu0 0.0
    %1616 = vmatpush1.msra.mxu0 0.0
    %1617 = vmatprep.mubr.f32.mxu0 0.0
    %1618 = vmatmul.mubr.f32.gmra.mrb[0].mxu0 %v1551
    %v1619 = vpop.f32.mrb[0].mxu0
    %v1620 = vadd.f32 0.0, %v1619
    %v1621 = vpop.f32.mrb[0].mxu0
    %1622 = vdwg.mxu0
    %1623 = vrot.lane.b32.xlu0 %v353, 64
    %v1624 = vpop.permute.xlu0 %1623
    %v1627 = vsel %vm396, %v1090, 0
    %1629 = vmatprep.subr.mxu0 0.0
    %1630 = vmatpush1.msra.mxu0 %v1624
    %1631 = vmatprep.subr.mxu0 0.0
    %1632 = vmatpush1.msra.mxu0 0.0
    %1633 = vmatprep.subr.mxu0 0.0
    %1634 = vmatpush1.msra.mxu0 0.0
    %1635 = vmatprep.subr.mxu0 0.0
    %1636 = vmatpush1.msra.mxu0 0.0
    %1637 = vmatprep.subr.mxu0 0.0
    %1638 = vmatpush1.msra.mxu0 0.0
    %1639 = vmatprep.subr.mxu0 0.0
    %1640 = vmatpush1.msra.mxu0 0.0
    %1641 = vmatprep.subr.mxu0 0.0
    %1642 = vmatpush1.msra.mxu0 0.0
    %1643 = vmatprep.subr.mxu0 0.0
    %1644 = vmatpush1.msra.mxu0 0.0
    %1645 = vmatprep.subr.mxu0 0.0
    %1646 = vmatpush1.msra.mxu0 0.0
    %1647 = vmatprep.subr.mxu0 0.0
    %1648 = vmatpush1.msra.mxu0 0.0
    %1649 = vmatprep.subr.mxu0 0.0
    %1650 = vmatpush1.msra.mxu0 0.0
    %1651 = vmatprep.subr.mxu0 0.0
    %1652 = vmatpush1.msra.mxu0 0.0
    %1653 = vmatprep.subr.mxu0 0.0
    %1654 = vmatpush1.msra.mxu0 0.0
    %1655 = vmatprep.subr.mxu0 0.0
    %1656 = vmatpush1.msra.mxu0 0.0
    %1657 = vmatprep.subr.mxu0 0.0
    %1658 = vmatpush1.msra.mxu0 0.0
    %1659 = vmatprep.subr.mxu0 0.0
    %1660 = vmatpush1.msra.mxu0 0.0
    %1661 = vmatprep.subr.mxu0 0.0
    %1662 = vmatpush1.msra.mxu0 0.0
    %1663 = vmatprep.subr.mxu0 0.0
    %1664 = vmatpush1.msra.mxu0 0.0
    %1665 = vmatprep.subr.mxu0 0.0
    %1666 = vmatpush1.msra.mxu0 0.0
    %1667 = vmatprep.subr.mxu0 0.0
    %1668 = vmatpush1.msra.mxu0 0.0
    %1669 = vmatprep.subr.mxu0 0.0
    %1670 = vmatpush1.msra.mxu0 0.0
    %1671 = vmatprep.subr.mxu0 0.0
    %1672 = vmatpush1.msra.mxu0 0.0
    %1673 = vmatprep.subr.mxu0 0.0
    %1674 = vmatpush1.msra.mxu0 0.0
    %1675 = vmatprep.subr.mxu0 0.0
    %1676 = vmatpush1.msra.mxu0 0.0
    %1677 = vmatprep.subr.mxu0 0.0
    %1678 = vmatpush1.msra.mxu0 0.0
    %1679 = vmatprep.subr.mxu0 0.0
    %1680 = vmatpush1.msra.mxu0 0.0
    %1681 = vmatprep.subr.mxu0 0.0
    %1682 = vmatpush1.msra.mxu0 0.0
    %1683 = vmatprep.subr.mxu0 0.0
    %1684 = vmatpush1.msra.mxu0 0.0
    %1685 = vmatprep.subr.mxu0 0.0
    %1686 = vmatpush1.msra.mxu0 0.0
    %1687 = vmatprep.subr.mxu0 0.0
    %1688 = vmatpush1.msra.mxu0 0.0
    %1689 = vmatprep.subr.mxu0 0.0
    %1690 = vmatpush1.msra.mxu0 0.0
    %1691 = vmatprep.subr.mxu0 0.0
    %1692 = vmatpush1.msra.mxu0 0.0
    %1693 = vmatprep.mubr.f32.mxu0 0.0
    %1694 = vmatmul.mubr.f32.gmra.mrb[0].mxu0 %v1627
    %v1695 = vpop.f32.mrb[0].mxu0
    %v1696 = vadd.f32 0.0, %v1695
    %v1697 = vpop.f32.mrb[0].mxu0
    %1698 = vdwg.mxu0
    %1701 = vrot.lane.b32.xlu0 %v1316, 8
    %v1702 = vpop.permute.xlu0 %1701
    %1703 = vrot.lane.b32.xlu0 %v1392, 8
    %v1704 = vpop.permute.xlu0 %1703
    %1709 = vrot.lane.b32.xlu0 %v1468, 16
    %v1710 = vpop.permute.xlu0 %1709
    %1711 = vrot.lane.b32.xlu0 %v1544, 16
    %v1712 = vpop.permute.xlu0 %1711
    %1717 = vrot.lane.b32.xlu0 %v1620, 24
    %v1718 = vpop.permute.xlu0 %1717
    %1719 = vrot.lane.b32.xlu0 %v1696, 24
    %v1720 = vpop.permute.xlu0 %1719
    %v1723 = vsel %vm396, %v1164, %v1702
    %v1724 = vsel %vm396, %v1240, %v1704
    %vm1725 = vcmask 130048
    %v1726 = vsel %vm1725, %v1723, %v1710
    %v1727 = vsel %vm1725, %v1724, %v1712
    %vm1728 = vcmask 195584
    %v1729 = vsel %vm1728, %v1726, %v1718
    %v1730 = vsel %vm1728, %v1727, %v1720
    %v1731 = vld [vmem:[%s2 + $0x2] sm:$0x1]
    %v1732 = vlaneseq
    %v1733 = vshrl.u32 %v1732, 7
    %v1734 = vsub.s32 0, %v1733
    %v1735 = vrot.slane %v1731, %v1734
    %1740 = vrot.lane.b32.xlu0 %v246, 32
    %v1741 = vpop.permute.xlu0 %1740
    %1742 = vrot.lane.b32.xlu0 %v248, 32
    %v1743 = vpop.permute.xlu0 %1742
    %1744 = vrot.lane.b32.xlu0 %v250, 32
    %v1745 = vpop.permute.xlu0 %1744
    %1746 = vrot.lane.b32.xlu0 %v252, 32
    %v1747 = vpop.permute.xlu0 %1746
    %v1753 = vsel %vm139, %v1729, 0
    %v1756 = vsel %vm139, %v1730, 0
    %1758 = vmatprep.subr.mxu0 0.0
    %1759 = vmatpush1.msra.mxu0 %v1741
    %1760 = vmatprep.subr.mxu0 0.0
    %1761 = vmatpush1.msra.mxu0 %v1743
    %1762 = vmatprep.subr.mxu0 0.0
    %1763 = vmatpush1.msra.mxu0 %v1745
    %1764 = vmatprep.subr.mxu0 0.0
    %1765 = vmatpush1.msra.mxu0 %v1747
    %1766 = vmatprep.subr.mxu0 0.0
    %1767 = vmatpush1.msra.mxu0 0.0
    %1768 = vmatprep.subr.mxu0 0.0
    %1769 = vmatpush1.msra.mxu0 0.0
    %1770 = vmatprep.subr.mxu0 0.0
    %1771 = vmatpush1.msra.mxu0 0.0
    %1772 = vmatprep.subr.mxu0 0.0
    %1773 = vmatpush1.msra.mxu0 0.0
    %1774 = vmatprep.subr.mxu0 0.0
    %1775 = vmatpush1.msra.mxu0 0.0
    %1776 = vmatprep.subr.mxu0 0.0
    %1777 = vmatpush1.msra.mxu0 0.0
    %1778 = vmatprep.subr.mxu0 0.0
    %1779 = vmatpush1.msra.mxu0 0.0
    %1780 = vmatprep.subr.mxu0 0.0
    %1781 = vmatpush1.msra.mxu0 0.0
    %1782 = vmatprep.subr.mxu0 0.0
    %1783 = vmatpush1.msra.mxu0 0.0
    %1784 = vmatprep.subr.mxu0 0.0
    %1785 = vmatpush1.msra.mxu0 0.0
    %1786 = vmatprep.subr.mxu0 0.0
    %1787 = vmatpush1.msra.mxu0 0.0
    %1788 = vmatprep.subr.mxu0 0.0
    %1789 = vmatpush1.msra.mxu0 0.0
    %1790 = vmatprep.subr.mxu0 0.0
    %1791 = vmatpush1.msra.mxu0 0.0
    %1792 = vmatprep.subr.mxu0 0.0
    %1793 = vmatpush1.msra.mxu0 0.0
    %1794 = vmatprep.subr.mxu0 0.0
    %1795 = vmatpush1.msra.mxu0 0.0
    %1796 = vmatprep.subr.mxu0 0.0
    %1797 = vmatpush1.msra.mxu0 0.0
    %1798 = vmatprep.subr.mxu0 0.0
    %1799 = vmatpush1.msra.mxu0 0.0
    %1800 = vmatprep.subr.mxu0 0.0
    %1801 = vmatpush1.msra.mxu0 0.0
    %1802 = vmatprep.subr.mxu0 0.0
    %1803 = vmatpush1.msra.mxu0 0.0
    %1804 = vmatprep.subr.mxu0 0.0
    %1805 = vmatpush1.msra.mxu0 0.0
    %1806 = vmatprep.subr.mxu0 0.0
    %1807 = vmatpush1.msra.mxu0 0.0
    %1808 = vmatprep.subr.mxu0 0.0
    %1809 = vmatpush1.msra.mxu0 0.0
    %1810 = vmatprep.subr.mxu0 0.0
    %1811 = vmatpush1.msra.mxu0 0.0
    %1812 = vmatprep.subr.mxu0 0.0
    %1813 = vmatpush1.msra.mxu0 0.0
    %1814 = vmatprep.subr.mxu0 0.0
    %1815 = vmatpush1.msra.mxu0 0.0
    %1816 = vmatprep.subr.mxu0 0.0
    %1817 = vmatpush1.msra.mxu0 0.0
    %1818 = vmatprep.subr.mxu0 0.0
    %1819 = vmatpush1.msra.mxu0 0.0
    %1820 = vmatprep.subr.mxu0 0.0
    %1821 = vmatpush1.msra.mxu0 0.0
    %1822 = vmatprep.mubr.f32.mxu0 0.0
    %1823 = vmatmul.mubr.f32.gmra.mrb[0].mxu0 %v1753
    %v1824 = vpop.f32.mrb[0].mxu0
    %v1825 = vadd.f32 %v1735, %v1824
    %v1826 = vpop.f32.mrb[0].mxu0
    %1827 = vmatprep.mubr.f32.mxu0 0.0
    %1828 = vmatmul.mubr.f32.gmra.mrb[0].mxu0 %v1756
    %v1829 = vpop.f32.mrb[0].mxu0
    %v1830 = vadd.f32 %v1735, %v1829
    %v1831 = vpop.f32.mrb[0].mxu0
    %1832 = vdwg.mxu0
    %v1833 = vadd.f32 %v177, %v1825
    %v1834 = vadd.f32 %v178, %v1830
    %v1835 = vld [vmem:[%s2 + $0x3] sm:$0x1]
    %v1836 = vld [vmem:[%s2 + $0x4] sm:$0x1]
    %v1837 = vsel %vm139, %v1833, 0.0
    %1838 = vadd.xlane.f32.xlu0 %v1837
    %v1839 = vpop.xlane.xlu0 %1838
    %v1840 = vsel %vm139, %v1834, 0.0
    %1841 = vadd.xlane.f32.xlu0 %v1840
    %v1842 = vpop.xlane.xlu0 %1841
    %v1843 = vmul.f32 %v1839, %v146
    %v1844 = vmul.f32 %v1842, %v146
    %v1845 = vsub.f32 %v1833, %v1843
    %v1846 = vsub.f32 %v1834, %v1844
    %v1847 = vmul.f32 %v1845, %v1845
    %v1848 = vmul.f32 %v1846, %v1846
    %v1849 = vsel %vm139, %v1847, 0.0
    %1850 = vadd.xlane.f32.xlu0 %v1849
    %v1851 = vpop.xlane.xlu0 %1850
    %v1852 = vsel %vm139, %v1848, 0.0
    %1853 = vadd.xlane.f32.xlu0 %v1852
    %v1854 = vpop.xlane.xlu0 %1853
    %v1855 = vmul.f32 %v1851, %v146
    %v1856 = vmul.f32 %v1854, %v146
    %v1857 = vadd.f32 %v1855, 1e-12
    %v1858 = vadd.f32 %v1856, 1e-12
    %v1859 = vrsqrt.pop %v1857
    %v1860 = vrsqrt.pop %v1858
    %v1861 = vmul.f32 %v1845, %v1859
    %v1862 = vmul.f32 %v1846, %v1860
    %v1863 = vlaneseq
    %v1864 = vshrl.u32 %v1863, 7
    %v1865 = vsub.s32 0, %v1864
    %v1866 = vrot.slane %v1835, %v1865
    %v1867 = vmul.f32 %v1861, %v1866
    %v1868 = vmul.f32 %v1862, %v1866
    %v1869 = vlaneseq
    %v1870 = vshrl.u32 %v1869, 7
    %v1871 = vsub.s32 0, %v1870
    %v1872 = vrot.slane %v1836, %v1871
    %v1873 = vadd.f32 %v1867, %v1872
    %v1874 = vadd.f32 %v1868, %v1872
    %v1875 = vld [vmem:[%s3 + $0x2] sm:$0x1]
    %v1876 = vlaneseq
    %v1877 = vshrl.u32 %v1876, 7
    %v1878 = vsub.s32 0, %v1877
    %v1879 = vrot.slane %v1875, %v1878
    %v1881 = vsel %vm139, %v1873, 0
    %v1884 = vsel %vm139, %v1874, 0
    %1886 = vmatprep.subr.mxu0 0.0
    %1887 = vmatpush1.msra.mxu0 %v247
    %1888 = vmatprep.subr.mxu0 0.0
    %1889 = vmatpush1.msra.mxu0 %v249
    %1890 = vmatprep.subr.mxu0 0.0
    %1891 = vmatpush1.msra.mxu0 %v251
    %1892 = vmatprep.subr.mxu0 0.0
    %1893 = vmatpush1.msra.mxu0 %v253
    %1894 = vmatprep.subr.mxu0 0.0
    %1895 = vmatpush1.msra.mxu0 0.0
    %1896 = vmatprep.subr.mxu0 0.0
    %1897 = vmatpush1.msra.mxu0 0.0
    %1898 = vmatprep.subr.mxu0 0.0
    %1899 = vmatpush1.msra.mxu0 0.0
    %1900 = vmatprep.subr.mxu0 0.0
    %1901 = vmatpush1.msra.mxu0 0.0
    %1902 = vmatprep.subr.mxu0 0.0
    %1903 = vmatpush1.msra.mxu0 0.0
    %1904 = vmatprep.subr.mxu0 0.0
    %1905 = vmatpush1.msra.mxu0 0.0
    %1906 = vmatprep.subr.mxu0 0.0
    %1907 = vmatpush1.msra.mxu0 0.0
    %1908 = vmatprep.subr.mxu0 0.0
    %1909 = vmatpush1.msra.mxu0 0.0
    %1910 = vmatprep.subr.mxu0 0.0
    %1911 = vmatpush1.msra.mxu0 0.0
    %1912 = vmatprep.subr.mxu0 0.0
    %1913 = vmatpush1.msra.mxu0 0.0
    %1914 = vmatprep.subr.mxu0 0.0
    %1915 = vmatpush1.msra.mxu0 0.0
    %1916 = vmatprep.subr.mxu0 0.0
    %1917 = vmatpush1.msra.mxu0 0.0
    %1918 = vmatprep.subr.mxu0 0.0
    %1919 = vmatpush1.msra.mxu0 0.0
    %1920 = vmatprep.subr.mxu0 0.0
    %1921 = vmatpush1.msra.mxu0 0.0
    %1922 = vmatprep.subr.mxu0 0.0
    %1923 = vmatpush1.msra.mxu0 0.0
    %1924 = vmatprep.subr.mxu0 0.0
    %1925 = vmatpush1.msra.mxu0 0.0
    %1926 = vmatprep.subr.mxu0 0.0
    %1927 = vmatpush1.msra.mxu0 0.0
    %1928 = vmatprep.subr.mxu0 0.0
    %1929 = vmatpush1.msra.mxu0 0.0
    %1930 = vmatprep.subr.mxu0 0.0
    %1931 = vmatpush1.msra.mxu0 0.0
    %1932 = vmatprep.subr.mxu0 0.0
    %1933 = vmatpush1.msra.mxu0 0.0
    %1934 = vmatprep.subr.mxu0 0.0
    %1935 = vmatpush1.msra.mxu0 0.0
    %1936 = vmatprep.subr.mxu0 0.0
    %1937 = vmatpush1.msra.mxu0 0.0
    %1938 = vmatprep.subr.mxu0 0.0
    %1939 = vmatpush1.msra.mxu0 0.0
    %1940 = vmatprep.subr.mxu0 0.0
    %1941 = vmatpush1.msra.mxu0 0.0
    %1942 = vmatprep.subr.mxu0 0.0
    %1943 = vmatpush1.msra.mxu0 0.0
    %1944 = vmatprep.subr.mxu0 0.0
    %1945 = vmatpush1.msra.mxu0 0.0
    %1946 = vmatprep.subr.mxu0 0.0
    %1947 = vmatpush1.msra.mxu0 0.0
    %1948 = vmatprep.subr.mxu0 0.0
    %1949 = vmatpush1.msra.mxu0 0.0
    %1950 = vmatprep.mubr.f32.mxu0 0.0
    %1951 = vmatmul.mubr.f32.gmra.mrb[0].mxu0 %v1881
    %v1952 = vpop.f32.mrb[0].mxu0
    %v1953 = vadd.f32 %v1879, %v1952
    %v1954 = vpop.f32.mrb[0].mxu0
    %1955 = vmatprep.mubr.f32.mxu0 0.0
    %1956 = vmatmul.mubr.f32.gmra.mrb[0].mxu0 %v1884
    %v1957 = vpop.f32.mrb[0].mxu0
    %v1958 = vadd.f32 %v1879, %v1957
    %v1959 = vpop.f32.mrb[0].mxu0
    %1960 = vdwg.mxu0
    %v1961 = vmul.f32 %v1953, %v1953
    %v1962 = vmul.f32 %v1958, %v1958
    %v1963 = vmul.f32 %v1953, %v1961
    %v1964 = vmul.f32 %v1958, %v1962
    %v1965 = vmul.f32 %v1963, 0.044715
    %v1966 = vmul.f32 %v1964, 0.044715
    %v1967 = vadd.f32 %v1953, %v1965
    %v1968 = vadd.f32 %v1958, %v1966
    %v1969 = vmul.f32 %v1967, 0.7978846
    %v1970 = vmul.f32 %v1968, 0.7978846
    %v1971 = vtanh.pop %v1969
    %v1972 = vtanh.pop %v1970
    %v1973 = vadd.f32 %v1971, 1.0
    %v1974 = vadd.f32 %v1972, 1.0
    %v1975 = vmul.f32 %v1973, 0.5
    %v1976 = vmul.f32 %v1974, 0.5
    %v1977 = vmul.f32 %v1953, %v1975
    %v1978 = vmul.f32 %v1958, %v1976
    %v1979 = vld [vmem:[%s5] sm:$0xff]
    %v1980 = vld [vmem:[%s5 + $0x8] sm:$0xff]
    %v1981 = vld [vmem:[%s5 + $0x10] sm:$0xff]
    %v1982 = vld [vmem:[%s5 + $0x18] sm:$0xff]
    %v1983 = vld [vmem:[%s5 + $0x20] sm:$0xff]
    %v1984 = vld [vmem:[%s5 + $0x28] sm:$0xff]
    %v1985 = vld [vmem:[%s5 + $0x30] sm:$0xff]
    %v1986 = vld [vmem:[%s5 + $0x38] sm:$0xff]
    %v1987 = vld [vmem:[%s5 + $0x40] sm:$0xff]
    %v1988 = vld [vmem:[%s5 + $0x48] sm:$0xff]
    %v1989 = vld [vmem:[%s5 + $0x50] sm:$0xff]
    %v1990 = vld [vmem:[%s5 + $0x58] sm:$0xff]
    %v1991 = vld [vmem:[%s5 + $0x60] sm:$0xff]
    %v1992 = vld [vmem:[%s5 + $0x68] sm:$0xff]
    %v1993 = vld [vmem:[%s5 + $0x70] sm:$0xff]
    %v1994 = vld [vmem:[%s5 + $0x78] sm:$0xff]
    %v1995 = vld [vmem:[%s2 + $0x5] sm:$0x1]
    %v1996 = vlaneseq
    %v1997 = vshrl.u32 %v1996, 7
    %v1998 = vsub.s32 0, %v1997
    %v1999 = vrot.slane %v1995, %v1998
    %2000 = vmatprep.subr.mxu0 0.0
    %2001 = vmatpush1.msra.mxu0 %v1979
    %2002 = vmatprep.subr.mxu0 0.0
    %2003 = vmatpush1.msra.mxu0 %v1980
    %2004 = vmatprep.subr.mxu0 0.0
    %2005 = vmatpush1.msra.mxu0 %v1981
    %2006 = vmatprep.subr.mxu0 0.0
    %2007 = vmatpush1.msra.mxu0 %v1982
    %2008 = vmatprep.subr.mxu0 0.0
    %2009 = vmatpush1.msra.mxu0 %v1983
    %2010 = vmatprep.subr.mxu0 0.0
    %2011 = vmatpush1.msra.mxu0 %v1984
    %2012 = vmatprep.subr.mxu0 0.0
    %2013 = vmatpush1.msra.mxu0 %v1985
    %2014 = vmatprep.subr.mxu0 0.0
    %2015 = vmatpush1.msra.mxu0 %v1986
    %2016 = vmatprep.subr.mxu0 0.0
    %2017 = vmatpush1.msra.mxu0 %v1987
    %2018 = vmatprep.subr.mxu0 0.0
    %2019 = vmatpush1.msra.mxu0 %v1988
    %2020 = vmatprep.subr.mxu0 0.0
    %2021 = vmatpush1.msra.mxu0 %v1989
    %2022 = vmatprep.subr.mxu0 0.0
    %2023 = vmatpush1.msra.mxu0 %v1990
    %2024 = vmatprep.subr.mxu0 0.0
    %2025 = vmatpush1.msra.mxu0 %v1991
    %2026 = vmatprep.subr.mxu0 0.0
    %2027 = vmatpush1.msra.mxu0 %v1992
    %2028 = vmatprep.subr.mxu0 0.0
    %2029 = vmatpush1.msra.mxu0 %v1993
    %2030 = vmatprep.subr.mxu0 0.0
    %2031 = vmatpush1.msra.mxu0 %v1994
    %2032 = vmatprep.subr.mxu0 0.0
    %2033 = vmatpush1.msra.mxu0 0.0
    %2034 = vmatprep.subr.mxu0 0.0
    %2035 = vmatpush1.msra.mxu0 0.0
    %2036 = vmatprep.subr.mxu0 0.0
    %2037 = vmatpush1.msra.mxu0 0.0
    %2038 = vmatprep.subr.mxu0 0.0
    %2039 = vmatpush1.msra.mxu0 0.0
    %2040 = vmatprep.subr.mxu0 0.0
    %2041 = vmatpush1.msra.mxu0 0.0
    %2042 = vmatprep.subr.mxu0 0.0
    %2043 = vmatpush1.msra.mxu0 0.0
    %2044 = vmatprep.subr.mxu0 0.0
    %2045 = vmatpush1.msra.mxu0 0.0
    %2046 = vmatprep.subr.mxu0 0.0
    %2047 = vmatpush1.msra.mxu0 0.0
    %2048 = vmatprep.subr.mxu0 0.0
    %2049 = vmatpush1.msra.mxu0 0.0
    %2050 = vmatprep.subr.mxu0 0.0
    %2051 = vmatpush1.msra.mxu0 0.0
    %2052 = vmatprep.subr.mxu0 0.0
    %2053 = vmatpush1.msra.mxu0 0.0
    %2054 = vmatprep.subr.mxu0 0.0
    %2055 = vmatpush1.msra.mxu0 0.0
    %2056 = vmatprep.subr.mxu0 0.0
    %2057 = vmatpush1.msra.mxu0 0.0
    %2058 = vmatprep.subr.mxu0 0.0
    %2059 = vmatpush1.msra.mxu0 0.0
    %2060 = vmatprep.subr.mxu0 0.0
    %2061 = vmatpush1.msra.mxu0 0.0
    %2062 = vmatprep.subr.mxu0 0.0
    %2063 = vmatpush1.msra.mxu0 0.0
    %2064 = vmatprep.mubr.f32.mxu0 0.0
    %2065 = vmatmul.mubr.f32.gmra.mrb[0].mxu0 %v1977
    %v2066 = vpop.f32.mrb[0].mxu0
    %v2067 = vadd.f32 %v1999, %v2066
    %v2068 = vpop.f32.mrb[0].mxu0
    %2069 = vmatprep.mubr.f32.mxu0 0.0
    %2070 = vmatmul.mubr.f32.gmra.mrb[0].mxu0 %v1978
    %v2071 = vpop.f32.mrb[0].mxu0
    %v2072 = vadd.f32 %v1999, %v2071
    %v2073 = vpop.f32.mrb[0].mxu0
    %2074 = vdwg.mxu0
    %v2075 = vadd.f32 %v1873, %v2067
    %v2076 = vadd.f32 %v1874, %v2072
    %v2077 = vld [vmem:[%s2 + $0x6] sm:$0x1]
    %v2078 = vld [vmem:[%s2 + $0x7] sm:$0x1]
    %v2079 = vsel %vm139, %v2075, 0.0
    %2080 = vadd.xlane.f32.xlu0 %v2079
    %v2081 = vpop.xlane.xlu0 %2080
    %v2082 = vsel %vm139, %v2076, 0.0
    %2083 = vadd.xlane.f32.xlu0 %v2082
    %v2084 = vpop.xlane.xlu0 %2083
    %v2085 = vmul.f32 %v2081, %v146
    %v2086 = vmul.f32 %v2084, %v146
    %v2087 = vsub.f32 %v2075, %v2085
    %v2088 = vsub.f32 %v2076, %v2086
    %v2089 = vmul.f32 %v2087, %v2087
    %v2090 = vmul.f32 %v2088, %v2088
    %v2091 = vsel %vm139, %v2089, 0.0
    %2092 = vadd.xlane.f32.xlu0 %v2091
    %v2093 = vpop.xlane.xlu0 %2092
    %v2094 = vsel %vm139, %v2090, 0.0
    %2095 = vadd.xlane.f32.xlu0 %v2094
    %v2096 = vpop.xlane.xlu0 %2095
    %v2097 = vmul.f32 %v2093, %v146
    %v2098 = vmul.f32 %v2096, %v146
    %v2099 = vadd.f32 %v2097, 1e-12
    %v2100 = vadd.f32 %v2098, 1e-12
    %v2101 = vrsqrt.pop %v2099
    %v2102 = vrsqrt.pop %v2100
    %v2103 = vmul.f32 %v2087, %v2101
    %v2104 = vmul.f32 %v2088, %v2102
    %v2105 = vlaneseq
    %v2106 = vshrl.u32 %v2105, 7
    %v2107 = vsub.s32 0, %v2106
    %v2108 = vrot.slane %v2077, %v2107
    %v2109 = vmul.f32 %v2103, %v2108
    %v2110 = vmul.f32 %v2104, %v2108
    %v2111 = vlaneseq
    %v2112 = vshrl.u32 %v2111, 7
    %v2113 = vsub.s32 0, %v2112
    %v2114 = vrot.slane %v2078, %v2113
    %v2115 = vadd.f32 %v2109, %v2114
    %v2116 = vadd.f32 %v2110, %v2114
    %s2117 = scalar_lea.vmem %s4, 64
    %v2118 = vld [vmem:[%s2117] sm:$0xff]
    %v2119 = vld [vmem:[%s2117 + $0x8] sm:$0xff]
    %v2120 = vld [vmem:[%s2117 + $0x10] sm:$0xff]
    %v2121 = vld [vmem:[%s2117 + $0x18] sm:$0xff]
    %v2122 = vld [vmem:[%s2117 + $0x20] sm:$0xff]
    %v2123 = vld [vmem:[%s2117 + $0x28] sm:$0xff]
    %v2124 = vld [vmem:[%s2117 + $0x30] sm:$0xff]
    %v2125 = vld [vmem:[%s2117 + $0x38] sm:$0xff]
    %v2126 = vld [vmem:[%s3 + $0x1] sm:$0x1]
    %v2127 = vlaneseq
    %v2128 = vshrl.u32 %v2127, 7
    %v2129 = vsub.s32 0, %v2128
    %v2130 = vrot.slane %v2126, %v2129
    %v2132 = vsel %vm139, %v2115, 0
    %v2135 = vsel %vm139, %v2116, 0
    %2137 = vmatprep.subr.mxu0 0.0
    %2138 = vmatpush1.msra.mxu0 %v2118
    %2139 = vmatprep.subr.mxu0 0.0
    %2140 = vmatpush1.msra.mxu0 %v2120
    %2141 = vmatprep.subr.mxu0 0.0
    %2142 = vmatpush1.msra.mxu0 %v2122
    %2143 = vmatprep.subr.mxu0 0.0
    %2144 = vmatpush1.msra.mxu0 %v2124
    %2145 = vmatprep.subr.mxu0 0.0
    %2146 = vmatpush1.msra.mxu0 0.0
    %2147 = vmatprep.subr.mxu0 0.0
    %2148 = vmatpush1.msra.mxu0 0.0
    %2149 = vmatprep.subr.mxu0 0.0
    %2150 = vmatpush1.msra.mxu0 0.0
    %2151 = vmatprep.subr.mxu0 0.0
    %2152 = vmatpush1.msra.mxu0 0.0
    %2153 = vmatprep.subr.mxu0 0.0
    %2154 = vmatpush1.msra.mxu0 0.0
    %2155 = vmatprep.subr.mxu0 0.0
    %2156 = vmatpush1.msra.mxu0 0.0
    %2157 = vmatprep.subr.mxu0 0.0
    %2158 = vmatpush1.msra.mxu0 0.0
    %2159 = vmatprep.subr.mxu0 0.0
    %2160 = vmatpush1.msra.mxu0 0.0
    %2161 = vmatprep.subr.mxu0 0.0
    %2162 = vmatpush1.msra.mxu0 0.0
    %2163 = vmatprep.subr.mxu0 0.0
    %2164 = vmatpush1.msra.mxu0 0.0
    %2165 = vmatprep.subr.mxu0 0.0
    %2166 = vmatpush1.msra.mxu0 0.0
    %2167 = vmatprep.subr.mxu0 0.0
    %2168 = vmatpush1.msra.mxu0 0.0
    %2169 = vmatprep.subr.mxu0 0.0
    %2170 = vmatpush1.msra.mxu0 0.0
    %2171 = vmatprep.subr.mxu0 0.0
    %2172 = vmatpush1.msra.mxu0 0.0
    %2173 = vmatprep.subr.mxu0 0.0
    %2174 = vmatpush1.msra.mxu0 0.0
    %2175 = vmatprep.subr.mxu0 0.0
    %2176 = vmatpush1.msra.mxu0 0.0
    %2177 = vmatprep.subr.mxu0 0.0
    %2178 = vmatpush1.msra.mxu0 0.0
    %2179 = vmatprep.subr.mxu0 0.0
    %2180 = vmatpush1.msra.mxu0 0.0
    %2181 = vmatprep.subr.mxu0 0.0
    %2182 = vmatpush1.msra.mxu0 0.0
    %2183 = vmatprep.subr.mxu0 0.0
    %2184 = vmatpush1.msra.mxu0 0.0
    %2185 = vmatprep.subr.mxu0 0.0
    %2186 = vmatpush1.msra.mxu0 0.0
    %2187 = vmatprep.subr.mxu0 0.0
    %2188 = vmatpush1.msra.mxu0 0.0
    %2189 = vmatprep.subr.mxu0 0.0
    %2190 = vmatpush1.msra.mxu0 0.0
    %2191 = vmatprep.subr.mxu0 0.0
    %2192 = vmatpush1.msra.mxu0 0.0
    %2193 = vmatprep.subr.mxu0 0.0
    %2194 = vmatpush1.msra.mxu0 0.0
    %2195 = vmatprep.subr.mxu0 0.0
    %2196 = vmatpush1.msra.mxu0 0.0
    %2197 = vmatprep.subr.mxu0 0.0
    %2198 = vmatpush1.msra.mxu0 0.0
    %2199 = vmatprep.subr.mxu0 0.0
    %2200 = vmatpush1.msra.mxu0 0.0
    %2201 = vmatprep.mubr.f32.mxu0 0.0
    %2202 = vmatmul.mubr.f32.gmra.mrb[0].mxu0 %v2132
    %v2203 = vpop.f32.mrb[0].mxu0
    %v2204 = vadd.f32 %v2130, %v2203
    %v2205 = vpop.f32.mrb[0].mxu0
    %2206 = vmatprep.mubr.f32.mxu0 0.0
    %2207 = vmatmul.mubr.f32.gmra.mrb[0].mxu0 %v2135
    %v2208 = vpop.f32.mrb[0].mxu0
    %v2209 = vadd.f32 %v2130, %v2208
    %v2210 = vpop.f32.mrb[0].mxu0
    %2211 = vdwg.mxu0
    %2214 = vrot.lane.b32.xlu0 %v2204, 120
    %v2215 = vpop.permute.xlu0 %2214
    %2216 = vrot.lane.b32.xlu0 %v2209, 120
    %v2217 = vpop.permute.xlu0 %2216
    %2218 = vrot.lane.b32.xlu0 %v2204, 112
    %v2219 = vpop.permute.xlu0 %2218
    %2220 = vrot.lane.b32.xlu0 %v2209, 112
    %v2221 = vpop.permute.xlu0 %2220
    %2222 = vrot.lane.b32.xlu0 %v2204, 104
    %v2223 = vpop.permute.xlu0 %2222
    %2224 = vrot.lane.b32.xlu0 %v2209, 104
    %v2225 = vpop.permute.xlu0 %2224
    %2226 = vrot.lane.b32.xlu0 %v2204, 96
    %v2227 = vpop.permute.xlu0 %2226
    %v2228 = vsel %vm396, %v2204, 0
    %v2230 = vsel %vm396, %v2227, 0
    %2232 = vmatprep.subr.mxu0 0.0
    %2233 = vmatpush1.xpose.msra.mxu0 %v2230
    %2234 = vmatprep.subr.mxu0 0.0
    %2235 = vmatpush1.xpose.msra.mxu0 0.0
    %2236 = vmatprep.subr.mxu0 0.0
    %2237 = vmatpush1.xpose.msra.mxu0 0.0
    %2238 = vmatprep.subr.mxu0 0.0
    %2239 = vmatpush1.xpose.msra.mxu0 0.0
    %2240 = vmatprep.subr.mxu0 0.0
    %2241 = vmatpush1.xpose.msra.mxu0 0.0
    %2242 = vmatprep.subr.mxu0 0.0
    %2243 = vmatpush1.xpose.msra.mxu0 0.0
    %2244 = vmatprep.subr.mxu0 0.0
    %2245 = vmatpush1.xpose.msra.mxu0 0.0
    %2246 = vmatprep.subr.mxu0 0.0
    %2247 = vmatpush1.xpose.msra.mxu0 0.0
    %2248 = vmatprep.subr.mxu0 0.0
    %2249 = vmatpush1.xpose.msra.mxu0 0.0
    %2250 = vmatprep.subr.mxu0 0.0
    %2251 = vmatpush1.xpose.msra.mxu0 0.0
    %2252 = vmatprep.subr.mxu0 0.0
    %2253 = vmatpush1.xpose.msra.mxu0 0.0
    %2254 = vmatprep.subr.mxu0 0.0
    %2255 = vmatpush1.xpose.msra.mxu0 0.0
    %2256 = vmatprep.subr.mxu0 0.0
    %2257 = vmatpush1.xpose.msra.mxu0 0.0
    %2258 = vmatprep.subr.mxu0 0.0
    %2259 = vmatpush1.xpose.msra.mxu0 0.0
    %2260 = vmatprep.subr.mxu0 0.0
    %2261 = vmatpush1.xpose.msra.mxu0 0.0
    %2262 = vmatprep.subr.mxu0 0.0
    %2263 = vmatpush1.xpose.msra.mxu0 0.0
    %2264 = vmatprep.subr.mxu0 0.0
    %2265 = vmatpush1.xpose.msra.mxu0 0.0
    %2266 = vmatprep.subr.mxu0 0.0
    %2267 = vmatpush1.xpose.msra.mxu0 0.0
    %2268 = vmatprep.subr.mxu0 0.0
    %2269 = vmatpush1.xpose.msra.mxu0 0.0
    %2270 = vmatprep.subr.mxu0 0.0
    %2271 = vmatpush1.xpose.msra.mxu0 0.0
    %2272 = vmatprep.subr.mxu0 0.0
    %2273 = vmatpush1.xpose.msra.mxu0 0.0
    %2274 = vmatprep.subr.mxu0 0.0
    %2275 = vmatpush1.xpose.msra.mxu0 0.0
    %2276 = vmatprep.subr.mxu0 0.0
    %2277 = vmatpush1.xpose.msra.mxu0 0.0
    %2278 = vmatprep.subr.mxu0 0.0
    %2279 = vmatpush1.xpose.msra.mxu0 0.0
    %2280 = vmatprep.subr.mxu0 0.0
    %2281 = vmatpush1.xpose.msra.mxu0 0.0
    %2282 = vmatprep.subr.mxu0 0.0
    %2283 = vmatpush1.xpose.msra.mxu0 0.0
    %2284 = vmatprep.subr.mxu0 0.0
    %2285 = vmatpush1.xpose.msra.mxu0 0.0
    %2286 = vmatprep.subr.mxu0 0.0
    %2287 = vmatpush1.xpose.msra.mxu0 0.0
    %2288 = vmatprep.subr.mxu0 0.0
    %2289 = vmatpush1.xpose.msra.mxu0 0.0
    %2290 = vmatprep.subr.mxu0 0.0
    %2291 = vmatpush1.xpose.msra.mxu0 0.0
    %2292 = vmatprep.subr.mxu0 0.0
    %2293 = vmatpush1.xpose.msra.mxu0 0.0
    %2294 = vmatprep.subr.mxu0 0.0
    %2295 = vmatpush1.xpose.msra.mxu0 0.0
    %2296 = vmatprep.mubr.f32.mxu0 0.0
    %2297 = vmatmul.mubr.f32.gmra.mrb[0].mxu0 %v2228
    %v2298 = vpop.f32.mrb[0].mxu0
    %v2299 = vadd.f32 %v357, %v2298
    %v2300 = vpop.f32.mrb[0].mxu0
    %2301 = vdwg.mxu0
    %2302 = vrot.lane.b32.xlu0 %v2209, 96
    %v2303 = vpop.permute.xlu0 %2302
    %v2304 = vsel %vm396, %v2209, 0
    %v2306 = vsel %vm396, %v2303, 0
    %2308 = vmatprep.subr.mxu0 0.0
    %2309 = vmatpush1.xpose.msra.mxu0 %v2306
    %2310 = vmatprep.subr.mxu0 0.0
    %2311 = vmatpush1.xpose.msra.mxu0 0.0
    %2312 = vmatprep.subr.mxu0 0.0
    %2313 = vmatpush1.xpose.msra.mxu0 0.0
    %2314 = vmatprep.subr.mxu0 0.0
    %2315 = vmatpush1.xpose.msra.mxu0 0.0
    %2316 = vmatprep.subr.mxu0 0.0
    %2317 = vmatpush1.xpose.msra.mxu0 0.0
    %2318 = vmatprep.subr.mxu0 0.0
    %2319 = vmatpush1.xpose.msra.mxu0 0.0
    %2320 = vmatprep.subr.mxu0 0.0
    %2321 = vmatpush1.xpose.msra.mxu0 0.0
    %2322 = vmatprep.subr.mxu0 0.0
    %2323 = vmatpush1.xpose.msra.mxu0 0.0
    %2324 = vmatprep.subr.mxu0 0.0
    %2325 = vmatpush1.xpose.msra.mxu0 0.0
    %2326 = vmatprep.subr.mxu0 0.0
    %2327 = vmatpush1.xpose.msra.mxu0 0.0
    %2328 = vmatprep.subr.mxu0 0.0
    %2329 = vmatpush1.xpose.msra.mxu0 0.0
    %2330 = vmatprep.subr.mxu0 0.0
    %2331 = vmatpush1.xpose.msra.mxu0 0.0
    %2332 = vmatprep.subr.mxu0 0.0
    %2333 = vmatpush1.xpose.msra.mxu0 0.0
    %2334 = vmatprep.subr.mxu0 0.0
    %2335 = vmatpush1.xpose.msra.mxu0 0.0
    %2336 = vmatprep.subr.mxu0 0.0
    %2337 = vmatpush1.xpose.msra.mxu0 0.0
    %2338 = vmatprep.subr.mxu0 0.0
    %2339 = vmatpush1.xpose.msra.mxu0 0.0
    %2340 = vmatprep.subr.mxu0 0.0
    %2341 = vmatpush1.xpose.msra.mxu0 0.0
    %2342 = vmatprep.subr.mxu0 0.0
    %2343 = vmatpush1.xpose.msra.mxu0 0.0
    %2344 = vmatprep.subr.mxu0 0.0
    %2345 = vmatpush1.xpose.msra.mxu0 0.0
    %2346 = vmatprep.subr.mxu0 0.0
    %2347 = vmatpush1.xpose.msra.mxu0 0.0
    %2348 = vmatprep.subr.mxu0 0.0
    %2349 = vmatpush1.xpose.msra.mxu0 0.0
    %2350 = vmatprep.subr.mxu0 0.0
    %2351 = vmatpush1.xpose.msra.mxu0 0.0
    %2352 = vmatprep.subr.mxu0 0.0
    %2353 = vmatpush1.xpose.msra.mxu0 0.0
    %2354 = vmatprep.subr.mxu0 0.0
    %2355 = vmatpush1.xpose.msra.mxu0 0.0
    %2356 = vmatprep.subr.mxu0 0.0
    %2357 = vmatpush1.xpose.msra.mxu0 0.0
    %2358 = vmatprep.subr.mxu0 0.0
    %2359 = vmatpush1.xpose.msra.mxu0 0.0
    %2360 = vmatprep.subr.mxu0 0.0
    %2361 = vmatpush1.xpose.msra.mxu0 0.0
    %2362 = vmatprep.subr.mxu0 0.0
    %2363 = vmatpush1.xpose.msra.mxu0 0.0
    %2364 = vmatprep.subr.mxu0 0.0
    %2365 = vmatpush1.xpose.msra.mxu0 0.0
    %2366 = vmatprep.subr.mxu0 0.0
    %2367 = vmatpush1.xpose.msra.mxu0 0.0
    %2368 = vmatprep.subr.mxu0 0.0
    %2369 = vmatpush1.xpose.msra.mxu0 0.0
    %2370 = vmatprep.subr.mxu0 0.0
    %2371 = vmatpush1.xpose.msra.mxu0 0.0
    %2372 = vmatprep.mubr.f32.mxu0 0.0
    %2373 = vmatmul.mubr.f32.gmra.mrb[0].mxu0 %v2304
    %v2374 = vpop.f32.mrb[0].mxu0
    %v2375 = vadd.f32 %v361, %v2374
    %v2376 = vpop.f32.mrb[0].mxu0
    %2377 = vdwg.mxu0
    %2378 = vrot.lane.b32.xlu0 %v2215, 96
    %v2379 = vpop.permute.xlu0 %2378
    %v2380 = vsel %vm396, %v2215, 0
    %v2382 = vsel %vm396, %v2379, 0
    %2384 = vmatprep.subr.mxu0 0.0
    %2385 = vmatpush1.xpose.msra.mxu0 %v2382
    %2386 = vmatprep.subr.mxu0 0.0
    %2387 = vmatpush1.xpose.msra.mxu0 0.0
    %2388 = vmatprep.subr.mxu0 0.0
    %2389 = vmatpush1.xpose.msra.mxu0 0.0
    %2390 = vmatprep.subr.mxu0 0.0
    %2391 = vmatpush1.xpose.msra.mxu0 0.0
    %2392 = vmatprep.subr.mxu0 0.0
    %2393 = vmatpush1.xpose.msra.mxu0 0.0
    %2394 = vmatprep.subr.mxu0 0.0
    %2395 = vmatpush1.xpose.msra.mxu0 0.0
    %2396 = vmatprep.subr.mxu0 0.0
    %2397 = vmatpush1.xpose.msra.mxu0 0.0
    %2398 = vmatprep.subr.mxu0 0.0
    %2399 = vmatpush1.xpose.msra.mxu0 0.0
    %2400 = vmatprep.subr.mxu0 0.0
    %2401 = vmatpush1.xpose.msra.mxu0 0.0
    %2402 = vmatprep.subr.mxu0 0.0
    %2403 = vmatpush1.xpose.msra.mxu0 0.0
    %2404 = vmatprep.subr.mxu0 0.0
    %2405 = vmatpush1.xpose.msra.mxu0 0.0
    %2406 = vmatprep.subr.mxu0 0.0
    %2407 = vmatpush1.xpose.msra.mxu0 0.0
    %2408 = vmatprep.subr.mxu0 0.0
    %2409 = vmatpush1.xpose.msra.mxu0 0.0
    %2410 = vmatprep.subr.mxu0 0.0
    %2411 = vmatpush1.xpose.msra.mxu0 0.0
    %2412 = vmatprep.subr.mxu0 0.0
    %2413 = vmatpush1.xpose.msra.mxu0 0.0
    %2414 = vmatprep.subr.mxu0 0.0
    %2415 = vmatpush1.xpose.msra.mxu0 0.0
    %2416 = vmatprep.subr.mxu0 0.0
    %2417 = vmatpush1.xpose.msra.mxu0 0.0
    %2418 = vmatprep.subr.mxu0 0.0
    %2419 = vmatpush1.xpose.msra.mxu0 0.0
    %2420 = vmatprep.subr.mxu0 0.0
    %2421 = vmatpush1.xpose.msra.mxu0 0.0
    %2422 = vmatprep.subr.mxu0 0.0
    %2423 = vmatpush1.xpose.msra.mxu0 0.0
    %2424 = vmatprep.subr.mxu0 0.0
    %2425 = vmatpush1.xpose.msra.mxu0 0.0
    %2426 = vmatprep.subr.mxu0 0.0
    %2427 = vmatpush1.xpose.msra.mxu0 0.0
    %2428 = vmatprep.subr.mxu0 0.0
    %2429 = vmatpush1.xpose.msra.mxu0 0.0
    %2430 = vmatprep.subr.mxu0 0.0
    %2431 = vmatpush1.xpose.msra.mxu0 0.0
    %2432 = vmatprep.subr.mxu0 0.0
    %2433 = vmatpush1.xpose.msra.mxu0 0.0
    %2434 = vmatprep.subr.mxu0 0.0
    %2435 = vmatpush1.xpose.msra.mxu0 0.0
    %2436 = vmatprep.subr.mxu0 0.0
    %2437 = vmatpush1.xpose.msra.mxu0 0.0
    %2438 = vmatprep.subr.mxu0 0.0
    %2439 = vmatpush1.xpose.msra.mxu0 0.0
    %2440 = vmatprep.subr.mxu0 0.0
    %2441 = vmatpush1.xpose.msra.mxu0 0.0
    %2442 = vmatprep.subr.mxu0 0.0
    %2443 = vmatpush1.xpose.msra.mxu0 0.0
    %2444 = vmatprep.subr.mxu0 0.0
    %2445 = vmatpush1.xpose.msra.mxu0 0.0
    %2446 = vmatprep.subr.mxu0 0.0
    %2447 = vmatpush1.xpose.msra.mxu0 0.0
    %2448 = vmatprep.mubr.f32.mxu0 0.0
    %2449 = vmatmul.mubr.f32.gmra.mrb[0].mxu0 %v2380
    %v2450 = vpop.f32.mrb[0].mxu0
    %v2451 = vadd.f32 %v365, %v2450
    %v2452 = vpop.f32.mrb[0].mxu0
    %2453 = vdwg.mxu0
    %2454 = vrot.lane.b32.xlu0 %v2217, 96
    %v2455 = vpop.permute.xlu0 %2454
    %v2456 = vsel %vm396, %v2217, 0
    %v2458 = vsel %vm396, %v2455, 0
    %2460 = vmatprep.subr.mxu0 0.0
    %2461 = vmatpush1.xpose.msra.mxu0 %v2458
    %2462 = vmatprep.subr.mxu0 0.0
    %2463 = vmatpush1.xpose.msra.mxu0 0.0
    %2464 = vmatprep.subr.mxu0 0.0
    %2465 = vmatpush1.xpose.msra.mxu0 0.0
    %2466 = vmatprep.subr.mxu0 0.0
    %2467 = vmatpush1.xpose.msra.mxu0 0.0
    %2468 = vmatprep.subr.mxu0 0.0
    %2469 = vmatpush1.xpose.msra.mxu0 0.0
    %2470 = vmatprep.subr.mxu0 0.0
    %2471 = vmatpush1.xpose.msra.mxu0 0.0
    %2472 = vmatprep.subr.mxu0 0.0
    %2473 = vmatpush1.xpose.msra.mxu0 0.0
    %2474 = vmatprep.subr.mxu0 0.0
    %2475 = vmatpush1.xpose.msra.mxu0 0.0
    %2476 = vmatprep.subr.mxu0 0.0
    %2477 = vmatpush1.xpose.msra.mxu0 0.0
    %2478 = vmatprep.subr.mxu0 0.0
    %2479 = vmatpush1.xpose.msra.mxu0 0.0
    %2480 = vmatprep.subr.mxu0 0.0
    %2481 = vmatpush1.xpose.msra.mxu0 0.0
    %2482 = vmatprep.subr.mxu0 0.0
    %2483 = vmatpush1.xpose.msra.mxu0 0.0
    %2484 = vmatprep.subr.mxu0 0.0
    %2485 = vmatpush1.xpose.msra.mxu0 0.0
    %2486 = vmatprep.subr.mxu0 0.0
    %2487 = vmatpush1.xpose.msra.mxu0 0.0
    %2488 = vmatprep.subr.mxu0 0.0
    %2489 = vmatpush1.xpose.msra.mxu0 0.0
    %2490 = vmatprep.subr.mxu0 0.0
    %2491 = vmatpush1.xpose.msra.mxu0 0.0
    %2492 = vmatprep.subr.mxu0 0.0
    %2493 = vmatpush1.xpose.msra.mxu0 0.0
    %2494 = vmatprep.subr.mxu0 0.0
    %2495 = vmatpush1.xpose.msra.mxu0 0.0
    %2496 = vmatprep.subr.mxu0 0.0
    %2497 = vmatpush1.xpose.msra.mxu0 0.0
    %2498 = vmatprep.subr.mxu0 0.0
    %2499 = vmatpush1.xpose.msra.mxu0 0.0
    %2500 = vmatprep.subr.mxu0 0.0
    %2501 = vmatpush1.xpose.msra.mxu0 0.0
    %2502 = vmatprep.subr.mxu0 0.0
    %2503 = vmatpush1.xpose.msra.mxu0 0.0
    %2504 = vmatprep.subr.mxu0 0.0
    %2505 = vmatpush1.xpose.msra.mxu0 0.0
    %2506 = vmatprep.subr.mxu0 0.0
    %2507 = vmatpush1.xpose.msra.mxu0 0.0
    %2508 = vmatprep.subr.mxu0 0.0
    %2509 = vmatpush1.xpose.msra.mxu0 0.0
    %2510 = vmatprep.subr.mxu0 0.0
    %2511 = vmatpush1.xpose.msra.mxu0 0.0
    %2512 = vmatprep.subr.mxu0 0.0
    %2513 = vmatpush1.xpose.msra.mxu0 0.0
    %2514 = vmatprep.subr.mxu0 0.0
    %2515 = vmatpush1.xpose.msra.mxu0 0.0
    %2516 = vmatprep.subr.mxu0 0.0
    %2517 = vmatpush1.xpose.msra.mxu0 0.0
    %2518 = vmatprep.subr.mxu0 0.0
    %2519 = vmatpush1.xpose.msra.mxu0 0.0
    %2520 = vmatprep.subr.mxu0 0.0
    %2521 = vmatpush1.xpose.msra.mxu0 0.0
    %2522 = vmatprep.subr.mxu0 0.0
    %2523 = vmatpush1.xpose.msra.mxu0 0.0
    %2524 = vmatprep.mubr.f32.mxu0 0.0
    %2525 = vmatmul.mubr.f32.gmra.mrb[0].mxu0 %v2456
    %v2526 = vpop.f32.mrb[0].mxu0
    %v2527 = vadd.f32 %v369, %v2526
    %v2528 = vpop.f32.mrb[0].mxu0
    %2529 = vdwg.mxu0
    %2530 = vrot.lane.b32.xlu0 %v2219, 96
    %v2531 = vpop.permute.xlu0 %2530
    %v2532 = vsel %vm396, %v2219, 0
    %v2534 = vsel %vm396, %v2531, 0
    %2536 = vmatprep.subr.mxu0 0.0
    %2537 = vmatpush1.xpose.msra.mxu0 %v2534
    %2538 = vmatprep.subr.mxu0 0.0
    %2539 = vmatpush1.xpose.msra.mxu0 0.0
    %2540 = vmatprep.subr.mxu0 0.0
    %2541 = vmatpush1.xpose.msra.mxu0 0.0
    %2542 = vmatprep.subr.mxu0 0.0
    %2543 = vmatpush1.xpose.msra.mxu0 0.0
    %2544 = vmatprep.subr.mxu0 0.0
    %2545 = vmatpush1.xpose.msra.mxu0 0.0
    %2546 = vmatprep.subr.mxu0 0.0
    %2547 = vmatpush1.xpose.msra.mxu0 0.0
    %2548 = vmatprep.subr.mxu0 0.0
    %2549 = vmatpush1.xpose.msra.mxu0 0.0
    %2550 = vmatprep.subr.mxu0 0.0
    %2551 = vmatpush1.xpose.msra.mxu0 0.0
    %2552 = vmatprep.subr.mxu0 0.0
    %2553 = vmatpush1.xpose.msra.mxu0 0.0
    %2554 = vmatprep.subr.mxu0 0.0
    %2555 = vmatpush1.xpose.msra.mxu0 0.0
    %2556 = vmatprep.subr.mxu0 0.0
    %2557 = vmatpush1.xpose.msra.mxu0 0.0
    %2558 = vmatprep.subr.mxu0 0.0
    %2559 = vmatpush1.xpose.msra.mxu0 0.0
    %2560 = vmatprep.subr.mxu0 0.0
    %2561 = vmatpush1.xpose.msra.mxu0 0.0
    %2562 = vmatprep.subr.mxu0 0.0
    %2563 = vmatpush1.xpose.msra.mxu0 0.0
    %2564 = vmatprep.subr.mxu0 0.0
    %2565 = vmatpush1.xpose.msra.mxu0 0.0
    %2566 = vmatprep.subr.mxu0 0.0
    %2567 = vmatpush1.xpose.msra.mxu0 0.0
    %2568 = vmatprep.subr.mxu0 0.0
    %2569 = vmatpush1.xpose.msra.mxu0 0.0
    %2570 = vmatprep.subr.mxu0 0.0
    %2571 = vmatpush1.xpose.msra.mxu0 0.0
    %2572 = vmatprep.subr.mxu0 0.0
    %2573 = vmatpush1.xpose.msra.mxu0 0.0
    %2574 = vmatprep.subr.mxu0 0.0
    %2575 = vmatpush1.xpose.msra.mxu0 0.0
    %2576 = vmatprep.subr.mxu0 0.0
    %2577 = vmatpush1.xpose.msra.mxu0 0.0
    %2578 = vmatprep.subr.mxu0 0.0
    %2579 = vmatpush1.xpose.msra.mxu0 0.0
    %2580 = vmatprep.subr.mxu0 0.0
    %2581 = vmatpush1.xpose.msra.mxu0 0.0
    %2582 = vmatprep.subr.mxu0 0.0
    %2583 = vmatpush1.xpose.msra.mxu0 0.0
    %2584 = vmatprep.subr.mxu0 0.0
    %2585 = vmatpush1.xpose.msra.mxu0 0.0
    %2586 = vmatprep.subr.mxu0 0.0
    %2587 = vmatpush1.xpose.msra.mxu0 0.0
    %2588 = vmatprep.subr.mxu0 0.0
    %2589 = vmatpush1.xpose.msra.mxu0 0.0
    %2590 = vmatprep.subr.mxu0 0.0
    %2591 = vmatpush1.xpose.msra.mxu0 0.0
    %2592 = vmatprep.subr.mxu0 0.0
    %2593 = vmatpush1.xpose.msra.mxu0 0.0
    %2594 = vmatprep.subr.mxu0 0.0
    %2595 = vmatpush1.xpose.msra.mxu0 0.0
    %2596 = vmatprep.subr.mxu0 0.0
    %2597 = vmatpush1.xpose.msra.mxu0 0.0
    %2598 = vmatprep.subr.mxu0 0.0
    %2599 = vmatpush1.xpose.msra.mxu0 0.0
    %2600 = vmatprep.mubr.f32.mxu0 0.0
    %2601 = vmatmul.mubr.f32.gmra.mrb[0].mxu0 %v2532
    %v2602 = vpop.f32.mrb[0].mxu0
    %v2603 = vadd.f32 %v373, %v2602
    %v2604 = vpop.f32.mrb[0].mxu0
    %2605 = vdwg.mxu0
    %2606 = vrot.lane.b32.xlu0 %v2221, 96
    %v2607 = vpop.permute.xlu0 %2606
    %v2608 = vsel %vm396, %v2221, 0
    %v2610 = vsel %vm396, %v2607, 0
    %2612 = vmatprep.subr.mxu0 0.0
    %2613 = vmatpush1.xpose.msra.mxu0 %v2610
    %2614 = vmatprep.subr.mxu0 0.0
    %2615 = vmatpush1.xpose.msra.mxu0 0.0
    %2616 = vmatprep.subr.mxu0 0.0
    %2617 = vmatpush1.xpose.msra.mxu0 0.0
    %2618 = vmatprep.subr.mxu0 0.0
    %2619 = vmatpush1.xpose.msra.mxu0 0.0
    %2620 = vmatprep.subr.mxu0 0.0
    %2621 = vmatpush1.xpose.msra.mxu0 0.0
    %2622 = vmatprep.subr.mxu0 0.0
    %2623 = vmatpush1.xpose.msra.mxu0 0.0
    %2624 = vmatprep.subr.mxu0 0.0
    %2625 = vmatpush1.xpose.msra.mxu0 0.0
    %2626 = vmatprep.subr.mxu0 0.0
    %2627 = vmatpush1.xpose.msra.mxu0 0.0
    %2628 = vmatprep.subr.mxu0 0.0
    %2629 = vmatpush1.xpose.msra.mxu0 0.0
    %2630 = vmatprep.subr.mxu0 0.0
    %2631 = vmatpush1.xpose.msra.mxu0 0.0
    %2632 = vmatprep.subr.mxu0 0.0
    %2633 = vmatpush1.xpose.msra.mxu0 0.0
    %2634 = vmatprep.subr.mxu0 0.0
    %2635 = vmatpush1.xpose.msra.mxu0 0.0
    %2636 = vmatprep.subr.mxu0 0.0
    %2637 = vmatpush1.xpose.msra.mxu0 0.0
    %2638 = vmatprep.subr.mxu0 0.0
    %2639 = vmatpush1.xpose.msra.mxu0 0.0
    %2640 = vmatprep.subr.mxu0 0.0
    %2641 = vmatpush1.xpose.msra.mxu0 0.0
    %2642 = vmatprep.subr.mxu0 0.0
    %2643 = vmatpush1.xpose.msra.mxu0 0.0
    %2644 = vmatprep.subr.mxu0 0.0
    %2645 = vmatpush1.xpose.msra.mxu0 0.0
    %2646 = vmatprep.subr.mxu0 0.0
    %2647 = vmatpush1.xpose.msra.mxu0 0.0
    %2648 = vmatprep.subr.mxu0 0.0
    %2649 = vmatpush1.xpose.msra.mxu0 0.0
    %2650 = vmatprep.subr.mxu0 0.0
    %2651 = vmatpush1.xpose.msra.mxu0 0.0
    %2652 = vmatprep.subr.mxu0 0.0
    %2653 = vmatpush1.xpose.msra.mxu0 0.0
    %2654 = vmatprep.subr.mxu0 0.0
    %2655 = vmatpush1.xpose.msra.mxu0 0.0
    %2656 = vmatprep.subr.mxu0 0.0
    %2657 = vmatpush1.xpose.msra.mxu0 0.0
    %2658 = vmatprep.subr.mxu0 0.0
    %2659 = vmatpush1.xpose.msra.mxu0 0.0
    %2660 = vmatprep.subr.mxu0 0.0
    %2661 = vmatpush1.xpose.msra.mxu0 0.0
    %2662 = vmatprep.subr.mxu0 0.0
    %2663 = vmatpush1.xpose.msra.mxu0 0.0
    %2664 = vmatprep.subr.mxu0 0.0
    %2665 = vmatpush1.xpose.msra.mxu0 0.0
    %2666 = vmatprep.subr.mxu0 0.0
    %2667 = vmatpush1.xpose.msra.mxu0 0.0
    %2668 = vmatprep.subr.mxu0 0.0
    %2669 = vmatpush1.xpose.msra.mxu0 0.0
    %2670 = vmatprep.subr.mxu0 0.0
    %2671 = vmatpush1.xpose.msra.mxu0 0.0
    %2672 = vmatprep.subr.mxu0 0.0
    %2673 = vmatpush1.xpose.msra.mxu0 0.0
    %2674 = vmatprep.subr.mxu0 0.0
    %2675 = vmatpush1.xpose.msra.mxu0 0.0
    %2676 = vmatprep.mubr.f32.mxu0 0.0
    %2677 = vmatmul.mubr.f32.gmra.mrb[0].mxu0 %v2608
    %v2678 = vpop.f32.mrb[0].mxu0
    %v2679 = vadd.f32 %v377, %v2678
    %v2680 = vpop.f32.mrb[0].mxu0
    %2681 = vdwg.mxu0
    %2682 = vrot.lane.b32.xlu0 %v2223, 96
    %v2683 = vpop.permute.xlu0 %2682
    %v2684 = vsel %vm396, %v2223, 0
    %v2686 = vsel %vm396, %v2683, 0
    %2688 = vmatprep.subr.mxu0 0.0
    %2689 = vmatpush1.xpose.msra.mxu0 %v2686
    %2690 = vmatprep.subr.mxu0 0.0
    %2691 = vmatpush1.xpose.msra.mxu0 0.0
    %2692 = vmatprep.subr.mxu0 0.0
    %2693 = vmatpush1.xpose.msra.mxu0 0.0
    %2694 = vmatprep.subr.mxu0 0.0
    %2695 = vmatpush1.xpose.msra.mxu0 0.0
    %2696 = vmatprep.subr.mxu0 0.0
    %2697 = vmatpush1.xpose.msra.mxu0 0.0
    %2698 = vmatprep.subr.mxu0 0.0
    %2699 = vmatpush1.xpose.msra.mxu0 0.0
    %2700 = vmatprep.subr.mxu0 0.0
    %2701 = vmatpush1.xpose.msra.mxu0 0.0
    %2702 = vmatprep.subr.mxu0 0.0
    %2703 = vmatpush1.xpose.msra.mxu0 0.0
    %2704 = vmatprep.subr.mxu0 0.0
    %2705 = vmatpush1.xpose.msra.mxu0 0.0
    %2706 = vmatprep.subr.mxu0 0.0
    %2707 = vmatpush1.xpose.msra.mxu0 0.0
    %2708 = vmatprep.subr.mxu0 0.0
    %2709 = vmatpush1.xpose.msra.mxu0 0.0
    %2710 = vmatprep.subr.mxu0 0.0
    %2711 = vmatpush1.xpose.msra.mxu0 0.0
    %2712 = vmatprep.subr.mxu0 0.0
    %2713 = vmatpush1.xpose.msra.mxu0 0.0
    %2714 = vmatprep.subr.mxu0 0.0
    %2715 = vmatpush1.xpose.msra.mxu0 0.0
    %2716 = vmatprep.subr.mxu0 0.0
    %2717 = vmatpush1.xpose.msra.mxu0 0.0
    %2718 = vmatprep.subr.mxu0 0.0
    %2719 = vmatpush1.xpose.msra.mxu0 0.0
    %2720 = vmatprep.subr.mxu0 0.0
    %2721 = vmatpush1.xpose.msra.mxu0 0.0
    %2722 = vmatprep.subr.mxu0 0.0
    %2723 = vmatpush1.xpose.msra.mxu0 0.0
    %2724 = vmatprep.subr.mxu0 0.0
    %2725 = vmatpush1.xpose.msra.mxu0 0.0
    %2726 = vmatprep.subr.mxu0 0.0
    %2727 = vmatpush1.xpose.msra.mxu0 0.0
    %2728 = vmatprep.subr.mxu0 0.0
    %2729 = vmatpush1.xpose.msra.mxu0 0.0
    %2730 = vmatprep.subr.mxu0 0.0
    %2731 = vmatpush1.xpose.msra.mxu0 0.0
    %2732 = vmatprep.subr.mxu0 0.0
    %2733 = vmatpush1.xpose.msra.mxu0 0.0
    %2734 = vmatprep.subr.mxu0 0.0
    %2735 = vmatpush1.xpose.msra.mxu0 0.0
    %2736 = vmatprep.subr.mxu0 0.0
    %2737 = vmatpush1.xpose.msra.mxu0 0.0
    %2738 = vmatprep.subr.mxu0 0.0
    %2739 = vmatpush1.xpose.msra.mxu0 0.0
    %2740 = vmatprep.subr.mxu0 0.0
    %2741 = vmatpush1.xpose.msra.mxu0 0.0
    %2742 = vmatprep.subr.mxu0 0.0
    %2743 = vmatpush1.xpose.msra.mxu0 0.0
    %2744 = vmatprep.subr.mxu0 0.0
    %2745 = vmatpush1.xpose.msra.mxu0 0.0
    %2746 = vmatprep.subr.mxu0 0.0
    %2747 = vmatpush1.xpose.msra.mxu0 0.0
    %2748 = vmatprep.subr.mxu0 0.0
    %2749 = vmatpush1.xpose.msra.mxu0 0.0
    %2750 = vmatprep.subr.mxu0 0.0
    %2751 = vmatpush1.xpose.msra.mxu0 0.0
    %2752 = vmatprep.mubr.f32.mxu0 0.0
    %2753 = vmatmul.mubr.f32.gmra.mrb[0].mxu0 %v2684
    %v2754 = vpop.f32.mrb[0].mxu0
    %v2755 = vadd.f32 %v381, %v2754
    %v2756 = vpop.f32.mrb[0].mxu0
    %2757 = vdwg.mxu0
    %2758 = vrot.lane.b32.xlu0 %v2225, 96
    %v2759 = vpop.permute.xlu0 %2758
    %v2760 = vsel %vm396, %v2225, 0
    %v2762 = vsel %vm396, %v2759, 0
    %2764 = vmatprep.subr.mxu0 0.0
    %2765 = vmatpush1.xpose.msra.mxu0 %v2762
    %2766 = vmatprep.subr.mxu0 0.0
    %2767 = vmatpush1.xpose.msra.mxu0 0.0
    %2768 = vmatprep.subr.mxu0 0.0
    %2769 = vmatpush1.xpose.msra.mxu0 0.0
    %2770 = vmatprep.subr.mxu0 0.0
    %2771 = vmatpush1.xpose.msra.mxu0 0.0
    %2772 = vmatprep.subr.mxu0 0.0
    %2773 = vmatpush1.xpose.msra.mxu0 0.0
    %2774 = vmatprep.subr.mxu0 0.0
    %2775 = vmatpush1.xpose.msra.mxu0 0.0
    %2776 = vmatprep.subr.mxu0 0.0
    %2777 = vmatpush1.xpose.msra.mxu0 0.0
    %2778 = vmatprep.subr.mxu0 0.0
    %2779 = vmatpush1.xpose.msra.mxu0 0.0
    %2780 = vmatprep.subr.mxu0 0.0
    %2781 = vmatpush1.xpose.msra.mxu0 0.0
    %2782 = vmatprep.subr.mxu0 0.0
    %2783 = vmatpush1.xpose.msra.mxu0 0.0
    %2784 = vmatprep.subr.mxu0 0.0
    %2785 = vmatpush1.xpose.msra.mxu0 0.0
    %2786 = vmatprep.subr.mxu0 0.0
    %2787 = vmatpush1.xpose.msra.mxu0 0.0
    %2788 = vmatprep.subr.mxu0 0.0
    %2789 = vmatpush1.xpose.msra.mxu0 0.0
    %2790 = vmatprep.subr.mxu0 0.0
    %2791 = vmatpush1.xpose.msra.mxu0 0.0
    %2792 = vmatprep.subr.mxu0 0.0
    %2793 = vmatpush1.xpose.msra.mxu0 0.0
    %2794 = vmatprep.subr.mxu0 0.0
    %2795 = vmatpush1.xpose.msra.mxu0 0.0
    %2796 = vmatprep.subr.mxu0 0.0
    %2797 = vmatpush1.xpose.msra.mxu0 0.0
    %2798 = vmatprep.subr.mxu0 0.0
    %2799 = vmatpush1.xpose.msra.mxu0 0.0
    %2800 = vmatprep.subr.mxu0 0.0
    %2801 = vmatpush1.xpose.msra.mxu0 0.0
    %2802 = vmatprep.subr.mxu0 0.0
    %2803 = vmatpush1.xpose.msra.mxu0 0.0
    %2804 = vmatprep.subr.mxu0 0.0
    %2805 = vmatpush1.xpose.msra.mxu0 0.0
    %2806 = vmatprep.subr.mxu0 0.0
    %2807 = vmatpush1.xpose.msra.mxu0 0.0
    %2808 = vmatprep.subr.mxu0 0.0
    %2809 = vmatpush1.xpose.msra.mxu0 0.0
    %2810 = vmatprep.subr.mxu0 0.0
    %2811 = vmatpush1.xpose.msra.mxu0 0.0
    %2812 = vmatprep.subr.mxu0 0.0
    %2813 = vmatpush1.xpose.msra.mxu0 0.0
    %2814 = vmatprep.subr.mxu0 0.0
    %2815 = vmatpush1.xpose.msra.mxu0 0.0
    %2816 = vmatprep.subr.mxu0 0.0
    %2817 = vmatpush1.xpose.msra.mxu0 0.0
    %2818 = vmatprep.subr.mxu0 0.0
    %2819 = vmatpush1.xpose.msra.mxu0 0.0
    %2820 = vmatprep.subr.mxu0 0.0
    %2821 = vmatpush1.xpose.msra.mxu0 0.0
    %2822 = vmatprep.subr.mxu0 0.0
    %2823 = vmatpush1.xpose.msra.mxu0 0.0
    %2824 = vmatprep.subr.mxu0 0.0
    %2825 = vmatpush1.xpose.msra.mxu0 0.0
    %2826 = vmatprep.subr.mxu0 0.0
    %2827 = vmatpush1.xpose.msra.mxu0 0.0
    %2828 = vmatprep.mubr.f32.mxu0 0.0
    %2829 = vmatmul.mubr.f32.gmra.mrb[0].mxu0 %v2760
    %v2830 = vpop.f32.mrb[0].mxu0
    %v2831 = vadd.f32 %v385, %v2830
    %v2832 = vpop.f32.mrb[0].mxu0
    %2833 = vdwg.mxu0
    %v2834 = vsel %vm396, %v2299, -inf
    %2835 = vmax.xlane.f32.xlu0 %v2834
    %v2836 = vpop.xlane.xlu0 %2835
    %v2837 = vsel %vm396, %v2375, -inf
    %2838 = vmax.xlane.f32.xlu0 %v2837
    %v2839 = vpop.xlane.xlu0 %2838
    %v2840 = vsel %vm396, %v2451, -inf
    %2841 = vmax.xlane.f32.xlu0 %v2840
    %v2842 = vpop.xlane.xlu0 %2841
    %v2843 = vsel %vm396, %v2527, -inf
    %2844 = vmax.xlane.f32.xlu0 %v2843
    %v2845 = vpop.xlane.xlu0 %2844
    %v2846 = vsel %vm396, %v2603, -inf
    %2847 = vmax.xlane.f32.xlu0 %v2846
    %v2848 = vpop.xlane.xlu0 %2847
    %v2849 = vsel %vm396, %v2679, -inf
    %2850 = vmax.xlane.f32.xlu0 %v2849
    %v2851 = vpop.xlane.xlu0 %2850
    %v2852 = vsel %vm396, %v2755, -inf
    %2853 = vmax.xlane.f32.xlu0 %v2852
    %v2854 = vpop.xlane.xlu0 %2853
    %v2855 = vsel %vm396, %v2831, -inf
    %2856 = vmax.xlane.f32.xlu0 %v2855
    %v2857 = vpop.xlane.xlu0 %2856
    %v2858 = vsub.f32 %v2299, %v2836
    %v2859 = vsub.f32 %v2375, %v2839
    %v2860 = vsub.f32 %v2451, %v2842
    %v2861 = vsub.f32 %v2527, %v2845
    %v2862 = vsub.f32 %v2603, %v2848
    %v2863 = vsub.f32 %v2679, %v2851
    %v2864 = vsub.f32 %v2755, %v2854
    %v2865 = vsub.f32 %v2831, %v2857
    %v2866 = vmul.f32 %v2858, 1.442695
    %v2867 = vpow.pop %v2866
    %v2868 = vmul.f32 %v2859, 1.442695
    %v2869 = vpow.pop %v2868
    %v2870 = vmul.f32 %v2860, 1.442695
    %v2871 = vpow.pop %v2870
    %v2872 = vmul.f32 %v2861, 1.442695
    %v2873 = vpow.pop %v2872
    %v2874 = vmul.f32 %v2862, 1.442695
    %v2875 = vpow.pop %v2874
    %v2876 = vmul.f32 %v2863, 1.442695
    %v2877 = vpow.pop %v2876
    %v2878 = vmul.f32 %v2864, 1.442695
    %v2879 = vpow.pop %v2878
    %v2880 = vmul.f32 %v2865, 1.442695
    %v2881 = vpow.pop %v2880
    %v2882 = vsel %vm396, %v2867, 0.0
    %2883 = vadd.xlane.f32.xlu0 %v2882
    %v2884 = vpop.xlane.xlu0 %2883
    %v2885 = vsel %vm396, %v2869, 0.0
    %2886 = vadd.xlane.f32.xlu0 %v2885
    %v2887 = vpop.xlane.xlu0 %2886
    %v2888 = vsel %vm396, %v2871, 0.0
    %2889 = vadd.xlane.f32.xlu0 %v2888
    %v2890 = vpop.xlane.xlu0 %2889
    %v2891 = vsel %vm396, %v2873, 0.0
    %2892 = vadd.xlane.f32.xlu0 %v2891
    %v2893 = vpop.xlane.xlu0 %2892
    %v2894 = vsel %vm396, %v2875, 0.0
    %2895 = vadd.xlane.f32.xlu0 %v2894
    %v2896 = vpop.xlane.xlu0 %2895
    %v2897 = vsel %vm396, %v2877, 0.0
    %2898 = vadd.xlane.f32.xlu0 %v2897
    %v2899 = vpop.xlane.xlu0 %2898
    %v2900 = vsel %vm396, %v2879, 0.0
    %2901 = vadd.xlane.f32.xlu0 %v2900
    %v2902 = vpop.xlane.xlu0 %2901
    %v2903 = vsel %vm396, %v2881, 0.0
    %2904 = vadd.xlane.f32.xlu0 %v2903
    %v2905 = vpop.xlane.xlu0 %2904
    %v2906 = vrcp.pop %v2884
    %v2907 = vrcp.pop %v2887
    %v2908 = vrcp.pop %v2890
    %v2909 = vrcp.pop %v2893
    %v2910 = vrcp.pop %v2896
    %v2911 = vrcp.pop %v2899
    %v2912 = vrcp.pop %v2902
    %v2913 = vrcp.pop %v2905
    %v2914 = vmul.f32 %v2867, %v2906
    %v2915 = vmul.f32 %v2869, %v2907
    %v2916 = vmul.f32 %v2871, %v2908
    %v2917 = vmul.f32 %v2873, %v2909
    %v2918 = vmul.f32 %v2875, %v2910
    %v2919 = vmul.f32 %v2877, %v2911
    %v2920 = vmul.f32 %v2879, %v2912
    %v2921 = vmul.f32 %v2881, %v2913
    %2922 = vrot.lane.b32.xlu0 %v2204, 64
    %v2923 = vpop.permute.xlu0 %2922
    %v2926 = vsel %vm396, %v2914, 0
    %2928 = vmatprep.subr.mxu0 0.0
    %2929 = vmatpush1.msra.mxu0 %v2923
    %2930 = vmatprep.subr.mxu0 0.0
    %2931 = vmatpush1.msra.mxu0 0.0
    %2932 = vmatprep.subr.mxu0 0.0
    %2933 = vmatpush1.msra.mxu0 0.0
    %2934 = vmatprep.subr.mxu0 0.0
    %2935 = vmatpush1.msra.mxu0 0.0
    %2936 = vmatprep.subr.mxu0 0.0
    %2937 = vmatpush1.msra.mxu0 0.0
    %2938 = vmatprep.subr.mxu0 0.0
    %2939 = vmatpush1.msra.mxu0 0.0
    %2940 = vmatprep.subr.mxu0 0.0
    %2941 = vmatpush1.msra.mxu0 0.0
    %2942 = vmatprep.subr.mxu0 0.0
    %2943 = vmatpush1.msra.mxu0 0.0
    %2944 = vmatprep.subr.mxu0 0.0
    %2945 = vmatpush1.msra.mxu0 0.0
    %2946 = vmatprep.subr.mxu0 0.0
    %2947 = vmatpush1.msra.mxu0 0.0
    %2948 = vmatprep.subr.mxu0 0.0
    %2949 = vmatpush1.msra.mxu0 0.0
    %2950 = vmatprep.subr.mxu0 0.0
    %2951 = vmatpush1.msra.mxu0 0.0
    %2952 = vmatprep.subr.mxu0 0.0
    %2953 = vmatpush1.msra.mxu0 0.0
    %2954 = vmatprep.subr.mxu0 0.0
    %2955 = vmatpush1.msra.mxu0 0.0
    %2956 = vmatprep.subr.mxu0 0.0
    %2957 = vmatpush1.msra.mxu0 0.0
    %2958 = vmatprep.subr.mxu0 0.0
    %2959 = vmatpush1.msra.mxu0 0.0
    %2960 = vmatprep.subr.mxu0 0.0
    %2961 = vmatpush1.msra.mxu0 0.0
    %2962 = vmatprep.subr.mxu0 0.0
    %2963 = vmatpush1.msra.mxu0 0.0
    %2964 = vmatprep.subr.mxu0 0.0
    %2965 = vmatpush1.msra.mxu0 0.0
    %2966 = vmatprep.subr.mxu0 0.0
    %2967 = vmatpush1.msra.mxu0 0.0
    %2968 = vmatprep.subr.mxu0 0.0
    %2969 = vmatpush1.msra.mxu0 0.0
    %2970 = vmatprep.subr.mxu0 0.0
    %2971 = vmatpush1.msra.mxu0 0.0
    %2972 = vmatprep.subr.mxu0 0.0
    %2973 = vmatpush1.msra.mxu0 0.0
    %2974 = vmatprep.subr.mxu0 0.0
    %2975 = vmatpush1.msra.mxu0 0.0
    %2976 = vmatprep.subr.mxu0 0.0
    %2977 = vmatpush1.msra.mxu0 0.0
    %2978 = vmatprep.subr.mxu0 0.0
    %2979 = vmatpush1.msra.mxu0 0.0
    %2980 = vmatprep.subr.mxu0 0.0
    %2981 = vmatpush1.msra.mxu0 0.0
    %2982 = vmatprep.subr.mxu0 0.0
    %2983 = vmatpush1.msra.mxu0 0.0
    %2984 = vmatprep.subr.mxu0 0.0
    %2985 = vmatpush1.msra.mxu0 0.0
    %2986 = vmatprep.subr.mxu0 0.0
    %2987 = vmatpush1.msra.mxu0 0.0
    %2988 = vmatprep.subr.mxu0 0.0
    %2989 = vmatpush1.msra.mxu0 0.0
    %2990 = vmatprep.subr.mxu0 0.0
    %2991 = vmatpush1.msra.mxu0 0.0
    %2992 = vmatprep.mubr.f32.mxu0 0.0
    %2993 = vmatmul.mubr.f32.gmra.mrb[0].mxu0 %v2926
    %v2994 = vpop.f32.mrb[0].mxu0
    %v2995 = vadd.f32 0.0, %v2994
    %v2996 = vpop.f32.mrb[0].mxu0
    %2997 = vdwg.mxu0
    %2998 = vrot.lane.b32.xlu0 %v2209, 64
    %v2999 = vpop.permute.xlu0 %2998
    %v3002 = vsel %vm396, %v2915, 0
    %3004 = vmatprep.subr.mxu0 0.0
    %3005 = vmatpush1.msra.mxu0 %v2999
    %3006 = vmatprep.subr.mxu0 0.0
    %3007 = vmatpush1.msra.mxu0 0.0
    %3008 = vmatprep.subr.mxu0 0.0
    %3009 = vmatpush1.msra.mxu0 0.0
    %3010 = vmatprep.subr.mxu0 0.0
    %3011 = vmatpush1.msra.mxu0 0.0
    %3012 = vmatprep.subr.mxu0 0.0
    %3013 = vmatpush1.msra.mxu0 0.0
    %3014 = vmatprep.subr.mxu0 0.0
    %3015 = vmatpush1.msra.mxu0 0.0
    %3016 = vmatprep.subr.mxu0 0.0
    %3017 = vmatpush1.msra.mxu0 0.0
    %3018 = vmatprep.subr.mxu0 0.0
    %3019 = vmatpush1.msra.mxu0 0.0
    %3020 = vmatprep.subr.mxu0 0.0
    %3021 = vmatpush1.msra.mxu0 0.0
    %3022 = vmatprep.subr.mxu0 0.0
    %3023 = vmatpush1.msra.mxu0 0.0
    %3024 = vmatprep.subr.mxu0 0.0
    %3025 = vmatpush1.msra.mxu0 0.0
    %3026 = vmatprep.subr.mxu0 0.0
    %3027 = vmatpush1.msra.mxu0 0.0
    %3028 = vmatprep.subr.mxu0 0.0
    %3029 = vmatpush1.msra.mxu0 0.0
    %3030 = vmatprep.subr.mxu0 0.0
    %3031 = vmatpush1.msra.mxu0 0.0
    %3032 = vmatprep.subr.mxu0 0.0
    %3033 = vmatpush1.msra.mxu0 0.0
    %3034 = vmatprep.subr.mxu0 0.0
    %3035 = vmatpush1.msra.mxu0 0.0
    %3036 = vmatprep.subr.mxu0 0.0
    %3037 = vmatpush1.msra.mxu0 0.0
    %3038 = vmatprep.subr.mxu0 0.0
    %3039 = vmatpush1.msra.mxu0 0.0
    %3040 = vmatprep.subr.mxu0 0.0
    %3041 = vmatpush1.msra.mxu0 0.0
    %3042 = vmatprep.subr.mxu0 0.0
    %3043 = vmatpush1.msra.mxu0 0.0
    %3044 = vmatprep.subr.mxu0 0.0
    %3045 = vmatpush1.msra.mxu0 0.0
    %3046 = vmatprep.subr.mxu0 0.0
    %3047 = vmatpush1.msra.mxu0 0.0
    %3048 = vmatprep.subr.mxu0 0.0
    %3049 = vmatpush1.msra.mxu0 0.0
    %3050 = vmatprep.subr.mxu0 0.0
    %3051 = vmatpush1.msra.mxu0 0.0
    %3052 = vmatprep.subr.mxu0 0.0
    %3053 = vmatpush1.msra.mxu0 0.0
    %3054 = vmatprep.subr.mxu0 0.0
    %3055 = vmatpush1.msra.mxu0 0.0
    %3056 = vmatprep.subr.mxu0 0.0
    %3057 = vmatpush1.msra.mxu0 0.0
    %3058 = vmatprep.subr.mxu0 0.0
    %3059 = vmatpush1.msra.mxu0 0.0
    %3060 = vmatprep.subr.mxu0 0.0
    %3061 = vmatpush1.msra.mxu0 0.0
    %3062 = vmatprep.subr.mxu0 0.0
    %3063 = vmatpush1.msra.mxu0 0.0
    %3064 = vmatprep.subr.mxu0 0.0
    %3065 = vmatpush1.msra.mxu0 0.0
    %3066 = vmatprep.subr.mxu0 0.0
    %3067 = vmatpush1.msra.mxu0 0.0
    %3068 = vmatprep.mubr.f32.mxu0 0.0
    %3069 = vmatmul.mubr.f32.gmra.mrb[0].mxu0 %v3002
    %v3070 = vpop.f32.mrb[0].mxu0
    %v3071 = vadd.f32 0.0, %v3070
    %v3072 = vpop.f32.mrb[0].mxu0
    %3073 = vdwg.mxu0
    %3074 = vrot.lane.b32.xlu0 %v2215, 64
    %v3075 = vpop.permute.xlu0 %3074
    %v3078 = vsel %vm396, %v2916, 0
    %3080 = vmatprep.subr.mxu0 0.0
    %3081 = vmatpush1.msra.mxu0 %v3075
    %3082 = vmatprep.subr.mxu0 0.0
    %3083 = vmatpush1.msra.mxu0 0.0
    %3084 = vmatprep.subr.mxu0 0.0
    %3085 = vmatpush1.msra.mxu0 0.0
    %3086 = vmatprep.subr.mxu0 0.0
    %3087 = vmatpush1.msra.mxu0 0.0
    %3088 = vmatprep.subr.mxu0 0.0
    %3089 = vmatpush1.msra.mxu0 0.0
    %3090 = vmatprep.subr.mxu0 0.0
    %3091 = vmatpush1.msra.mxu0 0.0
    %3092 = vmatprep.subr.mxu0 0.0
    %3093 = vmatpush1.msra.mxu0 0.0
    %3094 = vmatprep.subr.mxu0 0.0
    %3095 = vmatpush1.msra.mxu0 0.0
    %3096 = vmatprep.subr.mxu0 0.0
    %3097 = vmatpush1.msra.mxu0 0.0
    %3098 = vmatprep.subr.mxu0 0.0
    %3099 = vmatpush1.msra.mxu0 0.0
    %3100 = vmatprep.subr.mxu0 0.0
    %3101 = vmatpush1.msra.mxu0 0.0
    %3102 = vmatprep.subr.mxu0 0.0
    %3103 = vmatpush1.msra.mxu0 0.0
    %3104 = vmatprep.subr.mxu0 0.0
    %3105 = vmatpush1.msra.mxu0 0.0
    %3106 = vmatprep.subr.mxu0 0.0
    %3107 = vmatpush1.msra.mxu0 0.0
    %3108 = vmatprep.subr.mxu0 0.0
    %3109 = vmatpush1.msra.mxu0 0.0
    %3110 = vmatprep.subr.mxu0 0.0
    %3111 = vmatpush1.msra.mxu0 0.0
    %3112 = vmatprep.subr.mxu0 0.0
    %3113 = vmatpush1.msra.mxu0 0.0
    %3114 = vmatprep.subr.mxu0 0.0
    %3115 = vmatpush1.msra.mxu0 0.0
    %3116 = vmatprep.subr.mxu0 0.0
    %3117 = vmatpush1.msra.mxu0 0.0
    %3118 = vmatprep.subr.mxu0 0.0
    %3119 = vmatpush1.msra.mxu0 0.0
    %3120 = vmatprep.subr.mxu0 0.0
    %3121 = vmatpush1.msra.mxu0 0.0
    %3122 = vmatprep.subr.mxu0 0.0
    %3123 = vmatpush1.msra.mxu0 0.0
    %3124 = vmatprep.subr.mxu0 0.0
    %3125 = vmatpush1.msra.mxu0 0.0
    %3126 = vmatprep.subr.mxu0 0.0
    %3127 = vmatpush1.msra.mxu0 0.0
    %3128 = vmatprep.subr.mxu0 0.0
    %3129 = vmatpush1.msra.mxu0 0.0
    %3130 = vmatprep.subr.mxu0 0.0
    %3131 = vmatpush1.msra.mxu0 0.0
    %3132 = vmatprep.subr.mxu0 0.0
    %3133 = vmatpush1.msra.mxu0 0.0
    %3134 = vmatprep.subr.mxu0 0.0
    %3135 = vmatpush1.msra.mxu0 0.0
    %3136 = vmatprep.subr.mxu0 0.0
    %3137 = vmatpush1.msra.mxu0 0.0
    %3138 = vmatprep.subr.mxu0 0.0
    %3139 = vmatpush1.msra.mxu0 0.0
    %3140 = vmatprep.subr.mxu0 0.0
    %3141 = vmatpush1.msra.mxu0 0.0
    %3142 = vmatprep.subr.mxu0 0.0
    %3143 = vmatpush1.msra.mxu0 0.0
    %3144 = vmatprep.mubr.f32.mxu0 0.0
    %3145 = vmatmul.mubr.f32.gmra.mrb[0].mxu0 %v3078
    %v3146 = vpop.f32.mrb[0].mxu0
    %v3147 = vadd.f32 0.0, %v3146
    %v3148 = vpop.f32.mrb[0].mxu0
    %3149 = vdwg.mxu0
    %3150 = vrot.lane.b32.xlu0 %v2217, 64
    %v3151 = vpop.permute.xlu0 %3150
    %v3154 = vsel %vm396, %v2917, 0
    %3156 = vmatprep.subr.mxu0 0.0
    %3157 = vmatpush1.msra.mxu0 %v3151
    %3158 = vmatprep.subr.mxu0 0.0
    %3159 = vmatpush1.msra.mxu0 0.0
    %3160 = vmatprep.subr.mxu0 0.0
    %3161 = vmatpush1.msra.mxu0 0.0
    %3162 = vmatprep.subr.mxu0 0.0
    %3163 = vmatpush1.msra.mxu0 0.0
    %3164 = vmatprep.subr.mxu0 0.0
    %3165 = vmatpush1.msra.mxu0 0.0
    %3166 = vmatprep.subr.mxu0 0.0
    %3167 = vmatpush1.msra.mxu0 0.0
    %3168 = vmatprep.subr.mxu0 0.0
    %3169 = vmatpush1.msra.mxu0 0.0
    %3170 = vmatprep.subr.mxu0 0.0
    %3171 = vmatpush1.msra.mxu0 0.0
    %3172 = vmatprep.subr.mxu0 0.0
    %3173 = vmatpush1.msra.mxu0 0.0
    %3174 = vmatprep.subr.mxu0 0.0
    %3175 = vmatpush1.msra.mxu0 0.0
    %3176 = vmatprep.subr.mxu0 0.0
    %3177 = vmatpush1.msra.mxu0 0.0
    %3178 = vmatprep.subr.mxu0 0.0
    %3179 = vmatpush1.msra.mxu0 0.0
    %3180 = vmatprep.subr.mxu0 0.0
    %3181 = vmatpush1.msra.mxu0 0.0
    %3182 = vmatprep.subr.mxu0 0.0
    %3183 = vmatpush1.msra.mxu0 0.0
    %3184 = vmatprep.subr.mxu0 0.0
    %3185 = vmatpush1.msra.mxu0 0.0
    %3186 = vmatprep.subr.mxu0 0.0
    %3187 = vmatpush1.msra.mxu0 0.0
    %3188 = vmatprep.subr.mxu0 0.0
    %3189 = vmatpush1.msra.mxu0 0.0
    %3190 = vmatprep.subr.mxu0 0.0
    %3191 = vmatpush1.msra.mxu0 0.0
    %3192 = vmatprep.subr.mxu0 0.0
    %3193 = vmatpush1.msra.mxu0 0.0
    %3194 = vmatprep.subr.mxu0 0.0
    %3195 = vmatpush1.msra.mxu0 0.0
    %3196 = vmatprep.subr.mxu0 0.0
    %3197 = vmatpush1.msra.mxu0 0.0
    %3198 = vmatprep.subr.mxu0 0.0
    %3199 = vmatpush1.msra.mxu0 0.0
    %3200 = vmatprep.subr.mxu0 0.0
    %3201 = vmatpush1.msra.mxu0 0.0
    %3202 = vmatprep.subr.mxu0 0.0
    %3203 = vmatpush1.msra.mxu0 0.0
    %3204 = vmatprep.subr.mxu0 0.0
    %3205 = vmatpush1.msra.mxu0 0.0
    %3206 = vmatprep.subr.mxu0 0.0
    %3207 = vmatpush1.msra.mxu0 0.0
    %3208 = vmatprep.subr.mxu0 0.0
    %3209 = vmatpush1.msra.mxu0 0.0
    %3210 = vmatprep.subr.mxu0 0.0
    %3211 = vmatpush1.msra.mxu0 0.0
    %3212 = vmatprep.subr.mxu0 0.0
    %3213 = vmatpush1.msra.mxu0 0.0
    %3214 = vmatprep.subr.mxu0 0.0
    %3215 = vmatpush1.msra.mxu0 0.0
    %3216 = vmatprep.subr.mxu0 0.0
    %3217 = vmatpush1.msra.mxu0 0.0
    %3218 = vmatprep.subr.mxu0 0.0
    %3219 = vmatpush1.msra.mxu0 0.0
    %3220 = vmatprep.mubr.f32.mxu0 0.0
    %3221 = vmatmul.mubr.f32.gmra.mrb[0].mxu0 %v3154
    %v3222 = vpop.f32.mrb[0].mxu0
    %v3223 = vadd.f32 0.0, %v3222
    %v3224 = vpop.f32.mrb[0].mxu0
    %3225 = vdwg.mxu0
    %3226 = vrot.lane.b32.xlu0 %v2219, 64
    %v3227 = vpop.permute.xlu0 %3226
    %v3230 = vsel %vm396, %v2918, 0
    %3232 = vmatprep.subr.mxu0 0.0
    %3233 = vmatpush1.msra.mxu0 %v3227
    %3234 = vmatprep.subr.mxu0 0.0
    %3235 = vmatpush1.msra.mxu0 0.0
    %3236 = vmatprep.subr.mxu0 0.0
    %3237 = vmatpush1.msra.mxu0 0.0
    %3238 = vmatprep.subr.mxu0 0.0
    %3239 = vmatpush1.msra.mxu0 0.0
    %3240 = vmatprep.subr.mxu0 0.0
    %3241 = vmatpush1.msra.mxu0 0.0
    %3242 = vmatprep.subr.mxu0 0.0
    %3243 = vmatpush1.msra.mxu0 0.0
    %3244 = vmatprep.subr.mxu0 0.0
    %3245 = vmatpush1.msra.mxu0 0.0
    %3246 = vmatprep.subr.mxu0 0.0
    %3247 = vmatpush1.msra.mxu0 0.0
    %3248 = vmatprep.subr.mxu0 0.0
    %3249 = vmatpush1.msra.mxu0 0.0
    %3250 = vmatprep.subr.mxu0 0.0
    %3251 = vmatpush1.msra.mxu0 0.0
    %3252 = vmatprep.subr.mxu0 0.0
    %3253 = vmatpush1.msra.mxu0 0.0
    %3254 = vmatprep.subr.mxu0 0.0
    %3255 = vmatpush1.msra.mxu0 0.0
    %3256 = vmatprep.subr.mxu0 0.0
    %3257 = vmatpush1.msra.mxu0 0.0
    %3258 = vmatprep.subr.mxu0 0.0
    %3259 = vmatpush1.msra.mxu0 0.0
    %3260 = vmatprep.subr.mxu0 0.0
    %3261 = vmatpush1.msra.mxu0 0.0
    %3262 = vmatprep.subr.mxu0 0.0
    %3263 = vmatpush1.msra.mxu0 0.0
    %3264 = vmatprep.subr.mxu0 0.0
    %3265 = vmatpush1.msra.mxu0 0.0
    %3266 = vmatprep.subr.mxu0 0.0
    %3267 = vmatpush1.msra.mxu0 0.0
    %3268 = vmatprep.subr.mxu0 0.0
    %3269 = vmatpush1.msra.mxu0 0.0
    %3270 = vmatprep.subr.mxu0 0.0
    %3271 = vmatpush1.msra.mxu0 0.0
    %3272 = vmatprep.subr.mxu0 0.0
    %3273 = vmatpush1.msra.mxu0 0.0
    %3274 = vmatprep.subr.mxu0 0.0
    %3275 = vmatpush1.msra.mxu0 0.0
    %3276 = vmatprep.subr.mxu0 0.0
    %3277 = vmatpush1.msra.mxu0 0.0
    %3278 = vmatprep.subr.mxu0 0.0
    %3279 = vmatpush1.msra.mxu0 0.0
    %3280 = vmatprep.subr.mxu0 0.0
    %3281 = vmatpush1.msra.mxu0 0.0
    %3282 = vmatprep.subr.mxu0 0.0
    %3283 = vmatpush1.msra.mxu0 0.0
    %3284 = vmatprep.subr.mxu0 0.0
    %3285 = vmatpush1.msra.mxu0 0.0
    %3286 = vmatprep.subr.mxu0 0.0
    %3287 = vmatpush1.msra.mxu0 0.0
    %3288 = vmatprep.subr.mxu0 0.0
    %3289 = vmatpush1.msra.mxu0 0.0
    %3290 = vmatprep.subr.mxu0 0.0
    %3291 = vmatpush1.msra.mxu0 0.0
    %3292 = vmatprep.subr.mxu0 0.0
    %3293 = vmatpush1.msra.mxu0 0.0
    %3294 = vmatprep.subr.mxu0 0.0
    %3295 = vmatpush1.msra.mxu0 0.0
    %3296 = vmatprep.mubr.f32.mxu0 0.0
    %3297 = vmatmul.mubr.f32.gmra.mrb[0].mxu0 %v3230
    %v3298 = vpop.f32.mrb[0].mxu0
    %v3299 = vadd.f32 0.0, %v3298
    %v3300 = vpop.f32.mrb[0].mxu0
    %3301 = vdwg.mxu0
    %3302 = vrot.lane.b32.xlu0 %v2221, 64
    %v3303 = vpop.permute.xlu0 %3302
    %v3306 = vsel %vm396, %v2919, 0
    %3308 = vmatprep.subr.mxu0 0.0
    %3309 = vmatpush1.msra.mxu0 %v3303
    %3310 = vmatprep.subr.mxu0 0.0
    %3311 = vmatpush1.msra.mxu0 0.0
    %3312 = vmatprep.subr.mxu0 0.0
    %3313 = vmatpush1.msra.mxu0 0.0
    %3314 = vmatprep.subr.mxu0 0.0
    %3315 = vmatpush1.msra.mxu0 0.0
    %3316 = vmatprep.subr.mxu0 0.0
    %3317 = vmatpush1.msra.mxu0 0.0
    %3318 = vmatprep.subr.mxu0 0.0
    %3319 = vmatpush1.msra.mxu0 0.0
    %3320 = vmatprep.subr.mxu0 0.0
    %3321 = vmatpush1.msra.mxu0 0.0
    %3322 = vmatprep.subr.mxu0 0.0
    %3323 = vmatpush1.msra.mxu0 0.0
    %3324 = vmatprep.subr.mxu0 0.0
    %3325 = vmatpush1.msra.mxu0 0.0
    %3326 = vmatprep.subr.mxu0 0.0
    %3327 = vmatpush1.msra.mxu0 0.0
    %3328 = vmatprep.subr.mxu0 0.0
    %3329 = vmatpush1.msra.mxu0 0.0
    %3330 = vmatprep.subr.mxu0 0.0
    %3331 = vmatpush1.msra.mxu0 0.0
    %3332 = vmatprep.subr.mxu0 0.0
    %3333 = vmatpush1.msra.mxu0 0.0
    %3334 = vmatprep.subr.mxu0 0.0
    %3335 = vmatpush1.msra.mxu0 0.0
    %3336 = vmatprep.subr.mxu0 0.0
    %3337 = vmatpush1.msra.mxu0 0.0
    %3338 = vmatprep.subr.mxu0 0.0
    %3339 = vmatpush1.msra.mxu0 0.0
    %3340 = vmatprep.subr.mxu0 0.0
    %3341 = vmatpush1.msra.mxu0 0.0
    %3342 = vmatprep.subr.mxu0 0.0
    %3343 = vmatpush1.msra.mxu0 0.0
    %3344 = vmatprep.subr.mxu0 0.0
    %3345 = vmatpush1.msra.mxu0 0.0
    %3346 = vmatprep.subr.mxu0 0.0
    %3347 = vmatpush1.msra.mxu0 0.0
    %3348 = vmatprep.subr.mxu0 0.0
    %3349 = vmatpush1.msra.mxu0 0.0
    %3350 = vmatprep.subr.mxu0 0.0
    %3351 = vmatpush1.msra.mxu0 0.0
    %3352 = vmatprep.subr.mxu0 0.0
    %3353 = vmatpush1.msra.mxu0 0.0
    %3354 = vmatprep.subr.mxu0 0.0
    %3355 = vmatpush1.msra.mxu0 0.0
    %3356 = vmatprep.subr.mxu0 0.0
    %3357 = vmatpush1.msra.mxu0 0.0
    %3358 = vmatprep.subr.mxu0 0.0
    %3359 = vmatpush1.msra.mxu0 0.0
    %3360 = vmatprep.subr.mxu0 0.0
    %3361 = vmatpush1.msra.mxu0 0.0
    %3362 = vmatprep.subr.mxu0 0.0
    %3363 = vmatpush1.msra.mxu0 0.0
    %3364 = vmatprep.subr.mxu0 0.0
    %3365 = vmatpush1.msra.mxu0 0.0
    %3366 = vmatprep.subr.mxu0 0.0
    %3367 = vmatpush1.msra.mxu0 0.0
    %3368 = vmatprep.subr.mxu0 0.0
    %3369 = vmatpush1.msra.mxu0 0.0
    %3370 = vmatprep.subr.mxu0 0.0
    %3371 = vmatpush1.msra.mxu0 0.0
    %3372 = vmatprep.mubr.f32.mxu0 0.0
    %3373 = vmatmul.mubr.f32.gmra.mrb[0].mxu0 %v3306
    %v3374 = vpop.f32.mrb[0].mxu0
    %v3375 = vadd.f32 0.0, %v3374
    %v3376 = vpop.f32.mrb[0].mxu0
    %3377 = vdwg.mxu0
    %3378 = vrot.lane.b32.xlu0 %v2223, 64
    %v3379 = vpop.permute.xlu0 %3378
    %v3382 = vsel %vm396, %v2920, 0
    %3384 = vmatprep.subr.mxu0 0.0
    %3385 = vmatpush1.msra.mxu0 %v3379
    %3386 = vmatprep.subr.mxu0 0.0
    %3387 = vmatpush1.msra.mxu0 0.0
    %3388 = vmatprep.subr.mxu0 0.0
    %3389 = vmatpush1.msra.mxu0 0.0
    %3390 = vmatprep.subr.mxu0 0.0
    %3391 = vmatpush1.msra.mxu0 0.0
    %3392 = vmatprep.subr.mxu0 0.0
    %3393 = vmatpush1.msra.mxu0 0.0
    %3394 = vmatprep.subr.mxu0 0.0
    %3395 = vmatpush1.msra.mxu0 0.0
    %3396 = vmatprep.subr.mxu0 0.0
    %3397 = vmatpush1.msra.mxu0 0.0
    %3398 = vmatprep.subr.mxu0 0.0
    %3399 = vmatpush1.msra.mxu0 0.0
    %3400 = vmatprep.subr.mxu0 0.0
    %3401 = vmatpush1.msra.mxu0 0.0
    %3402 = vmatprep.subr.mxu0 0.0
    %3403 = vmatpush1.msra.mxu0 0.0
    %3404 = vmatprep.subr.mxu0 0.0
    %3405 = vmatpush1.msra.mxu0 0.0
    %3406 = vmatprep.subr.mxu0 0.0
    %3407 = vmatpush1.msra.mxu0 0.0
    %3408 = vmatprep.subr.mxu0 0.0
    %3409 = vmatpush1.msra.mxu0 0.0
    %3410 = vmatprep.subr.mxu0 0.0
    %3411 = vmatpush1.msra.mxu0 0.0
    %3412 = vmatprep.subr.mxu0 0.0
    %3413 = vmatpush1.msra.mxu0 0.0
    %3414 = vmatprep.subr.mxu0 0.0
    %3415 = vmatpush1.msra.mxu0 0.0
    %3416 = vmatprep.subr.mxu0 0.0
    %3417 = vmatpush1.msra.mxu0 0.0
    %3418 = vmatprep.subr.mxu0 0.0
    %3419 = vmatpush1.msra.mxu0 0.0
    %3420 = vmatprep.subr.mxu0 0.0
    %3421 = vmatpush1.msra.mxu0 0.0
    %3422 = vmatprep.subr.mxu0 0.0
    %3423 = vmatpush1.msra.mxu0 0.0
    %3424 = vmatprep.subr.mxu0 0.0
    %3425 = vmatpush1.msra.mxu0 0.0
    %3426 = vmatprep.subr.mxu0 0.0
    %3427 = vmatpush1.msra.mxu0 0.0
    %3428 = vmatprep.subr.mxu0 0.0
    %3429 = vmatpush1.msra.mxu0 0.0
    %3430 = vmatprep.subr.mxu0 0.0
    %3431 = vmatpush1.msra.mxu0 0.0
    %3432 = vmatprep.subr.mxu0 0.0
    %3433 = vmatpush1.msra.mxu0 0.0
    %3434 = vmatprep.subr.mxu0 0.0
    %3435 = vmatpush1.msra.mxu0 0.0
    %3436 = vmatprep.subr.mxu0 0.0
    %3437 = vmatpush1.msra.mxu0 0.0
    %3438 = vmatprep.subr.mxu0 0.0
    %3439 = vmatpush1.msra.mxu0 0.0
    %3440 = vmatprep.subr.mxu0 0.0
    %3441 = vmatpush1.msra.mxu0 0.0
    %3442 = vmatprep.subr.mxu0 0.0
    %3443 = vmatpush1.msra.mxu0 0.0
    %3444 = vmatprep.subr.mxu0 0.0
    %3445 = vmatpush1.msra.mxu0 0.0
    %3446 = vmatprep.subr.mxu0 0.0
    %3447 = vmatpush1.msra.mxu0 0.0
    %3448 = vmatprep.mubr.f32.mxu0 0.0
    %3449 = vmatmul.mubr.f32.gmra.mrb[0].mxu0 %v3382
    %v3450 = vpop.f32.mrb[0].mxu0
    %v3451 = vadd.f32 0.0, %v3450
    %v3452 = vpop.f32.mrb[0].mxu0
    %3453 = vdwg.mxu0
    %3454 = vrot.lane.b32.xlu0 %v2225, 64
    %v3455 = vpop.permute.xlu0 %3454
    %v3458 = vsel %vm396, %v2921, 0
    %3460 = vmatprep.subr.mxu0 0.0
    %3461 = vmatpush1.msra.mxu0 %v3455
    %3462 = vmatprep.subr.mxu0 0.0
    %3463 = vmatpush1.msra.mxu0 0.0
    %3464 = vmatprep.subr.mxu0 0.0
    %3465 = vmatpush1.msra.mxu0 0.0
    %3466 = vmatprep.subr.mxu0 0.0
    %3467 = vmatpush1.msra.mxu0 0.0
    %3468 = vmatprep.subr.mxu0 0.0
    %3469 = vmatpush1.msra.mxu0 0.0
    %3470 = vmatprep.subr.mxu0 0.0
    %3471 = vmatpush1.msra.mxu0 0.0
    %3472 = vmatprep.subr.mxu0 0.0
    %3473 = vmatpush1.msra.mxu0 0.0
    %3474 = vmatprep.subr.mxu0 0.0
    %3475 = vmatpush1.msra.mxu0 0.0
    %3476 = vmatprep.subr.mxu0 0.0
    %3477 = vmatpush1.msra.mxu0 0.0
    %3478 = vmatprep.subr.mxu0 0.0
    %3479 = vmatpush1.msra.mxu0 0.0
    %3480 = vmatprep.subr.mxu0 0.0
    %3481 = vmatpush1.msra.mxu0 0.0
    %3482 = vmatprep.subr.mxu0 0.0
    %3483 = vmatpush1.msra.mxu0 0.0
    %3484 = vmatprep.subr.mxu0 0.0
    %3485 = vmatpush1.msra.mxu0 0.0
    %3486 = vmatprep.subr.mxu0 0.0
    %3487 = vmatpush1.msra.mxu0 0.0
    %3488 = vmatprep.subr.mxu0 0.0
    %3489 = vmatpush1.msra.mxu0 0.0
    %3490 = vmatprep.subr.mxu0 0.0
    %3491 = vmatpush1.msra.mxu0 0.0
    %3492 = vmatprep.subr.mxu0 0.0
    %3493 = vmatpush1.msra.mxu0 0.0
    %3494 = vmatprep.subr.mxu0 0.0
    %3495 = vmatpush1.msra.mxu0 0.0
    %3496 = vmatprep.subr.mxu0 0.0
    %3497 = vmatpush1.msra.mxu0 0.0
    %3498 = vmatprep.subr.mxu0 0.0
    %3499 = vmatpush1.msra.mxu0 0.0
    %3500 = vmatprep.subr.mxu0 0.0
    %3501 = vmatpush1.msra.mxu0 0.0
    %3502 = vmatprep.subr.mxu0 0.0
    %3503 = vmatpush1.msra.mxu0 0.0
    %3504 = vmatprep.subr.mxu0 0.0
    %3505 = vmatpush1.msra.mxu0 0.0
    %3506 = vmatprep.subr.mxu0 0.0
    %3507 = vmatpush1.msra.mxu0 0.0
    %3508 = vmatprep.subr.mxu0 0.0
    %3509 = vmatpush1.msra.mxu0 0.0
    %3510 = vmatprep.subr.mxu0 0.0
    %3511 = vmatpush1.msra.mxu0 0.0
    %3512 = vmatprep.subr.mxu0 0.0
    %3513 = vmatpush1.msra.mxu0 0.0
    %3514 = vmatprep.subr.mxu0 0.0
    %3515 = vmatpush1.msra.mxu0 0.0
    %3516 = vmatprep.subr.mxu0 0.0
    %3517 = vmatpush1.msra.mxu0 0.0
    %3518 = vmatprep.subr.mxu0 0.0
    %3519 = vmatpush1.msra.mxu0 0.0
    %3520 = vmatprep.subr.mxu0 0.0
    %3521 = vmatpush1.msra.mxu0 0.0
    %3522 = vmatprep.subr.mxu0 0.0
    %3523 = vmatpush1.msra.mxu0 0.0
    %3524 = vmatprep.mubr.f32.mxu0 0.0
    %3525 = vmatmul.mubr.f32.gmra.mrb[0].mxu0 %v3458
    %v3526 = vpop.f32.mrb[0].mxu0
    %v3527 = vadd.f32 0.0, %v3526
    %v3528 = vpop.f32.mrb[0].mxu0
    %3529 = vdwg.mxu0
    %3532 = vrot.lane.b32.xlu0 %v3147, 8
    %v3533 = vpop.permute.xlu0 %3532
    %3534 = vrot.lane.b32.xlu0 %v3223, 8
    %v3535 = vpop.permute.xlu0 %3534
    %3540 = vrot.lane.b32.xlu0 %v3299, 16
    %v3541 = vpop.permute.xlu0 %3540
    %3542 = vrot.lane.b32.xlu0 %v3375, 16
    %v3543 = vpop.permute.xlu0 %3542
    %3548 = vrot.lane.b32.xlu0 %v3451, 24
    %v3549 = vpop.permute.xlu0 %3548
    %3550 = vrot.lane.b32.xlu0 %v3527, 24
    %v3551 = vpop.permute.xlu0 %3550
    %v3554 = vsel %vm396, %v2995, %v3533
    %v3555 = vsel %vm396, %v3071, %v3535
    %v3556 = vsel %vm1725, %v3554, %v3541
    %v3557 = vsel %vm1725, %v3555, %v3543
    %v3558 = vsel %vm1728, %v3556, %v3549
    %v3559 = vsel %vm1728, %v3557, %v3551
    %v3560 = vld [vmem:[%s2 + $0x8] sm:$0x1]
    %v3561 = vlaneseq
    %v3562 = vshrl.u32 %v3561, 7
    %v3563 = vsub.s32 0, %v3562
    %v3564 = vrot.slane %v3560, %v3563
    %3569 = vrot.lane.b32.xlu0 %v2118, 32
    %v3570 = vpop.permute.xlu0 %3569
    %3571 = vrot.lane.b32.xlu0 %v2120, 32
    %v3572 = vpop.permute.xlu0 %3571
    %3573 = vrot.lane.b32.xlu0 %v2122, 32
    %v3574 = vpop.permute.xlu0 %3573
    %3575 = vrot.lane.b32.xlu0 %v2124, 32
    %v3576 = vpop.permute.xlu0 %3575
    %v3582 = vsel %vm139, %v3558, 0
    %v3585 = vsel %vm139, %v3559, 0
    %3587 = vmatprep.subr.mxu0 0.0
    %3588 = vmatpush1.msra.mxu0 %v3570
    %3589 = vmatprep.subr.mxu0 0.0
    %3590 = vmatpush1.msra.mxu0 %v3572
    %3591 = vmatprep.subr.mxu0 0.0
    %3592 = vmatpush1.msra.mxu0 %v3574
    %3593 = vmatprep.subr.mxu0 0.0
    %3594 = vmatpush1.msra.mxu0 %v3576
    %3595 = vmatprep.subr.mxu0 0.0
    %3596 = vmatpush1.msra.mxu0 0.0
    %3597 = vmatprep.subr.mxu0 0.0
    %3598 = vmatpush1.msra.mxu0 0.0
    %3599 = vmatprep.subr.mxu0 0.0
    %3600 = vmatpush1.msra.mxu0 0.0
    %3601 = vmatprep.subr.mxu0 0.0
    %3602 = vmatpush1.msra.mxu0 0.0
    %3603 = vmatprep.subr.mxu0 0.0
    %3604 = vmatpush1.msra.mxu0 0.0
    %3605 = vmatprep.subr.mxu0 0.0
    %3606 = vmatpush1.msra.mxu0 0.0
    %3607 = vmatprep.subr.mxu0 0.0
    %3608 = vmatpush1.msra.mxu0 0.0
    %3609 = vmatprep.subr.mxu0 0.0
    %3610 = vmatpush1.msra.mxu0 0.0
    %3611 = vmatprep.subr.mxu0 0.0
    %3612 = vmatpush1.msra.mxu0 0.0
    %3613 = vmatprep.subr.mxu0 0.0
    %3614 = vmatpush1.msra.mxu0 0.0
    %3615 = vmatprep.subr.mxu0 0.0
    %3616 = vmatpush1.msra.mxu0 0.0
    %3617 = vmatprep.subr.mxu0 0.0
    %3618 = vmatpush1.msra.mxu0 0.0
    %3619 = vmatprep.subr.mxu0 0.0
    %3620 = vmatpush1.msra.mxu0 0.0
    %3621 = vmatprep.subr.mxu0 0.0
    %3622 = vmatpush1.msra.mxu0 0.0
    %3623 = vmatprep.subr.mxu0 0.0
    %3624 = vmatpush1.msra.mxu0 0.0
    %3625 = vmatprep.subr.mxu0 0.0
    %3626 = vmatpush1.msra.mxu0 0.0
    %3627 = vmatprep.subr.mxu0 0.0
    %3628 = vmatpush1.msra.mxu0 0.0
    %3629 = vmatprep.subr.mxu0 0.0
    %3630 = vmatpush1.msra.mxu0 0.0
    %3631 = vmatprep.subr.mxu0 0.0
    %3632 = vmatpush1.msra.mxu0 0.0
    %3633 = vmatprep.subr.mxu0 0.0
    %3634 = vmatpush1.msra.mxu0 0.0
    %3635 = vmatprep.subr.mxu0 0.0
    %3636 = vmatpush1.msra.mxu0 0.0
    %3637 = vmatprep.subr.mxu0 0.0
    %3638 = vmatpush1.msra.mxu0 0.0
    %3639 = vmatprep.subr.mxu0 0.0
    %3640 = vmatpush1.msra.mxu0 0.0
    %3641 = vmatprep.subr.mxu0 0.0
    %3642 = vmatpush1.msra.mxu0 0.0
    %3643 = vmatprep.subr.mxu0 0.0
    %3644 = vmatpush1.msra.mxu0 0.0
    %3645 = vmatprep.subr.mxu0 0.0
    %3646 = vmatpush1.msra.mxu0 0.0
    %3647 = vmatprep.subr.mxu0 0.0
    %3648 = vmatpush1.msra.mxu0 0.0
    %3649 = vmatprep.subr.mxu0 0.0
    %3650 = vmatpush1.msra.mxu0 0.0
    %3651 = vmatprep.mubr.f32.mxu0 0.0
    %3652 = vmatmul.mubr.f32.gmra.mrb[0].mxu0 %v3582
    %v3653 = vpop.f32.mrb[0].mxu0
    %v3654 = vadd.f32 %v3564, %v3653
    %v3655 = vpop.f32.mrb[0].mxu0
    %3656 = vmatprep.mubr.f32.mxu0 0.0
    %3657 = vmatmul.mubr.f32.gmra.mrb[0].mxu0 %v3585
    %v3658 = vpop.f32.mrb[0].mxu0
    %v3659 = vadd.f32 %v3564, %v3658
    %v3660 = vpop.f32.mrb[0].mxu0
    %3661 = vdwg.mxu0
    %v3662 = vadd.f32 %v2115, %v3654
    %v3663 = vadd.f32 %v2116, %v3659
    %v3664 = vld [vmem:[%s2 + $0x9] sm:$0x1]
    %v3665 = vld [vmem:[%s2 + $0xa] sm:$0x1]
    %v3666 = vsel %vm139, %v3662, 0.0
    %3667 = vadd.xlane.f32.xlu0 %v3666
    %v3668 = vpop.xlane.xlu0 %3667
    %v3669 = vsel %vm139, %v3663, 0.0
    %3670 = vadd.xlane.f32.xlu0 %v3669
    %v3671 = vpop.xlane.xlu0 %3670
    %v3672 = vmul.f32 %v3668, %v146
    %v3673 = vmul.f32 %v3671, %v146
    %v3674 = vsub.f32 %v3662, %v3672
    %v3675 = vsub.f32 %v3663, %v3673
    %v3676 = vmul.f32 %v3674, %v3674
    %v3677 = vmul.f32 %v3675, %v3675
    %v3678 = vsel %vm139, %v3676, 0.0
    %3679 = vadd.xlane.f32.xlu0 %v3678
    %v3680 = vpop.xlane.xlu0 %3679
    %v3681 = vsel %vm139, %v3677, 0.0
    %3682 = vadd.xlane.f32.xlu0 %v3681
    %v3683 = vpop.xlane.xlu0 %3682
    %v3684 = vmul.f32 %v3680, %v146
    %v3685 = vmul.f32 %v3683, %v146
    %v3686 = vadd.f32 %v3684, 1e-12
    %v3687 = vadd.f32 %v3685, 1e-12
    %v3688 = vrsqrt.pop %v3686
    %v3689 = vrsqrt.pop %v3687
    %v3690 = vmul.f32 %v3674, %v3688
    %v3691 = vmul.f32 %v3675, %v3689
    %v3692 = vlaneseq
    %v3693 = vshrl.u32 %v3692, 7
    %v3694 = vsub.s32 0, %v3693
    %v3695 = vrot.slane %v3664, %v3694
    %v3696 = vmul.f32 %v3690, %v3695
    %v3697 = vmul.f32 %v3691, %v3695
    %v3698 = vlaneseq
    %v3699 = vshrl.u32 %v3698, 7
    %v3700 = vsub.s32 0, %v3699
    %v3701 = vrot.slane %v3665, %v3700
    %v3702 = vadd.f32 %v3696, %v3701
    %v3703 = vadd.f32 %v3697, %v3701
    %v3704 = vld [vmem:[%s3 + $0x3] sm:$0x1]
    %v3705 = vlaneseq
    %v3706 = vshrl.u32 %v3705, 7
    %v3707 = vsub.s32 0, %v3706
    %v3708 = vrot.slane %v3704, %v3707
    %v3710 = vsel %vm139, %v3702, 0
    %v3713 = vsel %vm139, %v3703, 0
    %3715 = vmatprep.subr.mxu0 0.0
    %3716 = vmatpush1.msra.mxu0 %v2119
    %3717 = vmatprep.subr.mxu0 0.0
    %3718 = vmatpush1.msra.mxu0 %v2121
    %3719 = vmatprep.subr.mxu0 0.0
    %3720 = vmatpush1.msra.mxu0 %v2123
    %3721 = vmatprep.subr.mxu0 0.0
    %3722 = vmatpush1.msra.mxu0 %v2125
    %3723 = vmatprep.subr.mxu0 0.0
    %3724 = vmatpush1.msra.mxu0 0.0
    %3725 = vmatprep.subr.mxu0 0.0
    %3726 = vmatpush1.msra.mxu0 0.0
    %3727 = vmatprep.subr.mxu0 0.0
    %3728 = vmatpush1.msra.mxu0 0.0
    %3729 = vmatprep.subr.mxu0 0.0
    %3730 = vmatpush1.msra.mxu0 0.0
    %3731 = vmatprep.subr.mxu0 0.0
    %3732 = vmatpush1.msra.mxu0 0.0
    %3733 = vmatprep.subr.mxu0 0.0
    %3734 = vmatpush1.msra.mxu0 0.0
    %3735 = vmatprep.subr.mxu0 0.0
    %3736 = vmatpush1.msra.mxu0 0.0
    %3737 = vmatprep.subr.mxu0 0.0
    %3738 = vmatpush1.msra.mxu0 0.0
    %3739 = vmatprep.subr.mxu0 0.0
    %3740 = vmatpush1.msra.mxu0 0.0
    %3741 = vmatprep.subr.mxu0 0.0
    %3742 = vmatpush1.msra.mxu0 0.0
    %3743 = vmatprep.subr.mxu0 0.0
    %3744 = vmatpush1.msra.mxu0 0.0
    %3745 = vmatprep.subr.mxu0 0.0
    %3746 = vmatpush1.msra.mxu0 0.0
    %3747 = vmatprep.subr.mxu0 0.0
    %3748 = vmatpush1.msra.mxu0 0.0
    %3749 = vmatprep.subr.mxu0 0.0
    %3750 = vmatpush1.msra.mxu0 0.0
    %3751 = vmatprep.subr.mxu0 0.0
    %3752 = vmatpush1.msra.mxu0 0.0
    %3753 = vmatprep.subr.mxu0 0.0
    %3754 = vmatpush1.msra.mxu0 0.0
    %3755 = vmatprep.subr.mxu0 0.0
    %3756 = vmatpush1.msra.mxu0 0.0
    %3757 = vmatprep.subr.mxu0 0.0
    %3758 = vmatpush1.msra.mxu0 0.0
    %3759 = vmatprep.subr.mxu0 0.0
    %3760 = vmatpush1.msra.mxu0 0.0
    %3761 = vmatprep.subr.mxu0 0.0
    %3762 = vmatpush1.msra.mxu0 0.0
    %3763 = vmatprep.subr.mxu0 0.0
    %3764 = vmatpush1.msra.mxu0 0.0
    %3765 = vmatprep.subr.mxu0 0.0
    %3766 = vmatpush1.msra.mxu0 0.0
    %3767 = vmatprep.subr.mxu0 0.0
    %3768 = vmatpush1.msra.mxu0 0.0
    %3769 = vmatprep.subr.mxu0 0.0
    %3770 = vmatpush1.msra.mxu0 0.0
    %3771 = vmatprep.subr.mxu0 0.0
    %3772 = vmatpush1.msra.mxu0 0.0
    %3773 = vmatprep.subr.mxu0 0.0
    %3774 = vmatpush1.msra.mxu0 0.0
    %3775 = vmatprep.subr.mxu0 0.0
    %3776 = vmatpush1.msra.mxu0 0.0
    %3777 = vmatprep.subr.mxu0 0.0
    %3778 = vmatpush1.msra.mxu0 0.0
    %3779 = vmatprep.mubr.f32.mxu0 0.0
    %3780 = vmatmul.mubr.f32.gmra.mrb[0].mxu0 %v3710
    %v3781 = vpop.f32.mrb[0].mxu0
    %v3782 = vadd.f32 %v3708, %v3781
    %v3783 = vpop.f32.mrb[0].mxu0
    %3784 = vmatprep.mubr.f32.mxu0 0.0
    %3785 = vmatmul.mubr.f32.gmra.mrb[0].mxu0 %v3713
    %v3786 = vpop.f32.mrb[0].mxu0
    %v3787 = vadd.f32 %v3708, %v3786
    %v3788 = vpop.f32.mrb[0].mxu0
    %3789 = vdwg.mxu0
    %v3790 = vmul.f32 %v3782, %v3782
    %v3791 = vmul.f32 %v3787, %v3787
    %v3792 = vmul.f32 %v3782, %v3790
    %v3793 = vmul.f32 %v3787, %v3791
    %v3794 = vmul.f32 %v3792, 0.044715
    %v3795 = vmul.f32 %v3793, 0.044715
    %v3796 = vadd.f32 %v3782, %v3794
    %v3797 = vadd.f32 %v3787, %v3795
    %v3798 = vmul.f32 %v3796, 0.7978846
    %v3799 = vmul.f32 %v3797, 0.7978846
    %v3800 = vtanh.pop %v3798
    %v3801 = vtanh.pop %v3799
    %v3802 = vadd.f32 %v3800, 1.0
    %v3803 = vadd.f32 %v3801, 1.0
    %v3804 = vmul.f32 %v3802, 0.5
    %v3805 = vmul.f32 %v3803, 0.5
    %v3806 = vmul.f32 %v3782, %v3804
    %v3807 = vmul.f32 %v3787, %v3805
    %s3808 = scalar_lea.vmem %s5, 128
    %v3809 = vld [vmem:[%s3808] sm:$0xff]
    %v3810 = vld [vmem:[%s3808 + $0x8] sm:$0xff]
    %v3811 = vld [vmem:[%s3808 + $0x10] sm:$0xff]
    %v3812 = vld [vmem:[%s3808 + $0x18] sm:$0xff]
    %v3813 = vld [vmem:[%s3808 + $0x20] sm:$0xff]
    %v3814 = vld [vmem:[%s3808 + $0x28] sm:$0xff]
    %v3815 = vld [vmem:[%s3808 + $0x30] sm:$0xff]
    %v3816 = vld [vmem:[%s3808 + $0x38] sm:$0xff]
    %v3817 = vld [vmem:[%s3808 + $0x40] sm:$0xff]
    %v3818 = vld [vmem:[%s3808 + $0x48] sm:$0xff]
    %v3819 = vld [vmem:[%s3808 + $0x50] sm:$0xff]
    %v3820 = vld [vmem:[%s3808 + $0x58] sm:$0xff]
    %v3821 = vld [vmem:[%s3808 + $0x60] sm:$0xff]
    %v3822 = vld [vmem:[%s3808 + $0x68] sm:$0xff]
    %v3823 = vld [vmem:[%s3808 + $0x70] sm:$0xff]
    %v3824 = vld [vmem:[%s3808 + $0x78] sm:$0xff]
    %v3825 = vld [vmem:[%s2 + $0xb] sm:$0x1]
    %v3826 = vlaneseq
    %v3827 = vshrl.u32 %v3826, 7
    %v3828 = vsub.s32 0, %v3827
    %v3829 = vrot.slane %v3825, %v3828
    %3830 = vmatprep.subr.mxu0 0.0
    %3831 = vmatpush1.msra.mxu0 %v3809
    %3832 = vmatprep.subr.mxu0 0.0
    %3833 = vmatpush1.msra.mxu0 %v3810
    %3834 = vmatprep.subr.mxu0 0.0
    %3835 = vmatpush1.msra.mxu0 %v3811
    %3836 = vmatprep.subr.mxu0 0.0
    %3837 = vmatpush1.msra.mxu0 %v3812
    %3838 = vmatprep.subr.mxu0 0.0
    %3839 = vmatpush1.msra.mxu0 %v3813
    %3840 = vmatprep.subr.mxu0 0.0
    %3841 = vmatpush1.msra.mxu0 %v3814
    %3842 = vmatprep.subr.mxu0 0.0
    %3843 = vmatpush1.msra.mxu0 %v3815
    %3844 = vmatprep.subr.mxu0 0.0
    %3845 = vmatpush1.msra.mxu0 %v3816
    %3846 = vmatprep.subr.mxu0 0.0
    %3847 = vmatpush1.msra.mxu0 %v3817
    %3848 = vmatprep.subr.mxu0 0.0
    %3849 = vmatpush1.msra.mxu0 %v3818
    %3850 = vmatprep.subr.mxu0 0.0
    %3851 = vmatpush1.msra.mxu0 %v3819
    %3852 = vmatprep.subr.mxu0 0.0
    %3853 = vmatpush1.msra.mxu0 %v3820
    %3854 = vmatprep.subr.mxu0 0.0
    %3855 = vmatpush1.msra.mxu0 %v3821
    %3856 = vmatprep.subr.mxu0 0.0
    %3857 = vmatpush1.msra.mxu0 %v3822
    %3858 = vmatprep.subr.mxu0 0.0
    %3859 = vmatpush1.msra.mxu0 %v3823
    %3860 = vmatprep.subr.mxu0 0.0
    %3861 = vmatpush1.msra.mxu0 %v3824
    %3862 = vmatprep.subr.mxu0 0.0
    %3863 = vmatpush1.msra.mxu0 0.0
    %3864 = vmatprep.subr.mxu0 0.0
    %3865 = vmatpush1.msra.mxu0 0.0
    %3866 = vmatprep.subr.mxu0 0.0
    %3867 = vmatpush1.msra.mxu0 0.0
    %3868 = vmatprep.subr.mxu0 0.0
    %3869 = vmatpush1.msra.mxu0 0.0
    %3870 = vmatprep.subr.mxu0 0.0
    %3871 = vmatpush1.msra.mxu0 0.0
    %3872 = vmatprep.subr.mxu0 0.0
    %3873 = vmatpush1.msra.mxu0 0.0
    %3874 = vmatprep.subr.mxu0 0.0
    %3875 = vmatpush1.msra.mxu0 0.0
    %3876 = vmatprep.subr.mxu0 0.0
    %3877 = vmatpush1.msra.mxu0 0.0
    %3878 = vmatprep.subr.mxu0 0.0
    %3879 = vmatpush1.msra.mxu0 0.0
    %3880 = vmatprep.subr.mxu0 0.0
    %3881 = vmatpush1.msra.mxu0 0.0
    %3882 = vmatprep.subr.mxu0 0.0
    %3883 = vmatpush1.msra.mxu0 0.0
    %3884 = vmatprep.subr.mxu0 0.0
    %3885 = vmatpush1.msra.mxu0 0.0
    %3886 = vmatprep.subr.mxu0 0.0
    %3887 = vmatpush1.msra.mxu0 0.0
    %3888 = vmatprep.subr.mxu0 0.0
    %3889 = vmatpush1.msra.mxu0 0.0
    %3890 = vmatprep.subr.mxu0 0.0
    %3891 = vmatpush1.msra.mxu0 0.0
    %3892 = vmatprep.subr.mxu0 0.0
    %3893 = vmatpush1.msra.mxu0 0.0
    %3894 = vmatprep.mubr.f32.mxu0 0.0
    %3895 = vmatmul.mubr.f32.gmra.mrb[0].mxu0 %v3806
    %v3896 = vpop.f32.mrb[0].mxu0
    %v3897 = vadd.f32 %v3829, %v3896
    %v3898 = vpop.f32.mrb[0].mxu0
    %3899 = vmatprep.mubr.f32.mxu0 0.0
    %3900 = vmatmul.mubr.f32.gmra.mrb[0].mxu0 %v3807
    %v3901 = vpop.f32.mrb[0].mxu0
    %v3902 = vadd.f32 %v3829, %v3901
    %v3903 = vpop.f32.mrb[0].mxu0
    %3904 = vdwg.mxu0
    %v3905 = vadd.f32 %v3702, %v3897
    %v3906 = vadd.f32 %v3703, %v3902
    %v3907 = vld [vmem:[%s2 + $0xc] sm:$0x1]
    %v3908 = vld [vmem:[%s2 + $0xd] sm:$0x1]
    %v3909 = vsel %vm139, %v3905, 0.0
    %3910 = vadd.xlane.f32.xlu0 %v3909
    %v3911 = vpop.xlane.xlu0 %3910
    %v3912 = vsel %vm139, %v3906, 0.0
    %3913 = vadd.xlane.f32.xlu0 %v3912
    %v3914 = vpop.xlane.xlu0 %3913
    %v3915 = vmul.f32 %v3911, %v146
    %v3916 = vmul.f32 %v3914, %v146
    %v3917 = vsub.f32 %v3905, %v3915
    %v3918 = vsub.f32 %v3906, %v3916
    %v3919 = vmul.f32 %v3917, %v3917
    %v3920 = vmul.f32 %v3918, %v3918
    %v3921 = vsel %vm139, %v3919, 0.0
    %3922 = vadd.xlane.f32.xlu0 %v3921
    %v3923 = vpop.xlane.xlu0 %3922
    %v3924 = vsel %vm139, %v3920, 0.0
    %3925 = vadd.xlane.f32.xlu0 %v3924
    %v3926 = vpop.xlane.xlu0 %3925
    %v3927 = vmul.f32 %v3923, %v146
    %v3928 = vmul.f32 %v3926, %v146
    %v3929 = vadd.f32 %v3927, 1e-12
    %v3930 = vadd.f32 %v3928, 1e-12
    %v3931 = vrsqrt.pop %v3929
    %v3932 = vrsqrt.pop %v3930
    %v3933 = vmul.f32 %v3917, %v3931
    %v3934 = vmul.f32 %v3918, %v3932
    %v3935 = vlaneseq
    %v3936 = vshrl.u32 %v3935, 7
    %v3937 = vsub.s32 0, %v3936
    %v3938 = vrot.slane %v3907, %v3937
    %v3939 = vmul.f32 %v3933, %v3938
    %v3940 = vmul.f32 %v3934, %v3938
    %v3941 = vlaneseq
    %v3942 = vshrl.u32 %v3941, 7
    %v3943 = vsub.s32 0, %v3942
    %v3944 = vrot.slane %v3908, %v3943
    %v3945 = vadd.f32 %v3939, %v3944
    %v3946 = vadd.f32 %v3940, %v3944
    %v3947 = vld [vmem:[%s6] sm:$0xff]
    %v3948 = vld [vmem:[%s6 + $0x8] sm:$0xff]
    %v3949 = vld [vmem:[%s6 + $0x10] sm:$0xff]
    %v3950 = vld [vmem:[%s6 + $0x18] sm:$0xff]
    %v3951 = vld [vmem:[%s2 + $0xe] sm:$0x1]
    %v3952 = vlaneseq
    %v3953 = vshrl.u32 %v3952, 7
    %v3954 = vsub.s32 0, %v3953
    %v3955 = vrot.slane %v3951, %v3954
    %v3958 = vrot.slane %v3946, 7
    %vm3959 = vcmask 1041409
    %v3960 = vsel %vm3959, %v3958, %v3945
    %v3961 = vsel %vm139, %v3960, 0
    %3963 = vmatprep.subr.mxu0 0.0
    %3964 = vmatpush1.msra.mxu0 %v3947
    %3965 = vmatprep.subr.mxu0 0.0
    %3966 = vmatpush1.msra.mxu0 %v3948
    %3967 = vmatprep.subr.mxu0 0.0
    %3968 = vmatpush1.msra.mxu0 %v3949
    %3969 = vmatprep.subr.mxu0 0.0
    %3970 = vmatpush1.msra.mxu0 %v3950
    %3971 = vmatprep.subr.mxu0 0.0
    %3972 = vmatpush1.msra.mxu0 0.0
    %3973 = vmatprep.subr.mxu0 0.0
    %3974 = vmatpush1.msra.mxu0 0.0
    %3975 = vmatprep.subr.mxu0 0.0
    %3976 = vmatpush1.msra.mxu0 0.0
    %3977 = vmatprep.subr.mxu0 0.0
    %3978 = vmatpush1.msra.mxu0 0.0
    %3979 = vmatprep.subr.mxu0 0.0
    %3980 = vmatpush1.msra.mxu0 0.0
    %3981 = vmatprep.subr.mxu0 0.0
    %3982 = vmatpush1.msra.mxu0 0.0
    %3983 = vmatprep.subr.mxu0 0.0
    %3984 = vmatpush1.msra.mxu0 0.0
    %3985 = vmatprep.subr.mxu0 0.0
    %3986 = vmatpush1.msra.mxu0 0.0
    %3987 = vmatprep.subr.mxu0 0.0
    %3988 = vmatpush1.msra.mxu0 0.0
    %3989 = vmatprep.subr.mxu0 0.0
    %3990 = vmatpush1.msra.mxu0 0.0
    %3991 = vmatprep.subr.mxu0 0.0
    %3992 = vmatpush1.msra.mxu0 0.0
    %3993 = vmatprep.subr.mxu0 0.0
    %3994 = vmatpush1.msra.mxu0 0.0
    %3995 = vmatprep.subr.mxu0 0.0
    %3996 = vmatpush1.msra.mxu0 0.0
    %3997 = vmatprep.subr.mxu0 0.0
    %3998 = vmatpush1.msra.mxu0 0.0
    %3999 = vmatprep.subr.mxu0 0.0
    %4000 = vmatpush1.msra.mxu0 0.0
    %4001 = vmatprep.subr.mxu0 0.0
    %4002 = vmatpush1.msra.mxu0 0.0
    %4003 = vmatprep.subr.mxu0 0.0
    %4004 = vmatpush1.msra.mxu0 0.0
    %4005 = vmatprep.subr.mxu0 0.0
    %4006 = vmatpush1.msra.mxu0 0.0
    %4007 = vmatprep.subr.mxu0 0.0
    %4008 = vmatpush1.msra.mxu0 0.0
    %4009 = vmatprep.subr.mxu0 0.0
    %4010 = vmatpush1.msra.mxu0 0.0
    %4011 = vmatprep.subr.mxu0 0.0
    %4012 = vmatpush1.msra.mxu0 0.0
    %4013 = vmatprep.subr.mxu0 0.0
    %4014 = vmatpush1.msra.mxu0 0.0
    %4015 = vmatprep.subr.mxu0 0.0
    %4016 = vmatpush1.msra.mxu0 0.0
    %4017 = vmatprep.subr.mxu0 0.0
    %4018 = vmatpush1.msra.mxu0 0.0
    %4019 = vmatprep.subr.mxu0 0.0
    %4020 = vmatpush1.msra.mxu0 0.0
    %4021 = vmatprep.subr.mxu0 0.0
    %4022 = vmatpush1.msra.mxu0 0.0
    %4023 = vmatprep.subr.mxu0 0.0
    %4024 = vmatpush1.msra.mxu0 0.0
    %4025 = vmatprep.subr.mxu0 0.0
    %4026 = vmatpush1.msra.mxu0 0.0
    %4027 = vmatprep.mubr.f32.mxu0 0.0
    %4028 = vmatmul.mubr.f32.gmra.mrb[0].mxu0 %v3961
    %v4029 = vpop.f32.mrb[0].mxu0
    %v4030 = vadd.f32 %v3955, %v4029
    %v4031 = vpop.f32.mrb[0].mxu0
    %4032 = vdwg.mxu0
    %v4033 = vtanh.pop %v4030
    %v4034 = vld [vmem:[%s2 + $0xf] sm:$0x1]
    %v4035 = vlaneseq
    %v4036 = vshrl.u32 %v4035, 7
    %v4037 = vsub.s32 0, %v4036
    %v4038 = vrot.slane %v4034, %v4037
    %4043 = vrot.lane.b32.xlu0 %v3947, 96
    %v4044 = vpop.permute.xlu0 %4043
    %4045 = vrot.lane.b32.xlu0 %v3948, 96
    %v4046 = vpop.permute.xlu0 %4045
    %4047 = vrot.lane.b32.xlu0 %v3949, 96
    %v4048 = vpop.permute.xlu0 %4047
    %4049 = vrot.lane.b32.xlu0 %v3950, 96
    %v4050 = vpop.permute.xlu0 %4049
    %v4056 = vsel %vm139, %v4033, 0
    %4058 = vmatprep.subr.mxu0 0.0
    %4059 = vmatpush1.msra.mxu0 %v4044
    %4060 = vmatprep.subr.mxu0 0.0
    %4061 = vmatpush1.msra.mxu0 %v4046
    %4062 = vmatprep.subr.mxu0 0.0
    %4063 = vmatpush1.msra.mxu0 %v4048
    %4064 = vmatprep.subr.mxu0 0.0
    %4065 = vmatpush1.msra.mxu0 %v4050
    %4066 = vmatprep.subr.mxu0 0.0
    %4067 = vmatpush1.msra.mxu0 0.0
    %4068 = vmatprep.subr.mxu0 0.0
    %4069 = vmatpush1.msra.mxu0 0.0
    %4070 = vmatprep.subr.mxu0 0.0
    %4071 = vmatpush1.msra.mxu0 0.0
    %4072 = vmatprep.subr.mxu0 0.0
    %4073 = vmatpush1.msra.mxu0 0.0
    %4074 = vmatprep.subr.mxu0 0.0
    %4075 = vmatpush1.msra.mxu0 0.0
    %4076 = vmatprep.subr.mxu0 0.0
    %4077 = vmatpush1.msra.mxu0 0.0
    %4078 = vmatprep.subr.mxu0 0.0
    %4079 = vmatpush1.msra.mxu0 0.0
    %4080 = vmatprep.subr.mxu0 0.0
    %4081 = vmatpush1.msra.mxu0 0.0
    %4082 = vmatprep.subr.mxu0 0.0
    %4083 = vmatpush1.msra.mxu0 0.0
    %4084 = vmatprep.subr.mxu0 0.0
    %4085 = vmatpush1.msra.mxu0 0.0
    %4086 = vmatprep.subr.mxu0 0.0
    %4087 = vmatpush1.msra.mxu0 0.0
    %4088 = vmatprep.subr.mxu0 0.0
    %4089 = vmatpush1.msra.mxu0 0.0
    %4090 = vmatprep.subr.mxu0 0.0
    %4091 = vmatpush1.msra.mxu0 0.0
    %4092 = vmatprep.subr.mxu0 0.0
    %4093 = vmatpush1.msra.mxu0 0.0
    %4094 = vmatprep.subr.mxu0 0.0
    %4095 = vmatpush1.msra.mxu0 0.0
    %4096 = vmatprep.subr.mxu0 0.0
    %4097 = vmatpush1.msra.mxu0 0.0
    %4098 = vmatprep.subr.mxu0 0.0
    %4099 = vmatpush1.msra.mxu0 0.0
    %4100 = vmatprep.subr.mxu0 0.0
    %4101 = vmatpush1.msra.mxu0 0.0
    %4102 = vmatprep.subr.mxu0 0.0
    %4103 = vmatpush1.msra.mxu0 0.0
    %4104 = vmatprep.subr.mxu0 0.0
    %4105 = vmatpush1.msra.mxu0 0.0
    %4106 = vmatprep.subr.mxu0 0.0
    %4107 = vmatpush1.msra.mxu0 0.0
    %4108 = vmatprep.subr.mxu0 0.0
    %4109 = vmatpush1.msra.mxu0 0.0
    %4110 = vmatprep.subr.mxu0 0.0
    %4111 = vmatpush1.msra.mxu0 0.0
    %4112 = vmatprep.subr.mxu0 0.0
    %4113 = vmatpush1.msra.mxu0 0.0
    %4114 = vmatprep.subr.mxu0 0.0
    %4115 = vmatpush1.msra.mxu0 0.0
    %4116 = vmatprep.subr.mxu0 0.0
    %4117 = vmatpush1.msra.mxu0 0.0
    %4118 = vmatprep.subr.mxu0 0.0
    %4119 = vmatpush1.msra.mxu0 0.0
    %4120 = vmatprep.subr.mxu0 0.0
    %4121 = vmatpush1.msra.mxu0 0.0
    %4122 = vmatprep.mubr.f32.mxu0 0.0
    %4123 = vmatmul.mubr.f32.gmra.mrb[0].mxu0 %v4056
    %v4124 = vpop.f32.mrb[0].mxu0
    %v4125 = vadd.f32 %v4038, %v4124
    %v4126 = vpop.f32.mrb[0].mxu0
    %4127 = vdwg.mxu0
    %v4128 = vld [vmem:[%s2 + $0x12] sm:$0x1]
    %v4129 = vlaneseq
    %v4130 = vshrl.u32 %v4129, 7
    %v4131 = vsub.s32 0, %v4130
    %v4132 = vrot.slane %v4128, %v4131
    %v4133 = vsub.f32 %v4125, %v4132
    %v4134 = vld [vmem:[%s2 + $0x13] sm:$0x1]
    %v4135 = vadd.f32 %v4134, 1e-05
    %v4136 = vrsqrt.pop %v4135
    %v4137 = vlaneseq
    %v4138 = vshrl.u32 %v4137, 7
    %v4139 = vsub.s32 0, %v4138
    %v4140 = vrot.slane %v4136, %v4139
    %v4141 = vmul.f32 %v4133, %v4140
    %v4142 = vld [vmem:[%s2 + $0x10] sm:$0x1]
    %v4143 = vlaneseq
    %v4144 = vshrl.u32 %v4143, 7
    %v4145 = vsub.s32 0, %v4144
    %v4146 = vrot.slane %v4142, %v4145
    %v4147 = vmul.f32 %v4141, %v4146
    %v4148 = vld [vmem:[%s2 + $0x11] sm:$0x1]
    %v4149 = vlaneseq
    %v4150 = vshrl.u32 %v4149, 7
    %v4151 = vsub.s32 0, %v4150
    %v4152 = vrot.slane %v4148, %v4151
    %v4153 = vadd.f32 %v4147, %v4152
    %v4154 = vmax.f32 %v4153, 0.0
    %v4155 = vld [vmem:[%s3 + $0x4] sm:$0x1]
    %v4156 = vlaneseq
    %v4157 = vshrl.u32 %v4156, 7
    %v4158 = vsub.s32 0, %v4157
    %v4159 = vrot.slane %v4155, %v4158
    %4160 = vrot.lane.b32.xlu0 %v3947, 64
    %v4161 = vpop.permute.xlu0 %4160
    %4162 = vrot.lane.b32.xlu0 %v3948, 64
    %v4163 = vpop.permute.xlu0 %4162
    %4164 = vrot.lane.b32.xlu0 %v3949, 64
    %v4165 = vpop.permute.xlu0 %4164
    %4166 = vrot.lane.b32.xlu0 %v3950, 64
    %v4167 = vpop.permute.xlu0 %4166
    %v4173 = vsel %vm139, %v4154, 0
    %4175 = vmatprep.subr.mxu0 0.0
    %4176 = vmatpush1.msra.mxu0 %v4161
    %4177 = vmatprep.subr.mxu0 0.0
    %4178 = vmatpush1.msra.mxu0 %v4163
    %4179 = vmatprep.subr.mxu0 0.0
    %4180 = vmatpush1.msra.mxu0 %v4165
    %4181 = vmatprep.subr.mxu0 0.0
    %4182 = vmatpush1.msra.mxu0 %v4167
    %4183 = vmatprep.subr.mxu0 0.0
    %4184 = vmatpush1.msra.mxu0 0.0
    %4185 = vmatprep.subr.mxu0 0.0
    %4186 = vmatpush1.msra.mxu0 0.0
    %4187 = vmatprep.subr.mxu0 0.0
    %4188 = vmatpush1.msra.mxu0 0.0
    %4189 = vmatprep.subr.mxu0 0.0
    %4190 = vmatpush1.msra.mxu0 0.0
    %4191 = vmatprep.subr.mxu0 0.0
    %4192 = vmatpush1.msra.mxu0 0.0
    %4193 = vmatprep.subr.mxu0 0.0
    %4194 = vmatpush1.msra.mxu0 0.0
    %4195 = vmatprep.subr.mxu0 0.0
    %4196 = vmatpush1.msra.mxu0 0.0
    %4197 = vmatprep.subr.mxu0 0.0
    %4198 = vmatpush1.msra.mxu0 0.0
    %4199 = vmatprep.subr.mxu0 0.0
    %4200 = vmatpush1.msra.mxu0 0.0
    %4201 = vmatprep.subr.mxu0 0.0
    %4202 = vmatpush1.msra.mxu0 0.0
    %4203 = vmatprep.subr.mxu0 0.0
    %4204 = vmatpush1.msra.mxu0 0.0
    %4205 = vmatprep.subr.mxu0 0.0
    %4206 = vmatpush1.msra.mxu0 0.0
    %4207 = vmatprep.subr.mxu0 0.0
    %4208 = vmatpush1.msra.mxu0 0.0
    %4209 = vmatprep.subr.mxu0 0.0
    %4210 = vmatpush1.msra.mxu0 0.0
    %4211 = vmatprep.subr.mxu0 0.0
    %4212 = vmatpush1.msra.mxu0 0.0
    %4213 = vmatprep.subr.mxu0 0.0
    %4214 = vmatpush1.msra.mxu0 0.0
    %4215 = vmatprep.subr.mxu0 0.0
    %4216 = vmatpush1.msra.mxu0 0.0
    %4217 = vmatprep.subr.mxu0 0.0
    %4218 = vmatpush1.msra.mxu0 0.0
    %4219 = vmatprep.subr.mxu0 0.0
    %4220 = vmatpush1.msra.mxu0 0.0
    %4221 = vmatprep.subr.mxu0 0.0
    %4222 = vmatpush1.msra.mxu0 0.0
    %4223 = vmatprep.subr.mxu0 0.0
    %4224 = vmatpush1.msra.mxu0 0.0
    %4225 = vmatprep.subr.mxu0 0.0
    %4226 = vmatpush1.msra.mxu0 0.0
    %4227 = vmatprep.subr.mxu0 0.0
    %4228 = vmatpush1.msra.mxu0 0.0
    %4229 = vmatprep.subr.mxu0 0.0
    %4230 = vmatpush1.msra.mxu0 0.0
    %4231 = vmatprep.subr.mxu0 0.0
    %4232 = vmatpush1.msra.mxu0 0.0
    %4233 = vmatprep.subr.mxu0 0.0
    %4234 = vmatpush1.msra.mxu0 0.0
    %4235 = vmatprep.subr.mxu0 0.0
    %4236 = vmatpush1.msra.mxu0 0.0
    %4237 = vmatprep.subr.mxu0 0.0
    %4238 = vmatpush1.msra.mxu0 0.0
    %4239 = vmatprep.mubr.f32.mxu0 0.0
    %4240 = vmatmul.mubr.f32.gmra.mrb[0].mxu0 %v4173
    %v4241 = vpop.f32.mrb[0].mxu0
    %v4242 = vadd.f32 %v4159, %v4241
    %v4243 = vpop.f32.mrb[0].mxu0
    %4244 = vdwg.mxu0
    %v4245 = vld [vmem:[%s3 + $0x7] sm:$0x1]
    %v4246 = vlaneseq
    %v4247 = vshrl.u32 %v4246, 7
    %v4248 = vsub.s32 0, %v4247
    %v4249 = vrot.slane %v4245, %v4248
    %v4250 = vsub.f32 %v4242, %v4249
    %v4251 = vld [vmem:[%s3 + $0x8] sm:$0x1]
    %v4252 = vadd.f32 %v4251, 1e-05
    %v4253 = vrsqrt.pop %v4252
    %v4254 = vlaneseq
    %v4255 = vshrl.u32 %v4254, 7
    %v4256 = vsub.s32 0, %v4255
    %v4257 = vrot.slane %v4253, %v4256
    %v4258 = vmul.f32 %v4250, %v4257
    %v4259 = vld [vmem:[%s3 + $0x5] sm:$0x1]
    %v4260 = vlaneseq
    %v4261 = vshrl.u32 %v4260, 7
    %v4262 = vsub.s32 0, %v4261
    %v4263 = vrot.slane %v4259, %v4262
    %v4264 = vmul.f32 %v4258, %v4263
    %v4265 = vld [vmem:[%s3 + $0x6] sm:$0x1]
    %v4266 = vlaneseq
    %v4267 = vshrl.u32 %v4266, 7
    %v4268 = vsub.s32 0, %v4267
    %v4269 = vrot.slane %v4265, %v4268
    %v4270 = vadd.f32 %v4264, %v4269
    %v4271 = vmax.f32 %v4270, 0.0
    %v4272 = vld [vmem:[%s7] sm:$0xff]
    %v4273 = vld [vmem:[%s7 + $0x8] sm:$0xff]
    %v4274 = vld [vmem:[%s3 + $0x9] sm:$0x1]
    %v4275 = vlaneseq
    %v4276 = vshrl.u32 %v4275, 7
    %v4277 = vsub.s32 0, %v4276
    %v4278 = vrot.slane %v4274, %v4277
    %v4280 = vsel %vm1725, %v4271, 0
    %4282 = vmatprep.subr.mxu0 0.0
    %4283 = vmatpush1.msra.mxu0 %v4272
    %4284 = vmatprep.subr.mxu0 0.0
    %4285 = vmatpush1.msra.mxu0 %v4273
    %4286 = vmatprep.subr.mxu0 0.0
    %4287 = vmatpush1.msra.mxu0 0.0
    %4288 = vmatprep.subr.mxu0 0.0
    %4289 = vmatpush1.msra.mxu0 0.0
    %4290 = vmatprep.subr.mxu0 0.0
    %4291 = vmatpush1.msra.mxu0 0.0
    %4292 = vmatprep.subr.mxu0 0.0
    %4293 = vmatpush1.msra.mxu0 0.0
    %4294 = vmatprep.subr.mxu0 0.0
    %4295 = vmatpush1.msra.mxu0 0.0
    %4296 = vmatprep.subr.mxu0 0.0
    %4297 = vmatpush1.msra.mxu0 0.0
    %4298 = vmatprep.subr.mxu0 0.0
    %4299 = vmatpush1.msra.mxu0 0.0
    %4300 = vmatprep.subr.mxu0 0.0
    %4301 = vmatpush1.msra.mxu0 0.0
    %4302 = vmatprep.subr.mxu0 0.0
    %4303 = vmatpush1.msra.mxu0 0.0
    %4304 = vmatprep.subr.mxu0 0.0
    %4305 = vmatpush1.msra.mxu0 0.0
    %4306 = vmatprep.subr.mxu0 0.0
    %4307 = vmatpush1.msra.mxu0 0.0
    %4308 = vmatprep.subr.mxu0 0.0
    %4309 = vmatpush1.msra.mxu0 0.0
    %4310 = vmatprep.subr.mxu0 0.0
    %4311 = vmatpush1.msra.mxu0 0.0
    %4312 = vmatprep.subr.mxu0 0.0
    %4313 = vmatpush1.msra.mxu0 0.0
    %4314 = vmatprep.subr.mxu0 0.0
    %4315 = vmatpush1.msra.mxu0 0.0
    %4316 = vmatprep.subr.mxu0 0.0
    %4317 = vmatpush1.msra.mxu0 0.0
    %4318 = vmatprep.subr.mxu0 0.0
    %4319 = vmatpush1.msra.mxu0 0.0
    %4320 = vmatprep.subr.mxu0 0.0
    %4321 = vmatpush1.msra.mxu0 0.0
    %4322 = vmatprep.subr.mxu0 0.0
    %4323 = vmatpush1.msra.mxu0 0.0
    %4324 = vmatprep.subr.mxu0 0.0
    %4325 = vmatpush1.msra.mxu0 0.0
    %4326 = vmatprep.subr.mxu0 0.0
    %4327 = vmatpush1.msra.mxu0 0.0
    %4328 = vmatprep.subr.mxu0 0.0
    %4329 = vmatpush1.msra.mxu0 0.0
    %4330 = vmatprep.subr.mxu0 0.0
    %4331 = vmatpush1.msra.mxu0 0.0
    %4332 = vmatprep.subr.mxu0 0.0
    %4333 = vmatpush1.msra.mxu0 0.0
    %4334 = vmatprep.subr.mxu0 0.0
    %4335 = vmatpush1.msra.mxu0 0.0
    %4336 = vmatprep.subr.mxu0 0.0
    %4337 = vmatpush1.msra.mxu0 0.0
    %4338 = vmatprep.subr.mxu0 0.0
    %4339 = vmatpush1.msra.mxu0 0.0
    %4340 = vmatprep.subr.mxu0 0.0
    %4341 = vmatpush1.msra.mxu0 0.0
    %4342 = vmatprep.subr.mxu0 0.0
    %4343 = vmatpush1.msra.mxu0 0.0
    %4344 = vmatprep.subr.mxu0 0.0
    %4345 = vmatpush1.msra.mxu0 0.0
    %4346 = vmatprep.mubr.f32.mxu0 0.0
    %4347 = vmatmul.mubr.f32.gmra.mrb[0].mxu0 %v4280
    %v4348 = vpop.f32.mrb[0].mxu0
    %v4349 = vadd.f32 %v4278, %v4348
    %v4350 = vpop.f32.mrb[0].mxu0
    %4351 = vdwg.mxu0
    %4352 = vst [vmem:[#allocation2] sm:$0x3] %v4349
    // Predicated region
    $region34: #{bert_review_classifier_forward.1} parent=1 // pred_check
      _
    $region35: #{bert_review_classifier_forward.1} parent=1 // pred_check_branch
      %4354 = sbr.rel (0) target = $region37
    $region36: #{bert_review_classifier_forward.1} parent=1 // pred_region
      %s4356 = ssub.s32 32, 32
      %4357 = vsyncadd [#allocation3], %s4356
      %s4359 = sshll.u32 [#allocation2], 4
      %s4360 = int_to_ptr.vmem [resolvable:$true] %s4359
      %4362 = dma.vmem_to_hbm [thread:$0]  %s4360, 32, %s8, [#allocation3]
    $region37: #{bert_review_classifier_forward.1} parent=1 // pred_fallthru
      _
    // Predicated region
    $region38: #{bert_review_classifier_forward.1} parent=1 // pred_check
      _
    $region39: #{bert_review_classifier_forward.1} parent=1 // pred_check_branch
      %4364 = sbr.rel (0) target = $region41
    $region40: #{bert_review_classifier_forward.1} parent=1 // pred_region
      %4365 = dma.done [#allocation3], 32
    $region41: #{bert_review_classifier_forward.1} parent=1 // pred_fallthru
      _
    %4366 = vsyncpa [#allocation3], 1

</llo_original>
